<compile_context>
chip_gen: v6e
topology: v6e:2x2x1
jax: 0.10.0
libtpu: 0.0.40
codegen_flags: <defaults>
</compile_context>

<pallas_src>
import jax
import jax.numpy as jnp
from jax.experimental import pallas as pl
from jax.experimental.pallas import tpu as pltpu

IN_DIM = 28 * 28        # 784
IN_PAD = 896            # 7 * 128 (lane-dense)
HID = 128
LATENT = 32
LATENT_PAD = 128        # lane-dense encoded output


def autoencoder_kernel(x_ref,
                       w1_ref, b1_ref,   # (IN_PAD, HID) bf16, (1, HID) f32
                       w2_ref, b2_ref,   # (HID, LATENT_PAD) bf16, (1, LATENT_PAD) f32
                       w3_ref, b3_ref,   # (LATENT_PAD, HID) bf16, (1, HID) f32
                       w4_ref, b4_ref,   # (HID, IN_PAD) bf16, (1, IN_PAD) f32
                       dec_ref, enc_ref):
    x = x_ref[...]                                              # (block_b, IN_PAD) bf16

    # ---- encoder ----
    h1 = jnp.dot(x, w1_ref[...], preferred_element_type=jnp.float32) + b1_ref[...]
    h1 = jnp.maximum(h1, 0.0)                                   # ReLU (f32)
    enc = jnp.dot(h1.astype(jnp.bfloat16), w2_ref[...],
                  preferred_element_type=jnp.float32) + b2_ref[...]

    # ---- decoder ----
    h2 = jnp.dot(enc.astype(jnp.bfloat16), w3_ref[...],
                 preferred_element_type=jnp.float32) + b3_ref[...]
    h2 = jnp.maximum(h2, 0.0)                                   # ReLU (f32)
    logits = jnp.dot(h2.astype(jnp.bfloat16), w4_ref[...],
                     preferred_element_type=jnp.float32) + b4_ref[...]
    dec = jax.nn.sigmoid(logits)                                # Sigmoid in f32 (EUP)

    enc_ref[...] = enc.astype(enc_ref.dtype)
    dec_ref[...] = dec.astype(dec_ref.dtype)


def autoencoder_forward(x, prepared_params, *, block_b=256):
    """x: (B, IN_DIM) float32.  prepared_params: output of prepare_params().
    Returns (decoded (B, IN_DIM) f32, encoded (B, LATENT) f32)."""
    B = x.shape[0]
    Bp = pl.cdiv(B, block_b) * block_b

    # Pad batch to a tile multiple and features to the lane-dense width; cast to bf16
    # once in the wrapper (halves the dominant input HBM stream).
    xp = jnp.pad(x, ((0, Bp - B), (0, IN_PAD - IN_DIM))).astype(jnp.bfloat16)

    w1, b1, w2, b2, w3, b3, w4, b4 = prepared_params

    def rep(shape):
        # Weights / biases: full-array blocks with a constant block index -> resident in
        # VMEM and not re-fetched across grid steps.
        return pl.BlockSpec(shape, lambda i: (0, 0))

    grid = (Bp // block_b,)
    out_shapes = (
        jax.ShapeDtypeStruct((Bp, IN_PAD), jnp.float32),        # decoded (padded)
        jax.ShapeDtypeStruct((Bp, LATENT_PAD), jnp.float32),    # encoded (padded)
    )

    dec_p, enc_p = pl.pallas_call(
        autoencoder_kernel,
        out_shape=out_shapes,
        grid_spec=pltpu.PrefetchScalarGridSpec(
            num_scalar_prefetch=0,
            grid=grid,
            in_specs=[
                pl.BlockSpec((block_b, IN_PAD), lambda i: (i, 0)),   # x tile
                rep((IN_PAD, HID)), rep((1, HID)),
                rep((HID, LATENT_PAD)), rep((1, LATENT_PAD)),
                rep((LATENT_PAD, HID)), rep((1, HID)),
                rep((HID, IN_PAD)), rep((1, IN_PAD)),
            ],
            out_specs=[
                pl.BlockSpec((block_b, IN_PAD), lambda i: (i, 0)),
                pl.BlockSpec((block_b, LATENT_PAD), lambda i: (i, 0)),
            ],
        ),
        compiler_params=pltpu.CompilerParams(
            dimension_semantics=("parallel",),      # batch grid splits across v7x's 2 TCs
            vmem_limit_bytes=48 * 1024 * 1024,      # room for larger block_b + pipelining
        ),
    )(xp, w1, b1, w2, b2, w3, b3, w4, b4)

    # Slice padded outputs back to the module's true shapes.
    return dec_p[:B, :IN_DIM], enc_p[:B, :LATENT]


def init_params(key):
    """Deterministic PyTorch-style init. Weights stored already-transposed (in, out), f32."""
    ks = jax.random.split(key, 8)

    def linear(kw, kb, fan_in, fan_out):
        bound = 1.0 / jnp.sqrt(fan_in)
        w = jax.random.uniform(kw, (fan_in, fan_out), jnp.float32, -bound, bound)
        b = jax.random.uniform(kb, (1, fan_out), jnp.float32, -bound, bound)
        return w, b

    w1, b1 = linear(ks[0], ks[1], IN_DIM, HID)
    w2, b2 = linear(ks[2], ks[3], HID, LATENT)
    w3, b3 = linear(ks[4], ks[5], LATENT, HID)
    w4, b4 = linear(ks[6], ks[7], HID, IN_DIM)
    return (w1, b1, w2, b2, w3, b3, w4, b4)


def prepare_params(params):
    """Zero-pad to lane-dense widths and cast weights to bf16 (biases stay f32)."""
    w1, b1, w2, b2, w3, b3, w4, b4 = params

    def pad_w(w, rpad, cpad):
        return jnp.pad(w, ((0, rpad), (0, cpad))).astype(jnp.bfloat16)

    def pad_b(b, cpad):
        return jnp.pad(b, ((0, 0), (0, cpad))).astype(jnp.float32)

    w1p = pad_w(w1, IN_PAD - IN_DIM, 0)              # (896, 128)  zero rows -> no effect
    b1p = b1.astype(jnp.float32)                     # (1, 128)
    w2p = pad_w(w2, 0, LATENT_PAD - LATENT)          # (128, 128)  zero cols -> sliced off
    b2p = pad_b(b2, LATENT_PAD - LATENT)             # (1, 128)
    w3p = pad_w(w3, LATENT_PAD - LATENT, 0)          # (128, 128)  zero rows -> no effect
    b3p = b3.astype(jnp.float32)                     # (1, 128)
    w4p = pad_w(w4, 0, IN_PAD - IN_DIM)              # (128, 896)  zero cols -> sliced off
    b4p = pad_b(b4, IN_PAD - IN_DIM)                 # (1, 896)
    return (w1p, b1p, w2p, b2p, w3p, b3p, w4p, b4p)


def reference_forward(x, params):
    """Plain-JAX f32 reference of the same forward pass."""
    w1, b1, w2, b2, w3, b3, w4, b4 = params
    h1 = jnp.maximum(x @ w1 + b1, 0.0)
    enc = h1 @ w2 + b2
    h2 = jnp.maximum(enc @ w3 + b3, 0.0)
    dec = jax.nn.sigmoid(h2 @ w4 + b4)
    return dec, enc


if __name__ == "__main__":
    key = jax.random.PRNGKey(0)
    k_params, k_x = jax.random.split(key)

    params = init_params(k_params)
    prepared = prepare_params(params)

    batch = 1000   # realistic MNIST-scale batch; not a tile multiple -> exercises pad/slice
    x = jax.random.uniform(k_x, (batch, IN_DIM), jnp.float32)   # MNIST-like pixels in [0,1)

    fwd = jax.jit(lambda xx: autoencoder_forward(xx, prepared, block_b=256))
    decoded, encoded = fwd(x)
    jax.block_until_ready(decoded)
    jax.block_until_ready(encoded)

    # Correctness check against the f32 plain-JAX reference (bf16 matmuls -> loose tol).
    dec_ref, enc_ref = reference_forward(x, params)
    assert decoded.shape == (batch, IN_DIM) and encoded.shape == (batch, LATENT)
    assert jnp.allclose(decoded, dec_ref, atol=3e-2, rtol=3e-2), (
        float(jnp.max(jnp.abs(decoded - dec_ref))))
    assert jnp.allclose(encoded, enc_ref, atol=3e-2, rtol=3e-2), (
        float(jnp.max(jnp.abs(encoded - enc_ref))))

    print("KERNEL_OK")
</pallas_src>

<mosaic_0001>
module attributes {stable_mosaic.version = 11 : i64} {
  func.func @autoencoder_kernel(%arg0: i32, %arg1: memref<256x896xbf16, #tpu.memory_space<vmem>>, %arg2: memref<896x128xbf16, #tpu.memory_space<vmem>>, %arg3: memref<1x128xf32, #tpu.memory_space<vmem>>, %arg4: memref<128x128xbf16, #tpu.memory_space<vmem>>, %arg5: memref<1x128xf32, #tpu.memory_space<vmem>>, %arg6: memref<128x128xbf16, #tpu.memory_space<vmem>>, %arg7: memref<1x128xf32, #tpu.memory_space<vmem>>, %arg8: memref<128x896xbf16, #tpu.memory_space<vmem>>, %arg9: memref<1x896xf32, #tpu.memory_space<vmem>>, %arg10: memref<256x896xf32, #tpu.memory_space<vmem>>, %arg11: memref<256x128xf32, #tpu.memory_space<vmem>>) attributes {dimension_semantics = [#tpu.dimension_semantics<parallel>], iteration_bounds = array<i64: 4>, scalar_prefetch = 0 : i64, scratch_operands = 0 : i64, tpu.core_type = #tpu.core_type<tc>, window_params = [{transform_indices = @transform_0, window_bounds = array<i64: 256, 896>}, {pipeline_mode = #tpu.pipeline_mode<synchronous>, transform_indices = @transform_1, window_bounds = array<i64: 896, 128>}, {pipeline_mode = #tpu.pipeline_mode<synchronous>, transform_indices = @transform_2, window_bounds = array<i64: 1, 128>}, {pipeline_mode = #tpu.pipeline_mode<synchronous>, transform_indices = @transform_3, window_bounds = array<i64: 128, 128>}, {pipeline_mode = #tpu.pipeline_mode<synchronous>, transform_indices = @transform_4, window_bounds = array<i64: 1, 128>}, {pipeline_mode = #tpu.pipeline_mode<synchronous>, transform_indices = @transform_5, window_bounds = array<i64: 128, 128>}, {pipeline_mode = #tpu.pipeline_mode<synchronous>, transform_indices = @transform_6, window_bounds = array<i64: 1, 128>}, {pipeline_mode = #tpu.pipeline_mode<synchronous>, transform_indices = @transform_7, window_bounds = array<i64: 128, 896>}, {pipeline_mode = #tpu.pipeline_mode<synchronous>, transform_indices = @transform_8, window_bounds = array<i64: 1, 896>}, {transform_indices = @transform_9, window_bounds = array<i64: 256, 896>}, {transform_indices = @transform_10, window_bounds = array<i64: 256, 128>}]} {
    %c0 = arith.constant 0 : index
    %c0_0 = arith.constant 0 : index
    %0 = vector.load %arg1[%c0, %c0_0] : memref<256x896xbf16, #tpu.memory_space<vmem>>, vector<256x896xbf16>
    %c0_1 = arith.constant 0 : index
    %c0_2 = arith.constant 0 : index
    %1 = vector.load %arg2[%c0_1, %c0_2] : memref<896x128xbf16, #tpu.memory_space<vmem>>, vector<896x128xbf16>
    %cst = arith.constant dense<0.000000e+00> : vector<256x128xf32>
    %2 = tpu.matmul %0, %1, %cst {dimension_numbers = #tpu.dot_dimension_numbers<[1], [0], [0], [1], [0, 0, 1, 1], [], []>} : vector<256x896xbf16>, vector<896x128xbf16>, vector<256x128xf32> -> vector<256x128xf32>
    %c0_3 = arith.constant 0 : index
    %c0_4 = arith.constant 0 : index
    %3 = vector.load %arg3[%c0_3, %c0_4] : memref<1x128xf32, #tpu.memory_space<vmem>>, vector<1x128xf32>
    %4 = vector.broadcast %3 : vector<1x128xf32> to vector<256x128xf32>
    %5 = arith.addf %2, %4 : vector<256x128xf32>
    %cst_5 = arith.constant 0.000000e+00 : f32
    %6 = vector.broadcast %cst_5 : f32 to vector<256x128xf32>
    %7 = arith.maximumf %5, %6 : vector<256x128xf32>
    %8 = arith.truncf %7 : vector<256x128xf32> to vector<256x128xbf16>
    %c0_6 = arith.constant 0 : index
    %c0_7 = arith.constant 0 : index
    %9 = vector.load %arg4[%c0_6, %c0_7] : memref<128x128xbf16, #tpu.memory_space<vmem>>, vector<128x128xbf16>
    %cst_8 = arith.constant dense<0.000000e+00> : vector<256x128xf32>
    %10 = tpu.matmul %8, %9, %cst_8 {dimension_numbers = #tpu.dot_dimension_numbers<[1], [0], [0], [1], [0, 0, 1, 1], [], []>} : vector<256x128xbf16>, vector<128x128xbf16>, vector<256x128xf32> -> vector<256x128xf32>
    %c0_9 = arith.constant 0 : index
    %c0_10 = arith.constant 0 : index
    %11 = vector.load %arg5[%c0_9, %c0_10] : memref<1x128xf32, #tpu.memory_space<vmem>>, vector<1x128xf32>
    %12 = vector.broadcast %11 : vector<1x128xf32> to vector<256x128xf32>
    %13 = arith.addf %10, %12 : vector<256x128xf32>
    %14 = arith.truncf %13 : vector<256x128xf32> to vector<256x128xbf16>
    %c0_11 = arith.constant 0 : index
    %c0_12 = arith.constant 0 : index
    %15 = vector.load %arg6[%c0_11, %c0_12] : memref<128x128xbf16, #tpu.memory_space<vmem>>, vector<128x128xbf16>
    %cst_13 = arith.constant dense<0.000000e+00> : vector<256x128xf32>
    %16 = tpu.matmul %14, %15, %cst_13 {dimension_numbers = #tpu.dot_dimension_numbers<[1], [0], [0], [1], [0, 0, 1, 1], [], []>} : vector<256x128xbf16>, vector<128x128xbf16>, vector<256x128xf32> -> vector<256x128xf32>
    %c0_14 = arith.constant 0 : index
    %c0_15 = arith.constant 0 : index
    %17 = vector.load %arg7[%c0_14, %c0_15] : memref<1x128xf32, #tpu.memory_space<vmem>>, vector<1x128xf32>
    %18 = vector.broadcast %17 : vector<1x128xf32> to vector<256x128xf32>
    %19 = arith.addf %16, %18 : vector<256x128xf32>
    %cst_16 = arith.constant 0.000000e+00 : f32
    %20 = vector.broadcast %cst_16 : f32 to vector<256x128xf32>
    %21 = arith.maximumf %19, %20 : vector<256x128xf32>
    %22 = arith.truncf %21 : vector<256x128xf32> to vector<256x128xbf16>
    %c0_17 = arith.constant 0 : index
    %c0_18 = arith.constant 0 : index
    %23 = vector.load %arg8[%c0_17, %c0_18] : memref<128x896xbf16, #tpu.memory_space<vmem>>, vector<128x896xbf16>
    %cst_19 = arith.constant dense<0.000000e+00> : vector<256x896xf32>
    %24 = tpu.matmul %22, %23, %cst_19 {dimension_numbers = #tpu.dot_dimension_numbers<[1], [0], [0], [1], [0, 0, 1, 1], [], []>} : vector<256x128xbf16>, vector<128x896xbf16>, vector<256x896xf32> -> vector<256x896xf32>
    %c0_20 = arith.constant 0 : index
    %c0_21 = arith.constant 0 : index
    %25 = vector.load %arg9[%c0_20, %c0_21] : memref<1x896xf32, #tpu.memory_space<vmem>>, vector<1x896xf32>
    %26 = vector.broadcast %25 : vector<1x896xf32> to vector<256x896xf32>
    %27 = arith.addf %24, %26 : vector<256x896xf32>
    %28 = arith.negf %27 : vector<256x896xf32>
    %29 = math.exp %28 : vector<256x896xf32>
    %cst_22 = arith.constant 1.000000e+00 : f32
    %30 = vector.broadcast %cst_22 : f32 to vector<256x896xf32>
    %31 = arith.addf %30, %29 : vector<256x896xf32>
    %32 = arith.divf %30, %31 : vector<256x896xf32>
    %c0_23 = arith.constant 0 : index
    %c0_24 = arith.constant 0 : index
    %33 = vector.load %arg11[%c0_23, %c0_24] : memref<256x128xf32, #tpu.memory_space<vmem>>, vector<256x128xf32>
    tpu.vector_store %arg11[%c0_23, %c0_24], %13 {strides = array<i32>} : memref<256x128xf32, #tpu.memory_space<vmem>>, vector<256x128xf32>,
    %c0_25 = arith.constant 0 : index
    %c0_26 = arith.constant 0 : index
    %34 = vector.load %arg10[%c0_25, %c0_26] : memref<256x896xf32, #tpu.memory_space<vmem>>, vector<256x896xf32>
    tpu.vector_store %arg10[%c0_25, %c0_26], %32 {strides = array<i32>} : memref<256x896xf32, #tpu.memory_space<vmem>>, vector<256x896xf32>,
    return
  }
  func.func @transform_0(%arg0: i32) -> (i32, i32) {
    %c0_i32 = arith.constant 0 : i32
    %c0_i32_0 = arith.constant 0 : i32
    return %arg0, %c0_i32 : i32, i32
  }
  func.func @transform_1(%arg0: i32) -> (i32, i32) {
    %c0_i32 = arith.constant 0 : i32
    %c0_i32_0 = arith.constant 0 : i32
    %c0_i32_1 = arith.constant 0 : i32
    return %c0_i32, %c0_i32_0 : i32, i32
  }
  func.func @transform_2(%arg0: i32) -> (i32, i32) {
    %c0_i32 = arith.constant 0 : i32
    %c0_i32_0 = arith.constant 0 : i32
    %c0_i32_1 = arith.constant 0 : i32
    return %c0_i32, %c0_i32_0 : i32, i32
  }
  func.func @transform_3(%arg0: i32) -> (i32, i32) {
    %c0_i32 = arith.constant 0 : i32
    %c0_i32_0 = arith.constant 0 : i32
    %c0_i32_1 = arith.constant 0 : i32
    return %c0_i32, %c0_i32_0 : i32, i32
  }
  func.func @transform_4(%arg0: i32) -> (i32, i32) {
    %c0_i32 = arith.constant 0 : i32
    %c0_i32_0 = arith.constant 0 : i32
    %c0_i32_1 = arith.constant 0 : i32
    return %c0_i32, %c0_i32_0 : i32, i32
  }
  func.func @transform_5(%arg0: i32) -> (i32, i32) {
    %c0_i32 = arith.constant 0 : i32
    %c0_i32_0 = arith.constant 0 : i32
    %c0_i32_1 = arith.constant 0 : i32
    return %c0_i32, %c0_i32_0 : i32, i32
  }
  func.func @transform_6(%arg0: i32) -> (i32, i32) {
    %c0_i32 = arith.constant 0 : i32
    %c0_i32_0 = arith.constant 0 : i32
    %c0_i32_1 = arith.constant 0 : i32
    return %c0_i32, %c0_i32_0 : i32, i32
  }
  func.func @transform_7(%arg0: i32) -> (i32, i32) {
    %c0_i32 = arith.constant 0 : i32
    %c0_i32_0 = arith.constant 0 : i32
    %c0_i32_1 = arith.constant 0 : i32
    return %c0_i32, %c0_i32_0 : i32, i32
  }
  func.func @transform_8(%arg0: i32) -> (i32, i32) {
    %c0_i32 = arith.constant 0 : i32
    %c0_i32_0 = arith.constant 0 : i32
    %c0_i32_1 = arith.constant 0 : i32
    return %c0_i32, %c0_i32_0 : i32, i32
  }
  func.func @transform_9(%arg0: i32) -> (i32, i32) {
    %c0_i32 = arith.constant 0 : i32
    %c0_i32_0 = arith.constant 0 : i32
    return %arg0, %c0_i32 : i32, i32
  }
  func.func @transform_10(%arg0: i32) -> (i32, i32) {
    %c0_i32 = arith.constant 0 : i32
    %c0_i32_0 = arith.constant 0 : i32
    return %arg0, %c0_i32 : i32, i32
  }
}

</mosaic_0001>

<llo_original>
// kernel: _lambda_.1
$region0: #{_lambda_.1}
  #allocation0 [shape = 'u32[]', space=smem, size = 0x4, offset = 0x4, fixed_abs, tag = 'smem constant byte address 0x4 - core index']
  #allocation1 [shape = 'u32[144,128]{1,0:T(1,128)}', space=vmem, size = 0x12000, scoped, tag = 'internal scratch']
  %s0 = inlined_call_operand.vmem [shape: bf16[1024,896], index: 0, kind: input, shape index: {}]
  %s1 = inlined_call_operand.vmem [shape: bf16[896,128], index: 1, kind: input, shape index: {}]
  %s2 = inlined_call_operand.vmem [shape: f32[1,128], index: 2, kind: input, shape index: {}]
  %s3 = inlined_call_operand.vmem [shape: bf16[128,128], index: 3, kind: input, shape index: {}]
  %s4 = inlined_call_operand.vmem [shape: f32[1,128], index: 4, kind: input, shape index: {}]
  %s5 = inlined_call_operand.vmem [shape: bf16[128,128], index: 5, kind: input, shape index: {}]
  %s6 = inlined_call_operand.vmem [shape: f32[1,128], index: 6, kind: input, shape index: {}]
  %s7 = inlined_call_operand.vmem [shape: bf16[128,896], index: 7, kind: input, shape index: {}]
  %s8 = inlined_call_operand.vmem [shape: f32[1,896], index: 8, kind: input, shape index: {}]
  %s9 = inlined_call_operand.vmem [shape: f32[1024,896], index: 9, kind: output, shape index: {0}]
  %s10 = inlined_call_operand.vmem [shape: f32[1024,128], index: 10, kind: output, shape index: {1}]
  %11 = xla_tuple %s9, %s10
  %s12 = sld [smem:[#allocation0]]
  $region77: #{_lambda_.1} parent=0
    _
  %s14 = ssub.s32 1, %s12
  %s15 = scalar_select 0, %s14, %s12
  loop: start=0, step=1, limit=6
  $region2: #{_lambda_.1} parent=0 // loop_pre_header
    _
  $region3: #{_lambda_.1} parent=0 // loop_header
    %s17 = sphi 0, %s21
    %p18 = scmp.ge.s32.totalorder %s17, 6
    %s27 = sphi 0, %s29
    %s30 = sphi 0, %s27
    %s31 = sphi 0, %s30
    %s47 = sphi 0, %s31
    %s51 = sphi 0, %s51
    %s53 = sphi 0, %s51
    %s54 = sphi 0, %s53
    %s68 = sphi 0, %s54
    %s72 = sphi 0, %s72
    %s74 = sphi 0, %s72
    %s75 = sphi 0, %s74
    %s89 = sphi 0, %s75
    %s93 = sphi 0, %s93
    %s95 = sphi 0, %s93
    %s96 = sphi 0, %s95
    %s110 = sphi 0, %s96
    %s114 = sphi 0, %s114
    %s116 = sphi 0, %s114
    %s117 = sphi 0, %s116
    %s131 = sphi 0, %s117
    %s135 = sphi 0, %s135
    %s137 = sphi 0, %s135
    %s138 = sphi 0, %s137
    %s152 = sphi 0, %s138
    %s156 = sphi 0, %s156
    %s158 = sphi 0, %s156
    %s159 = sphi 0, %s158
    %s173 = sphi 0, %s159
    %s177 = sphi 0, %s177
    %s179 = sphi 0, %s177
    %s180 = sphi 0, %s179
    %s194 = sphi 0, %s180
    %s198 = sphi 0, %s198
    %s200 = sphi 0, %s198
    %s201 = sphi 0, %s200
    %s215 = sphi 0, %s201
    %s221 = sphi 0, %s223
    %s224 = sphi 0, %s221
    %s225 = sphi 0, %s224
    %s241 = sphi 0, %s225
    %s247 = sphi 0, %s249
    %s250 = sphi 0, %s247
    %s251 = sphi 0, %s250
    %s267 = sphi 0, %s251
  $region4: #{_lambda_.1} parent=0 // loop_header_branch
    %20 = sbr.rel (%p18) target = $region8
  $region5: #{_lambda_.1} parent=0 // loop_body
    %s22 = ssub.s32 %s17, 1
    %s23 = ssub.s32 %s17, 2
    %s24 = sadd.s32 %s17, 1
    %s25 = ssub.s32 %s17, %s24
    %p26 = scmp.eq.s32.totalorder %s25, 0
    %s28 = sadd.s32 %s27, 1
    %s29 = scalar_select %p26, %s27, %s28
    %p32 = pneg %p26
    %p33 = scmp.eq.s32.totalorder %s17, 3
    %p34 = por %p32, %p33
    %p35 = scmp.ne.s32.totalorder %s27, %s30
    %p36 = scmp.eq.s32.totalorder %s17, 0
    %p37 = por %p35, %p36
    %p38 = scmp.ne.s32.totalorder %s27, %s30
    %p39 = scmp.eq.s32.totalorder %s22, 3
    %p40 = por %p38, %p39
    %p41 = scmp.ne.s32.totalorder %s30, %s31
    %p42 = scmp.eq.s32.totalorder %s22, 0
    %p43 = por %p41, %p42
    %p44 = scmp.ne.s32.totalorder %s30, %s31
    %p45 = scmp.eq.s32.totalorder %s23, 3
    %p46 = por %p44, %p45
    %p48 = scmp.ne.s32.totalorder %s31, %s47
    %p49 = scmp.eq.s32.totalorder %s23, 0
    %p50 = por %p48, %p49
    %s52 = sadd.s32 %s51, 1
    %p55 = scmp.eq.s32.totalorder %s17, 3
    %p56 = scmp.ne.s32.totalorder %s51, %s53
    %p57 = scmp.eq.s32.totalorder %s17, 0
    %p58 = por %p56, %p57
    %p59 = scmp.ne.s32.totalorder %s51, %s53
    %p60 = scmp.eq.s32.totalorder %s22, 3
    %p61 = por %p59, %p60
    %p62 = scmp.ne.s32.totalorder %s53, %s54
    %p63 = scmp.eq.s32.totalorder %s22, 0
    %p64 = por %p62, %p63
    %p65 = scmp.ne.s32.totalorder %s53, %s54
    %p66 = scmp.eq.s32.totalorder %s23, 3
    %p67 = por %p65, %p66
    %p69 = scmp.ne.s32.totalorder %s54, %s68
    %p70 = scmp.eq.s32.totalorder %s23, 0
    %p71 = por %p69, %p70
    %s73 = sadd.s32 %s72, 1
    %p76 = scmp.eq.s32.totalorder %s17, 3
    %p77 = scmp.ne.s32.totalorder %s72, %s74
    %p78 = scmp.eq.s32.totalorder %s17, 0
    %p79 = por %p77, %p78
    %p80 = scmp.ne.s32.totalorder %s72, %s74
    %p81 = scmp.eq.s32.totalorder %s22, 3
    %p82 = por %p80, %p81
    %p83 = scmp.ne.s32.totalorder %s74, %s75
    %p84 = scmp.eq.s32.totalorder %s22, 0
    %p85 = por %p83, %p84
    %p86 = scmp.ne.s32.totalorder %s74, %s75
    %p87 = scmp.eq.s32.totalorder %s23, 3
    %p88 = por %p86, %p87
    %p90 = scmp.ne.s32.totalorder %s75, %s89
    %p91 = scmp.eq.s32.totalorder %s23, 0
    %p92 = por %p90, %p91
    %s94 = sadd.s32 %s93, 1
    %p97 = scmp.eq.s32.totalorder %s17, 3
    %p98 = scmp.ne.s32.totalorder %s93, %s95
    %p99 = scmp.eq.s32.totalorder %s17, 0
    %p100 = por %p98, %p99
    %p101 = scmp.ne.s32.totalorder %s93, %s95
    %p102 = scmp.eq.s32.totalorder %s22, 3
    %p103 = por %p101, %p102
    %p104 = scmp.ne.s32.totalorder %s95, %s96
    %p105 = scmp.eq.s32.totalorder %s22, 0
    %p106 = por %p104, %p105
    %p107 = scmp.ne.s32.totalorder %s95, %s96
    %p108 = scmp.eq.s32.totalorder %s23, 3
    %p109 = por %p107, %p108
    %p111 = scmp.ne.s32.totalorder %s96, %s110
    %p112 = scmp.eq.s32.totalorder %s23, 0
    %p113 = por %p111, %p112
    %s115 = sadd.s32 %s114, 1
    %p118 = scmp.eq.s32.totalorder %s17, 3
    %p119 = scmp.ne.s32.totalorder %s114, %s116
    %p120 = scmp.eq.s32.totalorder %s17, 0
    %p121 = por %p119, %p120
    %p122 = scmp.ne.s32.totalorder %s114, %s116
    %p123 = scmp.eq.s32.totalorder %s22, 3
    %p124 = por %p122, %p123
    %p125 = scmp.ne.s32.totalorder %s116, %s117
    %p126 = scmp.eq.s32.totalorder %s22, 0
    %p127 = por %p125, %p126
    %p128 = scmp.ne.s32.totalorder %s116, %s117
    %p129 = scmp.eq.s32.totalorder %s23, 3
    %p130 = por %p128, %p129
    %p132 = scmp.ne.s32.totalorder %s117, %s131
    %p133 = scmp.eq.s32.totalorder %s23, 0
    %p134 = por %p132, %p133
    %s136 = sadd.s32 %s135, 1
    %p139 = scmp.eq.s32.totalorder %s17, 3
    %p140 = scmp.ne.s32.totalorder %s135, %s137
    %p141 = scmp.eq.s32.totalorder %s17, 0
    %p142 = por %p140, %p141
    %p143 = scmp.ne.s32.totalorder %s135, %s137
    %p144 = scmp.eq.s32.totalorder %s22, 3
    %p145 = por %p143, %p144
    %p146 = scmp.ne.s32.totalorder %s137, %s138
    %p147 = scmp.eq.s32.totalorder %s22, 0
    %p148 = por %p146, %p147
    %p149 = scmp.ne.s32.totalorder %s137, %s138
    %p150 = scmp.eq.s32.totalorder %s23, 3
    %p151 = por %p149, %p150
    %p153 = scmp.ne.s32.totalorder %s138, %s152
    %p154 = scmp.eq.s32.totalorder %s23, 0
    %p155 = por %p153, %p154
    %s157 = sadd.s32 %s156, 1
    %p160 = scmp.eq.s32.totalorder %s17, 3
    %p161 = scmp.ne.s32.totalorder %s156, %s158
    %p162 = scmp.eq.s32.totalorder %s17, 0
    %p163 = por %p161, %p162
    %p164 = scmp.ne.s32.totalorder %s156, %s158
    %p165 = scmp.eq.s32.totalorder %s22, 3
    %p166 = por %p164, %p165
    %p167 = scmp.ne.s32.totalorder %s158, %s159
    %p168 = scmp.eq.s32.totalorder %s22, 0
    %p169 = por %p167, %p168
    %p170 = scmp.ne.s32.totalorder %s158, %s159
    %p171 = scmp.eq.s32.totalorder %s23, 3
    %p172 = por %p170, %p171
    %p174 = scmp.ne.s32.totalorder %s159, %s173
    %p175 = scmp.eq.s32.totalorder %s23, 0
    %p176 = por %p174, %p175
    %s178 = sadd.s32 %s177, 1
    %p181 = scmp.eq.s32.totalorder %s17, 3
    %p182 = scmp.ne.s32.totalorder %s177, %s179
    %p183 = scmp.eq.s32.totalorder %s17, 0
    %p184 = por %p182, %p183
    %p185 = scmp.ne.s32.totalorder %s177, %s179
    %p186 = scmp.eq.s32.totalorder %s22, 3
    %p187 = por %p185, %p186
    %p188 = scmp.ne.s32.totalorder %s179, %s180
    %p189 = scmp.eq.s32.totalorder %s22, 0
    %p190 = por %p188, %p189
    %p191 = scmp.ne.s32.totalorder %s179, %s180
    %p192 = scmp.eq.s32.totalorder %s23, 3
    %p193 = por %p191, %p192
    %p195 = scmp.ne.s32.totalorder %s180, %s194
    %p196 = scmp.eq.s32.totalorder %s23, 0
    %p197 = por %p195, %p196
    %s199 = sadd.s32 %s198, 1
    %p202 = scmp.eq.s32.totalorder %s17, 3
    %p203 = scmp.ne.s32.totalorder %s198, %s200
    %p204 = scmp.eq.s32.totalorder %s17, 0
    %p205 = por %p203, %p204
    %p206 = scmp.ne.s32.totalorder %s198, %s200
    %p207 = scmp.eq.s32.totalorder %s22, 3
    %p208 = por %p206, %p207
    %p209 = scmp.ne.s32.totalorder %s200, %s201
    %p210 = scmp.eq.s32.totalorder %s22, 0
    %p211 = por %p209, %p210
    %p212 = scmp.ne.s32.totalorder %s200, %s201
    %p213 = scmp.eq.s32.totalorder %s23, 3
    %p214 = por %p212, %p213
    %p216 = scmp.ne.s32.totalorder %s201, %s215
    %p217 = scmp.eq.s32.totalorder %s23, 0
    %p218 = por %p216, %p217
    %s219 = ssub.s32 %s17, %s24
    %p220 = scmp.eq.s32.totalorder %s219, 0
    %s222 = sadd.s32 %s221, 1
    %s223 = scalar_select %p220, %s221, %s222
    %p226 = pneg %p220
    %p227 = scmp.eq.s32.totalorder %s17, 3
    %p228 = por %p226, %p227
    %p229 = scmp.ne.s32.totalorder %s221, %s224
    %p230 = scmp.eq.s32.totalorder %s17, 0
    %p231 = por %p229, %p230
    %p232 = scmp.ne.s32.totalorder %s221, %s224
    %p233 = scmp.eq.s32.totalorder %s22, 3
    %p234 = por %p232, %p233
    %p235 = scmp.ne.s32.totalorder %s224, %s225
    %p236 = scmp.eq.s32.totalorder %s22, 0
    %p237 = por %p235, %p236
    %p238 = scmp.ne.s32.totalorder %s224, %s225
    %p239 = scmp.eq.s32.totalorder %s23, 3
    %p240 = por %p238, %p239
    %p242 = scmp.ne.s32.totalorder %s225, %s241
    %p243 = scmp.eq.s32.totalorder %s23, 0
    %p244 = por %p242, %p243
    %s245 = ssub.s32 %s17, %s24
    %p246 = scmp.eq.s32.totalorder %s245, 0
    %s248 = sadd.s32 %s247, 1
    %s249 = scalar_select %p246, %s247, %s248
    %p252 = pneg %p246
    %p253 = scmp.eq.s32.totalorder %s17, 3
    %p254 = por %p252, %p253
    %p255 = scmp.ne.s32.totalorder %s247, %s250
    %p256 = scmp.eq.s32.totalorder %s17, 0
    %p257 = por %p255, %p256
    %p258 = scmp.ne.s32.totalorder %s247, %s250
    %p259 = scmp.eq.s32.totalorder %s22, 3
    %p260 = por %p258, %p259
    %p261 = scmp.ne.s32.totalorder %s250, %s251
    %p262 = scmp.eq.s32.totalorder %s22, 0
    %p263 = por %p261, %p262
    %p264 = scmp.ne.s32.totalorder %s250, %s251
    %p265 = scmp.eq.s32.totalorder %s23, 3
    %p266 = por %p264, %p265
    %p268 = scmp.ne.s32.totalorder %s251, %s267
    %p269 = scmp.eq.s32.totalorder %s23, 0
    %p270 = por %p268, %p269
    %p271 = scmp.le.s32.totalorder 1, %s17
    %p272 = scmp.lt.s32.totalorder %s17, 5
    %p273 = pnand %p271, %p272
    %p274 = pneg %p273
    // Predicated region
    $region9: #{_lambda_.1} parent=5 // pred_check
      _
    $region10: #{_lambda_.1} parent=5 // pred_check_branch
      %276 = sbr.rel (%p273) target = $region12
    $region11: #{_lambda_.1} parent=5 // pred_region
      %s277 = ssub.s32 %s17, 1
      // Predicated region
      $region13: #{_lambda_.1} parent=11 // pred_check
        %p278 = pneg %p64
      $region14: #{_lambda_.1} parent=11 // pred_check_branch
        %280 = sbr.rel (%p278) target = $region16
      $region15: #{_lambda_.1} parent=11 // pred_region
        _
      $region16: #{_lambda_.1} parent=11 // pred_fallthru
        _
      // Predicated region
      $region17: #{_lambda_.1} parent=11 // pred_check
        %p281 = pneg %p85
      $region18: #{_lambda_.1} parent=11 // pred_check_branch
        %283 = sbr.rel (%p281) target = $region20
      $region19: #{_lambda_.1} parent=11 // pred_region
        _
      $region20: #{_lambda_.1} parent=11 // pred_fallthru
        _
      // Predicated region
      $region21: #{_lambda_.1} parent=11 // pred_check
        %p284 = pneg %p106
      $region22: #{_lambda_.1} parent=11 // pred_check_branch
        %286 = sbr.rel (%p284) target = $region24
      $region23: #{_lambda_.1} parent=11 // pred_region
        _
      $region24: #{_lambda_.1} parent=11 // pred_fallthru
        _
      // Predicated region
      $region25: #{_lambda_.1} parent=11 // pred_check
        %p287 = pneg %p127
      $region26: #{_lambda_.1} parent=11 // pred_check_branch
        %289 = sbr.rel (%p287) target = $region28
      $region27: #{_lambda_.1} parent=11 // pred_region
        _
      $region28: #{_lambda_.1} parent=11 // pred_fallthru
        _
      // Predicated region
      $region29: #{_lambda_.1} parent=11 // pred_check
        %p290 = pneg %p148
      $region30: #{_lambda_.1} parent=11 // pred_check_branch
        %292 = sbr.rel (%p290) target = $region32
      $region31: #{_lambda_.1} parent=11 // pred_region
        _
      $region32: #{_lambda_.1} parent=11 // pred_fallthru
        _
      // Predicated region
      $region33: #{_lambda_.1} parent=11 // pred_check
        %p293 = pneg %p169
      $region34: #{_lambda_.1} parent=11 // pred_check_branch
        %295 = sbr.rel (%p293) target = $region36
      $region35: #{_lambda_.1} parent=11 // pred_region
        _
      $region36: #{_lambda_.1} parent=11 // pred_fallthru
        _
      // Predicated region
      $region37: #{_lambda_.1} parent=11 // pred_check
        %p296 = pneg %p190
      $region38: #{_lambda_.1} parent=11 // pred_check_branch
        %298 = sbr.rel (%p296) target = $region40
      $region39: #{_lambda_.1} parent=11 // pred_region
        _
      $region40: #{_lambda_.1} parent=11 // pred_fallthru
        _
      // Predicated region
      $region41: #{_lambda_.1} parent=11 // pred_check
        %p299 = pneg %p211
      $region42: #{_lambda_.1} parent=11 // pred_check_branch
        %301 = sbr.rel (%p299) target = $region44
      $region43: #{_lambda_.1} parent=11 // pred_region
        _
      $region44: #{_lambda_.1} parent=11 // pred_fallthru
        _
    $region12: #{_lambda_.1} parent=5 // pred_fallthru
      _
    %p302 = scmp.lt.s32.totalorder %s17, 4
    // Predicated region
    $region45: #{_lambda_.1} parent=5 // pred_check
      %p303 = pneg %p302
    $region46: #{_lambda_.1} parent=5 // pred_check_branch
      %305 = sbr.rel (%p303) target = $region48
    $region47: #{_lambda_.1} parent=5 // pred_region
      // Predicated region
      $region49: #{_lambda_.1} parent=47 // pred_check
        %p306 = pneg %p37
      $region50: #{_lambda_.1} parent=47 // pred_check_branch
        %308 = sbr.rel (%p306) target = $region52
      $region51: #{_lambda_.1} parent=47 // pred_region
        %s309 = smul.u32 32, %s17
        %p310 = scmp.lt.s32.totalorder %s309, 127
        %s311 = scalar_select %p310, %s309, 127
        %s312 = smul.addr %s311, 7
        %s313 = smul.addr %s312, 4
        %s314 = scalar_lea.vmem %s0, %s313
        %s315 = smul.u32 32, %s17
      $region52: #{_lambda_.1} parent=47 // pred_fallthru
        _
    $region48: #{_lambda_.1} parent=5 // pred_fallthru
      _
    %p316 = scmp.le.s32.totalorder 1, %s17
    %p317 = scmp.lt.s32.totalorder %s17, 5
    %p318 = pnand %p316, %p317
    %p319 = pneg %p318
    // Predicated region
    $region53: #{_lambda_.1} parent=5 // pred_check
      _
    $region54: #{_lambda_.1} parent=5 // pred_check_branch
      %321 = sbr.rel (%p318) target = $region56
    $region55: #{_lambda_.1} parent=5 // pred_region
      %s322 = ssub.s32 %s17, 1
      %s323 = smul.u32 32, %s22
      %p324 = scmp.lt.s32.totalorder %s323, 127
      %s325 = scalar_select %p324, %s323, 127
      %s326 = smul.addr %s325, 7
      %s327 = smul.addr %s326, 4
      %s328 = scalar_lea.vmem %s0, %s327
      %p329 = pneg %p43
      %p330 = pneg %p40
      %p331 = pneg %p64
      %p332 = pneg %p61
      %p333 = pneg %p85
      %p334 = pneg %p82
      %p335 = pneg %p106
      %p336 = pneg %p103
      %p337 = pneg %p127
      %p338 = pneg %p124
      %p339 = pneg %p148
      %p340 = pneg %p145
      %p341 = pneg %p169
      %p342 = pneg %p166
      %p343 = pneg %p190
      %p344 = pneg %p187
      %p345 = pneg %p211
      %p346 = pneg %p208
      %p347 = pneg %p237
      %p348 = pneg %p234
      %s349 = smul.u32 32, %s22
      %p350 = scmp.lt.s32.totalorder %s349, 127
      %s351 = scalar_select %p350, %s349, 127
      %s352 = smul.addr %s351, 7
      %s353 = smul.addr %s352, 8
      %s354 = scalar_lea.vmem %s9, %s353
      %p355 = pneg %p263
      %p356 = pneg %p260
      %s357 = smul.u32 32, %s22
      %p358 = scmp.lt.s32.totalorder %s357, 127
      %s359 = scalar_select %p358, %s357, 127
      %s360 = smul.addr %s359, 8
      %s361 = scalar_lea.vmem %s10, %s360
      %s362 = smul.u32 32, %s22
      %p363 = scmp.lt.s32.totalorder %s362, 127
      %s364 = scalar_select %p363, %s362, 127
      %s365 = smul.addr %s364, 7
      %s366 = smul.addr %s365, 4
      %s367 = scalar_lea.vmem %s0, %s366
      %s368 = smul.u32 32, %s22
      %s369 = smul.u32 32, %s22
      %p370 = scmp.lt.s32.totalorder %s369, 127
      %s371 = scalar_select %p370, %s369, 127
      %s372 = smul.addr %s371, 7
      %s373 = smul.addr %s372, 8
      %s374 = scalar_lea.vmem %s9, %s373
      %s375 = smul.u32 32, %s22
      %s376 = smul.u32 32, %s22
      %p377 = scmp.lt.s32.totalorder %s376, 127
      %s378 = scalar_select %p377, %s376, 127
      %s379 = smul.addr %s378, 8
      %s380 = scalar_lea.vmem %s10, %s379
      %s381 = smul.u32 32, %s22
      %v383 = vld [vmem:[%s367] sm:$0xff]
      %v384 = vld [vmem:[%s367 + $0x8] sm:$0xff]
      %v385 = vld [vmem:[%s367 + $0x10] sm:$0xff]
      %v386 = vld [vmem:[%s367 + $0x18] sm:$0xf]
      %v387 = vld [vmem:[%s367 + $0x1c] sm:$0xff]
      %v388 = vld [vmem:[%s367 + $0x24] sm:$0xff]
      %v389 = vld [vmem:[%s367 + $0x2c] sm:$0xff]
      %v390 = vld [vmem:[%s367 + $0x34] sm:$0xf]
      %v391 = vld [vmem:[%s367 + $0x38] sm:$0xff]
      %v392 = vld [vmem:[%s367 + $0x40] sm:$0xff]
      %v393 = vld [vmem:[%s367 + $0x48] sm:$0xff]
      %v394 = vld [vmem:[%s367 + $0x50] sm:$0xf]
      %v395 = vld [vmem:[%s367 + $0x54] sm:$0xff]
      %v396 = vld [vmem:[%s367 + $0x5c] sm:$0xff]
      %v397 = vld [vmem:[%s367 + $0x64] sm:$0xff]
      %v398 = vld [vmem:[%s367 + $0x6c] sm:$0xf]
      %v399 = vld [vmem:[%s367 + $0x70] sm:$0xff]
      %v400 = vld [vmem:[%s367 + $0x78] sm:$0xff]
      %v401 = vld [vmem:[%s367 + $0x80] sm:$0xff]
      %v402 = vld [vmem:[%s367 + $0x88] sm:$0xf]
      %v403 = vld [vmem:[%s367 + $0x8c] sm:$0xff]
      %v404 = vld [vmem:[%s367 + $0x94] sm:$0xff]
      %v405 = vld [vmem:[%s367 + $0x9c] sm:$0xff]
      %v406 = vld [vmem:[%s367 + $0xa4] sm:$0xf]
      %v407 = vld [vmem:[%s367 + $0xa8] sm:$0xff]
      %v408 = vld [vmem:[%s367 + $0xb0] sm:$0xff]
      %v409 = vld [vmem:[%s367 + $0xb8] sm:$0xff]
      %v410 = vld [vmem:[%s367 + $0xc0] sm:$0xf]
      %v411 = vld [vmem:[%s367 + $0xc4] sm:$0xff]
      %v412 = vld [vmem:[%s367 + $0xcc] sm:$0xff]
      %v413 = vld [vmem:[%s367 + $0xd4] sm:$0xff]
      %v414 = vld [vmem:[%s367 + $0xdc] sm:$0xf]
      %v415 = vld [vmem:[%s367 + $0xe0] sm:$0xff]
      %v416 = vld [vmem:[%s367 + $0xe8] sm:$0xff]
      %v417 = vld [vmem:[%s367 + $0xf0] sm:$0xff]
      %v418 = vld [vmem:[%s367 + $0xf8] sm:$0xf]
      %v419 = vld [vmem:[%s367 + $0xfc] sm:$0xff]
      %v420 = vld [vmem:[%s367 + $0x104] sm:$0xff]
      %v421 = vld [vmem:[%s367 + $0x10c] sm:$0xff]
      %v422 = vld [vmem:[%s367 + $0x114] sm:$0xf]
      %v423 = vld [vmem:[%s367 + $0x118] sm:$0xff]
      %v424 = vld [vmem:[%s367 + $0x120] sm:$0xff]
      %v425 = vld [vmem:[%s367 + $0x128] sm:$0xff]
      %v426 = vld [vmem:[%s367 + $0x130] sm:$0xf]
      %v427 = vld [vmem:[%s367 + $0x134] sm:$0xff]
      %v428 = vld [vmem:[%s367 + $0x13c] sm:$0xff]
      %v429 = vld [vmem:[%s367 + $0x144] sm:$0xff]
      %v430 = vld [vmem:[%s367 + $0x14c] sm:$0xf]
      %v431 = vld [vmem:[%s367 + $0x150] sm:$0xff]
      %v432 = vld [vmem:[%s367 + $0x158] sm:$0xff]
      %v433 = vld [vmem:[%s367 + $0x160] sm:$0xff]
      %v434 = vld [vmem:[%s367 + $0x168] sm:$0xf]
      %v435 = vld [vmem:[%s367 + $0x16c] sm:$0xff]
      %v436 = vld [vmem:[%s367 + $0x174] sm:$0xff]
      %v437 = vld [vmem:[%s367 + $0x17c] sm:$0xff]
      %v438 = vld [vmem:[%s367 + $0x184] sm:$0xf]
      %v439 = vld [vmem:[%s367 + $0x188] sm:$0xff]
      %v440 = vld [vmem:[%s367 + $0x190] sm:$0xff]
      %v441 = vld [vmem:[%s367 + $0x198] sm:$0xff]
      %v442 = vld [vmem:[%s367 + $0x1a0] sm:$0xf]
      %v443 = vld [vmem:[%s367 + $0x1a4] sm:$0xff]
      %v444 = vld [vmem:[%s367 + $0x1ac] sm:$0xff]
      %v445 = vld [vmem:[%s367 + $0x1b4] sm:$0xff]
      %v446 = vld [vmem:[%s367 + $0x1bc] sm:$0xf]
      %v447 = vld [vmem:[%s367 + $0x1c0] sm:$0xff]
      %v448 = vld [vmem:[%s367 + $0x1c8] sm:$0xff]
      %v449 = vld [vmem:[%s367 + $0x1d0] sm:$0xff]
      %v450 = vld [vmem:[%s367 + $0x1d8] sm:$0xf]
      %v451 = vld [vmem:[%s367 + $0x1dc] sm:$0xff]
      %v452 = vld [vmem:[%s367 + $0x1e4] sm:$0xff]
      %v453 = vld [vmem:[%s367 + $0x1ec] sm:$0xff]
      %v454 = vld [vmem:[%s367 + $0x1f4] sm:$0xf]
      %v455 = vld [vmem:[%s367 + $0x1f8] sm:$0xff]
      %v456 = vld [vmem:[%s367 + $0x200] sm:$0xff]
      %v457 = vld [vmem:[%s367 + $0x208] sm:$0xff]
      %v458 = vld [vmem:[%s367 + $0x210] sm:$0xf]
      %v459 = vld [vmem:[%s367 + $0x214] sm:$0xff]
      %v460 = vld [vmem:[%s367 + $0x21c] sm:$0xff]
      %v461 = vld [vmem:[%s367 + $0x224] sm:$0xff]
      %v462 = vld [vmem:[%s367 + $0x22c] sm:$0xf]
      %v463 = vld [vmem:[%s367 + $0x230] sm:$0xff]
      %v464 = vld [vmem:[%s367 + $0x238] sm:$0xff]
      %v465 = vld [vmem:[%s367 + $0x240] sm:$0xff]
      %v466 = vld [vmem:[%s367 + $0x248] sm:$0xf]
      %v467 = vld [vmem:[%s367 + $0x24c] sm:$0xff]
      %v468 = vld [vmem:[%s367 + $0x254] sm:$0xff]
      %v469 = vld [vmem:[%s367 + $0x25c] sm:$0xff]
      %v470 = vld [vmem:[%s367 + $0x264] sm:$0xf]
      %v471 = vld [vmem:[%s367 + $0x268] sm:$0xff]
      %v472 = vld [vmem:[%s367 + $0x270] sm:$0xff]
      %v473 = vld [vmem:[%s367 + $0x278] sm:$0xff]
      %v474 = vld [vmem:[%s367 + $0x280] sm:$0xf]
      %v475 = vld [vmem:[%s367 + $0x284] sm:$0xff]
      %v476 = vld [vmem:[%s367 + $0x28c] sm:$0xff]
      %v477 = vld [vmem:[%s367 + $0x294] sm:$0xff]
      %v478 = vld [vmem:[%s367 + $0x29c] sm:$0xf]
      %v479 = vld [vmem:[%s367 + $0x2a0] sm:$0xff]
      %v480 = vld [vmem:[%s367 + $0x2a8] sm:$0xff]
      %v481 = vld [vmem:[%s367 + $0x2b0] sm:$0xff]
      %v482 = vld [vmem:[%s367 + $0x2b8] sm:$0xf]
      %v483 = vld [vmem:[%s367 + $0x2bc] sm:$0xff]
      %v484 = vld [vmem:[%s367 + $0x2c4] sm:$0xff]
      %v485 = vld [vmem:[%s367 + $0x2cc] sm:$0xff]
      %v486 = vld [vmem:[%s367 + $0x2d4] sm:$0xf]
      %v487 = vld [vmem:[%s367 + $0x2d8] sm:$0xff]
      %v488 = vld [vmem:[%s367 + $0x2e0] sm:$0xff]
      %v489 = vld [vmem:[%s367 + $0x2e8] sm:$0xff]
      %v490 = vld [vmem:[%s367 + $0x2f0] sm:$0xf]
      %v491 = vld [vmem:[%s367 + $0x2f4] sm:$0xff]
      %v492 = vld [vmem:[%s367 + $0x2fc] sm:$0xff]
      %v493 = vld [vmem:[%s367 + $0x304] sm:$0xff]
      %v494 = vld [vmem:[%s367 + $0x30c] sm:$0xf]
      %v495 = vld [vmem:[%s367 + $0x310] sm:$0xff]
      %v496 = vld [vmem:[%s367 + $0x318] sm:$0xff]
      %v497 = vld [vmem:[%s367 + $0x320] sm:$0xff]
      %v498 = vld [vmem:[%s367 + $0x328] sm:$0xf]
      %v499 = vld [vmem:[%s367 + $0x32c] sm:$0xff]
      %v500 = vld [vmem:[%s367 + $0x334] sm:$0xff]
      %v501 = vld [vmem:[%s367 + $0x33c] sm:$0xff]
      %v502 = vld [vmem:[%s367 + $0x344] sm:$0xf]
      %v503 = vld [vmem:[%s367 + $0x348] sm:$0xff]
      %v504 = vld [vmem:[%s367 + $0x350] sm:$0xff]
      %v505 = vld [vmem:[%s367 + $0x358] sm:$0xff]
      %v506 = vld [vmem:[%s367 + $0x360] sm:$0xf]
      %v507 = vld [vmem:[%s367 + $0x364] sm:$0xff]
      %v508 = vld [vmem:[%s367 + $0x36c] sm:$0xff]
      %v509 = vld [vmem:[%s367 + $0x374] sm:$0xff]
      %v510 = vld [vmem:[%s367 + $0x37c] sm:$0xf]
      %v511 = vld [vmem:[%s1] sm:$0xf]
      %v512 = vld [vmem:[%s1 + $0x4] sm:$0xf]
      %v513 = vld [vmem:[%s1 + $0x8] sm:$0xf]
      %v514 = vld [vmem:[%s1 + $0xc] sm:$0xf]
      %v515 = vld [vmem:[%s1 + $0x10] sm:$0xf]
      %v516 = vld [vmem:[%s1 + $0x14] sm:$0xf]
      %v517 = vld [vmem:[%s1 + $0x18] sm:$0xf]
      %v518 = vld [vmem:[%s1 + $0x1c] sm:$0xf]
      %v519 = vld [vmem:[%s1 + $0x20] sm:$0xf]
      %v520 = vld [vmem:[%s1 + $0x24] sm:$0xf]
      %v521 = vld [vmem:[%s1 + $0x28] sm:$0xf]
      %v522 = vld [vmem:[%s1 + $0x2c] sm:$0xf]
      %v523 = vld [vmem:[%s1 + $0x30] sm:$0xf]
      %v524 = vld [vmem:[%s1 + $0x34] sm:$0xf]
      %v525 = vld [vmem:[%s1 + $0x38] sm:$0xf]
      %v526 = vld [vmem:[%s1 + $0x3c] sm:$0xf]
      %v527 = vld [vmem:[%s1 + $0x40] sm:$0xf]
      %v528 = vld [vmem:[%s1 + $0x44] sm:$0xf]
      %v529 = vld [vmem:[%s1 + $0x48] sm:$0xf]
      %v530 = vld [vmem:[%s1 + $0x4c] sm:$0xf]
      %v531 = vld [vmem:[%s1 + $0x50] sm:$0xf]
      %v532 = vld [vmem:[%s1 + $0x54] sm:$0xf]
      %v533 = vld [vmem:[%s1 + $0x58] sm:$0xf]
      %v534 = vld [vmem:[%s1 + $0x5c] sm:$0xf]
      %v535 = vld [vmem:[%s1 + $0x60] sm:$0xf]
      %v536 = vld [vmem:[%s1 + $0x64] sm:$0xf]
      %v537 = vld [vmem:[%s1 + $0x68] sm:$0xf]
      %v538 = vld [vmem:[%s1 + $0x6c] sm:$0xf]
      %v539 = vld [vmem:[%s1 + $0x70] sm:$0xf]
      %v540 = vld [vmem:[%s1 + $0x74] sm:$0xf]
      %v541 = vld [vmem:[%s1 + $0x78] sm:$0xf]
      %v542 = vld [vmem:[%s1 + $0x7c] sm:$0xf]
      %v543 = vld [vmem:[%s1 + $0x80] sm:$0xf]
      %v544 = vld [vmem:[%s1 + $0x84] sm:$0xf]
      %v545 = vld [vmem:[%s1 + $0x88] sm:$0xf]
      %v546 = vld [vmem:[%s1 + $0x8c] sm:$0xf]
      %v547 = vld [vmem:[%s1 + $0x90] sm:$0xf]
      %v548 = vld [vmem:[%s1 + $0x94] sm:$0xf]
      %v549 = vld [vmem:[%s1 + $0x98] sm:$0xf]
      %v550 = vld [vmem:[%s1 + $0x9c] sm:$0xf]
      %v551 = vld [vmem:[%s1 + $0xa0] sm:$0xf]
      %v552 = vld [vmem:[%s1 + $0xa4] sm:$0xf]
      %v553 = vld [vmem:[%s1 + $0xa8] sm:$0xf]
      %v554 = vld [vmem:[%s1 + $0xac] sm:$0xf]
      %v555 = vld [vmem:[%s1 + $0xb0] sm:$0xf]
      %v556 = vld [vmem:[%s1 + $0xb4] sm:$0xf]
      %v557 = vld [vmem:[%s1 + $0xb8] sm:$0xf]
      %v558 = vld [vmem:[%s1 + $0xbc] sm:$0xf]
      %v559 = vld [vmem:[%s1 + $0xc0] sm:$0xf]
      %v560 = vld [vmem:[%s1 + $0xc4] sm:$0xf]
      %v561 = vld [vmem:[%s1 + $0xc8] sm:$0xf]
      %v562 = vld [vmem:[%s1 + $0xcc] sm:$0xf]
      %v563 = vld [vmem:[%s1 + $0xd0] sm:$0xf]
      %v564 = vld [vmem:[%s1 + $0xd4] sm:$0xf]
      %v565 = vld [vmem:[%s1 + $0xd8] sm:$0xf]
      %v566 = vld [vmem:[%s1 + $0xdc] sm:$0xf]
      %v567 = vld [vmem:[%s1 + $0xe0] sm:$0xf]
      %v568 = vld [vmem:[%s1 + $0xe4] sm:$0xf]
      %v569 = vld [vmem:[%s1 + $0xe8] sm:$0xf]
      %v570 = vld [vmem:[%s1 + $0xec] sm:$0xf]
      %v571 = vld [vmem:[%s1 + $0xf0] sm:$0xf]
      %v572 = vld [vmem:[%s1 + $0xf4] sm:$0xf]
      %v573 = vld [vmem:[%s1 + $0xf8] sm:$0xf]
      %v574 = vld [vmem:[%s1 + $0xfc] sm:$0xf]
      %v575 = vld [vmem:[%s1 + $0x100] sm:$0xf]
      %v576 = vld [vmem:[%s1 + $0x104] sm:$0xf]
      %v577 = vld [vmem:[%s1 + $0x108] sm:$0xf]
      %v578 = vld [vmem:[%s1 + $0x10c] sm:$0xf]
      %v579 = vld [vmem:[%s1 + $0x110] sm:$0xf]
      %v580 = vld [vmem:[%s1 + $0x114] sm:$0xf]
      %v581 = vld [vmem:[%s1 + $0x118] sm:$0xf]
      %v582 = vld [vmem:[%s1 + $0x11c] sm:$0xf]
      %v583 = vld [vmem:[%s1 + $0x120] sm:$0xf]
      %v584 = vld [vmem:[%s1 + $0x124] sm:$0xf]
      %v585 = vld [vmem:[%s1 + $0x128] sm:$0xf]
      %v586 = vld [vmem:[%s1 + $0x12c] sm:$0xf]
      %v587 = vld [vmem:[%s1 + $0x130] sm:$0xf]
      %v588 = vld [vmem:[%s1 + $0x134] sm:$0xf]
      %v589 = vld [vmem:[%s1 + $0x138] sm:$0xf]
      %v590 = vld [vmem:[%s1 + $0x13c] sm:$0xf]
      %v591 = vld [vmem:[%s1 + $0x140] sm:$0xf]
      %v592 = vld [vmem:[%s1 + $0x144] sm:$0xf]
      %v593 = vld [vmem:[%s1 + $0x148] sm:$0xf]
      %v594 = vld [vmem:[%s1 + $0x14c] sm:$0xf]
      %v595 = vld [vmem:[%s1 + $0x150] sm:$0xf]
      %v596 = vld [vmem:[%s1 + $0x154] sm:$0xf]
      %v597 = vld [vmem:[%s1 + $0x158] sm:$0xf]
      %v598 = vld [vmem:[%s1 + $0x15c] sm:$0xf]
      %v599 = vld [vmem:[%s1 + $0x160] sm:$0xf]
      %v600 = vld [vmem:[%s1 + $0x164] sm:$0xf]
      %v601 = vld [vmem:[%s1 + $0x168] sm:$0xf]
      %v602 = vld [vmem:[%s1 + $0x16c] sm:$0xf]
      %v603 = vld [vmem:[%s1 + $0x170] sm:$0xf]
      %v604 = vld [vmem:[%s1 + $0x174] sm:$0xf]
      %v605 = vld [vmem:[%s1 + $0x178] sm:$0xf]
      %v606 = vld [vmem:[%s1 + $0x17c] sm:$0xf]
      %v607 = vld [vmem:[%s1 + $0x180] sm:$0xf]
      %v608 = vld [vmem:[%s1 + $0x184] sm:$0xf]
      %v609 = vld [vmem:[%s1 + $0x188] sm:$0xf]
      %v610 = vld [vmem:[%s1 + $0x18c] sm:$0xf]
      %v611 = vld [vmem:[%s1 + $0x190] sm:$0xf]
      %v612 = vld [vmem:[%s1 + $0x194] sm:$0xf]
      %v613 = vld [vmem:[%s1 + $0x198] sm:$0xf]
      %v614 = vld [vmem:[%s1 + $0x19c] sm:$0xf]
      %v615 = vld [vmem:[%s1 + $0x1a0] sm:$0xf]
      %v616 = vld [vmem:[%s1 + $0x1a4] sm:$0xf]
      %v617 = vld [vmem:[%s1 + $0x1a8] sm:$0xf]
      %v618 = vld [vmem:[%s1 + $0x1ac] sm:$0xf]
      %v619 = vld [vmem:[%s1 + $0x1b0] sm:$0xf]
      %v620 = vld [vmem:[%s1 + $0x1b4] sm:$0xf]
      %v621 = vld [vmem:[%s1 + $0x1b8] sm:$0xf]
      %v622 = vld [vmem:[%s1 + $0x1bc] sm:$0xf]
      %v623 = vld [vmem:[%s2] sm:$0x1]
      %v625 = vlaneseq
      %v626 = vshrl.u32 %v625, 7
      %v627 = vsub.s32 0, %v626
      %v628 = vrot.slane %v623, %v627
      %v758 = vunpack.c.l.b16 %v383
      %v759 = vunpack.c.h.b16 %v383
      %v760 = vunpack.c.l.b16 %v384
      %v761 = vunpack.c.h.b16 %v384
      %v762 = vunpack.c.l.b16 %v385
      %v763 = vunpack.c.h.b16 %v385
      %v764 = vunpack.c.l.b16 %v386
      %v765 = vunpack.c.l.b16 %v387
      %v766 = vunpack.c.h.b16 %v387
      %v767 = vunpack.c.l.b16 %v388
      %v768 = vunpack.c.h.b16 %v388
      %v769 = vunpack.c.l.b16 %v389
      %v770 = vunpack.c.h.b16 %v389
      %v771 = vunpack.c.l.b16 %v390
      %v772 = vunpack.c.l.b16 %v391
      %v773 = vunpack.c.h.b16 %v391
      %v774 = vunpack.c.l.b16 %v392
      %v775 = vunpack.c.h.b16 %v392
      %v776 = vunpack.c.l.b16 %v393
      %v777 = vunpack.c.h.b16 %v393
      %v778 = vunpack.c.l.b16 %v394
      %v779 = vunpack.c.l.b16 %v395
      %v780 = vunpack.c.h.b16 %v395
      %v781 = vunpack.c.l.b16 %v396
      %v782 = vunpack.c.h.b16 %v396
      %v783 = vunpack.c.l.b16 %v397
      %v784 = vunpack.c.h.b16 %v397
      %v785 = vunpack.c.l.b16 %v398
      %v786 = vunpack.c.l.b16 %v399
      %v787 = vunpack.c.h.b16 %v399
      %v788 = vunpack.c.l.b16 %v400
      %v789 = vunpack.c.h.b16 %v400
      %v790 = vunpack.c.l.b16 %v401
      %v791 = vunpack.c.h.b16 %v401
      %v792 = vunpack.c.l.b16 %v402
      %v793 = vunpack.c.l.b16 %v403
      %v794 = vunpack.c.h.b16 %v403
      %v795 = vunpack.c.l.b16 %v404
      %v796 = vunpack.c.h.b16 %v404
      %v797 = vunpack.c.l.b16 %v405
      %v798 = vunpack.c.h.b16 %v405
      %v799 = vunpack.c.l.b16 %v406
      %v800 = vunpack.c.l.b16 %v407
      %v801 = vunpack.c.h.b16 %v407
      %v802 = vunpack.c.l.b16 %v408
      %v803 = vunpack.c.h.b16 %v408
      %v804 = vunpack.c.l.b16 %v409
      %v805 = vunpack.c.h.b16 %v409
      %v806 = vunpack.c.l.b16 %v410
      %v807 = vunpack.c.l.b16 %v411
      %v808 = vunpack.c.h.b16 %v411
      %v809 = vunpack.c.l.b16 %v412
      %v810 = vunpack.c.h.b16 %v412
      %v811 = vunpack.c.l.b16 %v413
      %v812 = vunpack.c.h.b16 %v413
      %v813 = vunpack.c.l.b16 %v414
      %v814 = vunpack.c.l.b16 %v415
      %v815 = vunpack.c.h.b16 %v415
      %v816 = vunpack.c.l.b16 %v416
      %v817 = vunpack.c.h.b16 %v416
      %v818 = vunpack.c.l.b16 %v417
      %v819 = vunpack.c.h.b16 %v417
      %v820 = vunpack.c.l.b16 %v418
      %v821 = vunpack.c.l.b16 %v419
      %v822 = vunpack.c.h.b16 %v419
      %v823 = vunpack.c.l.b16 %v420
      %v824 = vunpack.c.h.b16 %v420
      %v825 = vunpack.c.l.b16 %v421
      %v826 = vunpack.c.h.b16 %v421
      %v827 = vunpack.c.l.b16 %v422
      %v828 = vunpack.c.l.b16 %v423
      %v829 = vunpack.c.h.b16 %v423
      %v830 = vunpack.c.l.b16 %v424
      %v831 = vunpack.c.h.b16 %v424
      %v832 = vunpack.c.l.b16 %v425
      %v833 = vunpack.c.h.b16 %v425
      %v834 = vunpack.c.l.b16 %v426
      %v835 = vunpack.c.l.b16 %v427
      %v836 = vunpack.c.h.b16 %v427
      %v837 = vunpack.c.l.b16 %v428
      %v838 = vunpack.c.h.b16 %v428
      %v839 = vunpack.c.l.b16 %v429
      %v840 = vunpack.c.h.b16 %v429
      %v841 = vunpack.c.l.b16 %v430
      %v842 = vunpack.c.l.b16 %v431
      %v843 = vunpack.c.h.b16 %v431
      %v844 = vunpack.c.l.b16 %v432
      %v845 = vunpack.c.h.b16 %v432
      %v846 = vunpack.c.l.b16 %v433
      %v847 = vunpack.c.h.b16 %v433
      %v848 = vunpack.c.l.b16 %v434
      %v849 = vunpack.c.l.b16 %v435
      %v850 = vunpack.c.h.b16 %v435
      %v851 = vunpack.c.l.b16 %v436
      %v852 = vunpack.c.h.b16 %v436
      %v853 = vunpack.c.l.b16 %v437
      %v854 = vunpack.c.h.b16 %v437
      %v855 = vunpack.c.l.b16 %v438
      %v856 = vunpack.c.l.b16 %v439
      %v857 = vunpack.c.h.b16 %v439
      %v858 = vunpack.c.l.b16 %v440
      %v859 = vunpack.c.h.b16 %v440
      %v860 = vunpack.c.l.b16 %v441
      %v861 = vunpack.c.h.b16 %v441
      %v862 = vunpack.c.l.b16 %v442
      %v863 = vunpack.c.l.b16 %v443
      %v864 = vunpack.c.h.b16 %v443
      %v865 = vunpack.c.l.b16 %v444
      %v866 = vunpack.c.h.b16 %v444
      %v867 = vunpack.c.l.b16 %v445
      %v868 = vunpack.c.h.b16 %v445
      %v869 = vunpack.c.l.b16 %v446
      %v870 = vunpack.c.l.b16 %v447
      %v871 = vunpack.c.h.b16 %v447
      %v872 = vunpack.c.l.b16 %v448
      %v873 = vunpack.c.h.b16 %v448
      %v874 = vunpack.c.l.b16 %v449
      %v875 = vunpack.c.h.b16 %v449
      %v876 = vunpack.c.l.b16 %v450
      %v877 = vunpack.c.l.b16 %v451
      %v878 = vunpack.c.h.b16 %v451
      %v879 = vunpack.c.l.b16 %v452
      %v880 = vunpack.c.h.b16 %v452
      %v881 = vunpack.c.l.b16 %v453
      %v882 = vunpack.c.h.b16 %v453
      %v883 = vunpack.c.l.b16 %v454
      %v884 = vunpack.c.l.b16 %v455
      %v885 = vunpack.c.h.b16 %v455
      %v886 = vunpack.c.l.b16 %v456
      %v887 = vunpack.c.h.b16 %v456
      %v888 = vunpack.c.l.b16 %v457
      %v889 = vunpack.c.h.b16 %v457
      %v890 = vunpack.c.l.b16 %v458
      %v891 = vunpack.c.l.b16 %v459
      %v892 = vunpack.c.h.b16 %v459
      %v893 = vunpack.c.l.b16 %v460
      %v894 = vunpack.c.h.b16 %v460
      %v895 = vunpack.c.l.b16 %v461
      %v896 = vunpack.c.h.b16 %v461
      %v897 = vunpack.c.l.b16 %v462
      %v898 = vunpack.c.l.b16 %v463
      %v899 = vunpack.c.h.b16 %v463
      %v900 = vunpack.c.l.b16 %v464
      %v901 = vunpack.c.h.b16 %v464
      %v902 = vunpack.c.l.b16 %v465
      %v903 = vunpack.c.h.b16 %v465
      %v904 = vunpack.c.l.b16 %v466
      %v905 = vunpack.c.l.b16 %v467
      %v906 = vunpack.c.h.b16 %v467
      %v907 = vunpack.c.l.b16 %v468
      %v908 = vunpack.c.h.b16 %v468
      %v909 = vunpack.c.l.b16 %v469
      %v910 = vunpack.c.h.b16 %v469
      %v911 = vunpack.c.l.b16 %v470
      %v912 = vunpack.c.l.b16 %v471
      %v913 = vunpack.c.h.b16 %v471
      %v914 = vunpack.c.l.b16 %v472
      %v915 = vunpack.c.h.b16 %v472
      %v916 = vunpack.c.l.b16 %v473
      %v917 = vunpack.c.h.b16 %v473
      %v918 = vunpack.c.l.b16 %v474
      %v919 = vunpack.c.l.b16 %v475
      %v920 = vunpack.c.h.b16 %v475
      %v921 = vunpack.c.l.b16 %v476
      %v922 = vunpack.c.h.b16 %v476
      %v923 = vunpack.c.l.b16 %v477
      %v924 = vunpack.c.h.b16 %v477
      %v925 = vunpack.c.l.b16 %v478
      %v926 = vunpack.c.l.b16 %v479
      %v927 = vunpack.c.h.b16 %v479
      %v928 = vunpack.c.l.b16 %v480
      %v929 = vunpack.c.h.b16 %v480
      %v930 = vunpack.c.l.b16 %v481
      %v931 = vunpack.c.h.b16 %v481
      %v932 = vunpack.c.l.b16 %v482
      %v933 = vunpack.c.l.b16 %v483
      %v934 = vunpack.c.h.b16 %v483
      %v935 = vunpack.c.l.b16 %v484
      %v936 = vunpack.c.h.b16 %v484
      %v937 = vunpack.c.l.b16 %v485
      %v938 = vunpack.c.h.b16 %v485
      %v939 = vunpack.c.l.b16 %v486
      %v940 = vunpack.c.l.b16 %v487
      %v941 = vunpack.c.h.b16 %v487
      %v942 = vunpack.c.l.b16 %v488
      %v943 = vunpack.c.h.b16 %v488
      %v944 = vunpack.c.l.b16 %v489
      %v945 = vunpack.c.h.b16 %v489
      %v946 = vunpack.c.l.b16 %v490
      %v947 = vunpack.c.l.b16 %v491
      %v948 = vunpack.c.h.b16 %v491
      %v949 = vunpack.c.l.b16 %v492
      %v950 = vunpack.c.h.b16 %v492
      %v951 = vunpack.c.l.b16 %v493
      %v952 = vunpack.c.h.b16 %v493
      %v953 = vunpack.c.l.b16 %v494
      %v954 = vunpack.c.l.b16 %v495
      %v955 = vunpack.c.h.b16 %v495
      %v956 = vunpack.c.l.b16 %v496
      %v957 = vunpack.c.h.b16 %v496
      %v958 = vunpack.c.l.b16 %v497
      %v959 = vunpack.c.h.b16 %v497
      %v960 = vunpack.c.l.b16 %v498
      %v961 = vunpack.c.l.b16 %v499
      %v962 = vunpack.c.h.b16 %v499
      %v963 = vunpack.c.l.b16 %v500
      %v964 = vunpack.c.h.b16 %v500
      %v965 = vunpack.c.l.b16 %v501
      %v966 = vunpack.c.h.b16 %v501
      %v967 = vunpack.c.l.b16 %v502
      %v968 = vunpack.c.l.b16 %v503
      %v969 = vunpack.c.h.b16 %v503
      %v970 = vunpack.c.l.b16 %v504
      %v971 = vunpack.c.h.b16 %v504
      %v972 = vunpack.c.l.b16 %v505
      %v973 = vunpack.c.h.b16 %v505
      %v974 = vunpack.c.l.b16 %v506
      %v975 = vunpack.c.l.b16 %v507
      %v976 = vunpack.c.h.b16 %v507
      %v977 = vunpack.c.l.b16 %v508
      %v978 = vunpack.c.h.b16 %v508
      %v979 = vunpack.c.l.b16 %v509
      %v980 = vunpack.c.h.b16 %v509
      %v981 = vunpack.c.l.b16 %v510
      %v982 = vpack.c.b16 %v765, %v758
      %v983 = vpack.c.b16 %v766, %v759
      %v984 = vpack.c.b16 %v767, %v760
      %v985 = vpack.c.b16 %v768, %v761
      %v986 = vpack.c.b16 %v769, %v762
      %v987 = vpack.c.b16 %v770, %v763
      %v988 = vpack.c.b16 %v771, %v764
      %v989 = vpack.c.b16 %v779, %v772
      %v990 = vpack.c.b16 %v780, %v773
      %v991 = vpack.c.b16 %v781, %v774
      %v992 = vpack.c.b16 %v782, %v775
      %v993 = vpack.c.b16 %v783, %v776
      %v994 = vpack.c.b16 %v784, %v777
      %v995 = vpack.c.b16 %v785, %v778
      %v996 = vpack.c.b16 %v793, %v786
      %v997 = vpack.c.b16 %v794, %v787
      %v998 = vpack.c.b16 %v795, %v788
      %v999 = vpack.c.b16 %v796, %v789
      %v1000 = vpack.c.b16 %v797, %v790
      %v1001 = vpack.c.b16 %v798, %v791
      %v1002 = vpack.c.b16 %v799, %v792
      %v1003 = vpack.c.b16 %v807, %v800
      %v1004 = vpack.c.b16 %v808, %v801
      %v1005 = vpack.c.b16 %v809, %v802
      %v1006 = vpack.c.b16 %v810, %v803
      %v1007 = vpack.c.b16 %v811, %v804
      %v1008 = vpack.c.b16 %v812, %v805
      %v1009 = vpack.c.b16 %v813, %v806
      %v1010 = vpack.c.b16 %v821, %v814
      %v1011 = vpack.c.b16 %v822, %v815
      %v1012 = vpack.c.b16 %v823, %v816
      %v1013 = vpack.c.b16 %v824, %v817
      %v1014 = vpack.c.b16 %v825, %v818
      %v1015 = vpack.c.b16 %v826, %v819
      %v1016 = vpack.c.b16 %v827, %v820
      %v1017 = vpack.c.b16 %v835, %v828
      %v1018 = vpack.c.b16 %v836, %v829
      %v1019 = vpack.c.b16 %v837, %v830
      %v1020 = vpack.c.b16 %v838, %v831
      %v1021 = vpack.c.b16 %v839, %v832
      %v1022 = vpack.c.b16 %v840, %v833
      %v1023 = vpack.c.b16 %v841, %v834
      %v1024 = vpack.c.b16 %v849, %v842
      %v1025 = vpack.c.b16 %v850, %v843
      %v1026 = vpack.c.b16 %v851, %v844
      %v1027 = vpack.c.b16 %v852, %v845
      %v1028 = vpack.c.b16 %v853, %v846
      %v1029 = vpack.c.b16 %v854, %v847
      %v1030 = vpack.c.b16 %v855, %v848
      %v1031 = vpack.c.b16 %v863, %v856
      %v1032 = vpack.c.b16 %v864, %v857
      %v1033 = vpack.c.b16 %v865, %v858
      %v1034 = vpack.c.b16 %v866, %v859
      %v1035 = vpack.c.b16 %v867, %v860
      %v1036 = vpack.c.b16 %v868, %v861
      %v1037 = vpack.c.b16 %v869, %v862
      %v1038 = vpack.c.b16 %v877, %v870
      %v1039 = vpack.c.b16 %v878, %v871
      %v1040 = vpack.c.b16 %v879, %v872
      %v1041 = vpack.c.b16 %v880, %v873
      %v1042 = vpack.c.b16 %v881, %v874
      %v1043 = vpack.c.b16 %v882, %v875
      %v1044 = vpack.c.b16 %v883, %v876
      %v1045 = vpack.c.b16 %v891, %v884
      %v1046 = vpack.c.b16 %v892, %v885
      %v1047 = vpack.c.b16 %v893, %v886
      %v1048 = vpack.c.b16 %v894, %v887
      %v1049 = vpack.c.b16 %v895, %v888
      %v1050 = vpack.c.b16 %v896, %v889
      %v1051 = vpack.c.b16 %v897, %v890
      %v1052 = vpack.c.b16 %v905, %v898
      %v1053 = vpack.c.b16 %v906, %v899
      %v1054 = vpack.c.b16 %v907, %v900
      %v1055 = vpack.c.b16 %v908, %v901
      %v1056 = vpack.c.b16 %v909, %v902
      %v1057 = vpack.c.b16 %v910, %v903
      %v1058 = vpack.c.b16 %v911, %v904
      %v1059 = vpack.c.b16 %v919, %v912
      %v1060 = vpack.c.b16 %v920, %v913
      %v1061 = vpack.c.b16 %v921, %v914
      %v1062 = vpack.c.b16 %v922, %v915
      %v1063 = vpack.c.b16 %v923, %v916
      %v1064 = vpack.c.b16 %v924, %v917
      %v1065 = vpack.c.b16 %v925, %v918
      %v1066 = vpack.c.b16 %v933, %v926
      %v1067 = vpack.c.b16 %v934, %v927
      %v1068 = vpack.c.b16 %v935, %v928
      %v1069 = vpack.c.b16 %v936, %v929
      %v1070 = vpack.c.b16 %v937, %v930
      %v1071 = vpack.c.b16 %v938, %v931
      %v1072 = vpack.c.b16 %v939, %v932
      %v1073 = vpack.c.b16 %v947, %v940
      %v1074 = vpack.c.b16 %v948, %v941
      %v1075 = vpack.c.b16 %v949, %v942
      %v1076 = vpack.c.b16 %v950, %v943
      %v1077 = vpack.c.b16 %v951, %v944
      %v1078 = vpack.c.b16 %v952, %v945
      %v1079 = vpack.c.b16 %v953, %v946
      %v1080 = vpack.c.b16 %v961, %v954
      %v1081 = vpack.c.b16 %v962, %v955
      %v1082 = vpack.c.b16 %v963, %v956
      %v1083 = vpack.c.b16 %v964, %v957
      %v1084 = vpack.c.b16 %v965, %v958
      %v1085 = vpack.c.b16 %v966, %v959
      %v1086 = vpack.c.b16 %v967, %v960
      %v1087 = vpack.c.b16 %v975, %v968
      %v1088 = vpack.c.b16 %v976, %v969
      %v1089 = vpack.c.b16 %v977, %v970
      %v1090 = vpack.c.b16 %v978, %v971
      %v1091 = vpack.c.b16 %v979, %v972
      %v1092 = vpack.c.b16 %v980, %v973
      %v1093 = vpack.c.b16 %v981, %v974
      %v1318 = vunpack.c.l.b16 %v511
      %v1319 = vunpack.c.l.b16 %v512
      %v1320 = vunpack.c.l.b16 %v513
      %v1321 = vunpack.c.l.b16 %v514
      %v1322 = vunpack.c.l.b16 %v515
      %v1323 = vunpack.c.l.b16 %v516
      %v1324 = vunpack.c.l.b16 %v517
      %v1325 = vunpack.c.l.b16 %v518
      %v1326 = vunpack.c.l.b16 %v519
      %v1327 = vunpack.c.l.b16 %v520
      %v1328 = vunpack.c.l.b16 %v521
      %v1329 = vunpack.c.l.b16 %v522
      %v1330 = vunpack.c.l.b16 %v523
      %v1331 = vunpack.c.l.b16 %v524
      %v1332 = vunpack.c.l.b16 %v525
      %v1333 = vunpack.c.l.b16 %v526
      %v1334 = vunpack.c.l.b16 %v527
      %v1335 = vunpack.c.l.b16 %v528
      %v1336 = vunpack.c.l.b16 %v529
      %v1337 = vunpack.c.l.b16 %v530
      %v1338 = vunpack.c.l.b16 %v531
      %v1339 = vunpack.c.l.b16 %v532
      %v1340 = vunpack.c.l.b16 %v533
      %v1341 = vunpack.c.l.b16 %v534
      %v1342 = vunpack.c.l.b16 %v535
      %v1343 = vunpack.c.l.b16 %v536
      %v1344 = vunpack.c.l.b16 %v537
      %v1345 = vunpack.c.l.b16 %v538
      %v1346 = vunpack.c.l.b16 %v539
      %v1347 = vunpack.c.l.b16 %v540
      %v1348 = vunpack.c.l.b16 %v541
      %v1349 = vunpack.c.l.b16 %v542
      %v1350 = vunpack.c.l.b16 %v543
      %v1351 = vunpack.c.l.b16 %v544
      %v1352 = vunpack.c.l.b16 %v545
      %v1353 = vunpack.c.l.b16 %v546
      %v1354 = vunpack.c.l.b16 %v547
      %v1355 = vunpack.c.l.b16 %v548
      %v1356 = vunpack.c.l.b16 %v549
      %v1357 = vunpack.c.l.b16 %v550
      %v1358 = vunpack.c.l.b16 %v551
      %v1359 = vunpack.c.l.b16 %v552
      %v1360 = vunpack.c.l.b16 %v553
      %v1361 = vunpack.c.l.b16 %v554
      %v1362 = vunpack.c.l.b16 %v555
      %v1363 = vunpack.c.l.b16 %v556
      %v1364 = vunpack.c.l.b16 %v557
      %v1365 = vunpack.c.l.b16 %v558
      %v1366 = vunpack.c.l.b16 %v559
      %v1367 = vunpack.c.l.b16 %v560
      %v1368 = vunpack.c.l.b16 %v561
      %v1369 = vunpack.c.l.b16 %v562
      %v1370 = vunpack.c.l.b16 %v563
      %v1371 = vunpack.c.l.b16 %v564
      %v1372 = vunpack.c.l.b16 %v565
      %v1373 = vunpack.c.l.b16 %v566
      %v1374 = vunpack.c.l.b16 %v567
      %v1375 = vunpack.c.l.b16 %v568
      %v1376 = vunpack.c.l.b16 %v569
      %v1377 = vunpack.c.l.b16 %v570
      %v1378 = vunpack.c.l.b16 %v571
      %v1379 = vunpack.c.l.b16 %v572
      %v1380 = vunpack.c.l.b16 %v573
      %v1381 = vunpack.c.l.b16 %v574
      %v1382 = vunpack.c.l.b16 %v575
      %v1383 = vunpack.c.l.b16 %v576
      %v1384 = vunpack.c.l.b16 %v577
      %v1385 = vunpack.c.l.b16 %v578
      %v1386 = vunpack.c.l.b16 %v579
      %v1387 = vunpack.c.l.b16 %v580
      %v1388 = vunpack.c.l.b16 %v581
      %v1389 = vunpack.c.l.b16 %v582
      %v1390 = vunpack.c.l.b16 %v583
      %v1391 = vunpack.c.l.b16 %v584
      %v1392 = vunpack.c.l.b16 %v585
      %v1393 = vunpack.c.l.b16 %v586
      %v1394 = vunpack.c.l.b16 %v587
      %v1395 = vunpack.c.l.b16 %v588
      %v1396 = vunpack.c.l.b16 %v589
      %v1397 = vunpack.c.l.b16 %v590
      %v1398 = vunpack.c.l.b16 %v591
      %v1399 = vunpack.c.l.b16 %v592
      %v1400 = vunpack.c.l.b16 %v593
      %v1401 = vunpack.c.l.b16 %v594
      %v1402 = vunpack.c.l.b16 %v595
      %v1403 = vunpack.c.l.b16 %v596
      %v1404 = vunpack.c.l.b16 %v597
      %v1405 = vunpack.c.l.b16 %v598
      %v1406 = vunpack.c.l.b16 %v599
      %v1407 = vunpack.c.l.b16 %v600
      %v1408 = vunpack.c.l.b16 %v601
      %v1409 = vunpack.c.l.b16 %v602
      %v1410 = vunpack.c.l.b16 %v603
      %v1411 = vunpack.c.l.b16 %v604
      %v1412 = vunpack.c.l.b16 %v605
      %v1413 = vunpack.c.l.b16 %v606
      %v1414 = vunpack.c.l.b16 %v607
      %v1415 = vunpack.c.l.b16 %v608
      %v1416 = vunpack.c.l.b16 %v609
      %v1417 = vunpack.c.l.b16 %v610
      %v1418 = vunpack.c.l.b16 %v611
      %v1419 = vunpack.c.l.b16 %v612
      %v1420 = vunpack.c.l.b16 %v613
      %v1421 = vunpack.c.l.b16 %v614
      %v1422 = vunpack.c.l.b16 %v615
      %v1423 = vunpack.c.l.b16 %v616
      %v1424 = vunpack.c.l.b16 %v617
      %v1425 = vunpack.c.l.b16 %v618
      %v1426 = vunpack.c.l.b16 %v619
      %v1427 = vunpack.c.l.b16 %v620
      %v1428 = vunpack.c.l.b16 %v621
      %v1429 = vunpack.c.l.b16 %v622
      %v1430 = vpack.c.b16 %v1319, %v1318
      %v1431 = vpack.c.b16 %v1321, %v1320
      %v1432 = vpack.c.b16 %v1323, %v1322
      %v1433 = vpack.c.b16 %v1325, %v1324
      %v1434 = vpack.c.b16 %v1327, %v1326
      %v1435 = vpack.c.b16 %v1329, %v1328
      %v1436 = vpack.c.b16 %v1331, %v1330
      %v1437 = vpack.c.b16 %v1333, %v1332
      %v1438 = vpack.c.b16 %v1335, %v1334
      %v1439 = vpack.c.b16 %v1337, %v1336
      %v1440 = vpack.c.b16 %v1339, %v1338
      %v1441 = vpack.c.b16 %v1341, %v1340
      %v1442 = vpack.c.b16 %v1343, %v1342
      %v1443 = vpack.c.b16 %v1345, %v1344
      %v1444 = vpack.c.b16 %v1347, %v1346
      %v1445 = vpack.c.b16 %v1349, %v1348
      %v1446 = vpack.c.b16 %v1351, %v1350
      %v1447 = vpack.c.b16 %v1353, %v1352
      %v1448 = vpack.c.b16 %v1355, %v1354
      %v1449 = vpack.c.b16 %v1357, %v1356
      %v1450 = vpack.c.b16 %v1359, %v1358
      %v1451 = vpack.c.b16 %v1361, %v1360
      %v1452 = vpack.c.b16 %v1363, %v1362
      %v1453 = vpack.c.b16 %v1365, %v1364
      %v1454 = vpack.c.b16 %v1367, %v1366
      %v1455 = vpack.c.b16 %v1369, %v1368
      %v1456 = vpack.c.b16 %v1371, %v1370
      %v1457 = vpack.c.b16 %v1373, %v1372
      %v1458 = vpack.c.b16 %v1375, %v1374
      %v1459 = vpack.c.b16 %v1377, %v1376
      %v1460 = vpack.c.b16 %v1379, %v1378
      %v1461 = vpack.c.b16 %v1381, %v1380
      %v1462 = vpack.c.b16 %v1383, %v1382
      %v1463 = vpack.c.b16 %v1385, %v1384
      %v1464 = vpack.c.b16 %v1387, %v1386
      %v1465 = vpack.c.b16 %v1389, %v1388
      %v1466 = vpack.c.b16 %v1391, %v1390
      %v1467 = vpack.c.b16 %v1393, %v1392
      %v1468 = vpack.c.b16 %v1395, %v1394
      %v1469 = vpack.c.b16 %v1397, %v1396
      %v1470 = vpack.c.b16 %v1399, %v1398
      %v1471 = vpack.c.b16 %v1401, %v1400
      %v1472 = vpack.c.b16 %v1403, %v1402
      %v1473 = vpack.c.b16 %v1405, %v1404
      %v1474 = vpack.c.b16 %v1407, %v1406
      %v1475 = vpack.c.b16 %v1409, %v1408
      %v1476 = vpack.c.b16 %v1411, %v1410
      %v1477 = vpack.c.b16 %v1413, %v1412
      %v1478 = vpack.c.b16 %v1415, %v1414
      %v1479 = vpack.c.b16 %v1417, %v1416
      %v1480 = vpack.c.b16 %v1419, %v1418
      %v1481 = vpack.c.b16 %v1421, %v1420
      %v1482 = vpack.c.b16 %v1423, %v1422
      %v1483 = vpack.c.b16 %v1425, %v1424
      %v1484 = vpack.c.b16 %v1427, %v1426
      %v1485 = vpack.c.b16 %v1429, %v1428
      %1542 = vmatprep.subr.bf16.mxu0 0
      %1543 = vmatpush1.bf16.msra.mxu0 %v1437
      %1544 = vmatprep.subr.bf16.mxu0 0
      %1545 = vmatpush1.bf16.msra.mxu0 %v1436
      %1546 = vmatprep.subr.bf16.mxu0 0
      %1547 = vmatpush1.bf16.msra.mxu0 %v1435
      %1548 = vmatprep.subr.bf16.mxu0 0
      %1549 = vmatpush1.bf16.msra.mxu0 %v1434
      %1550 = vmatprep.subr.bf16.mxu0 0
      %1551 = vmatpush1.bf16.msra.mxu0 %v1433
      %1552 = vmatprep.subr.bf16.mxu0 0
      %1553 = vmatpush1.bf16.msra.mxu0 %v1432
      %1554 = vmatprep.subr.bf16.mxu0 0
      %1555 = vmatpush1.bf16.msra.mxu0 %v1431
      %1556 = vmatprep.subr.bf16.mxu0 0
      %1557 = vmatpush1.bf16.msra.mxu0 %v1430
      %1558 = vmatprep.subr.bf16.mxu0 0
      %1559 = vmatpush2.bf16.msra.mxu0 %v1445
      %1560 = vmatprep.subr.bf16.mxu0 0
      %1561 = vmatpush2.bf16.msra.mxu0 %v1444
      %1562 = vmatprep.subr.bf16.mxu0 0
      %1563 = vmatpush2.bf16.msra.mxu0 %v1443
      %1564 = vmatprep.subr.bf16.mxu0 0
      %1565 = vmatpush2.bf16.msra.mxu0 %v1442
      %1566 = vmatprep.subr.bf16.mxu0 0
      %1567 = vmatpush2.bf16.msra.mxu0 %v1441
      %1568 = vmatprep.subr.bf16.mxu0 0
      %1569 = vmatpush2.bf16.msra.mxu0 %v1440
      %1570 = vmatprep.subr.bf16.mxu0 0
      %1571 = vmatpush2.bf16.msra.mxu0 %v1439
      %1572 = vmatprep.subr.bf16.mxu0 0
      %1573 = vmatpush2.bf16.msra.mxu0 %v1438
      %1574 = vmatprep.mubr.bf16.mxu0 %v983
      %1575 = vmatmul.mubr.bf16.gmra.mxu0 %v982
      %v1576 = vpop.f32.mrf.mxu0
      %v1577 = vadd.f32 %v628, %v1576
      %v1578 = vpop.f32.mrf.mxu0
      %v1579 = vpop.f32.mrf.mxu0
      %v1580 = vadd.f32 %v628, %v1579
      %v1581 = vpop.f32.mrf.mxu0
      %1582 = vmatprep.mubr.bf16.mxu0 %v990
      %1583 = vmatmul.mubr.bf16.gmra.mxu0 %v989
      %v1584 = vpop.f32.mrf.mxu0
      %v1585 = vadd.f32 %v628, %v1584
      %v1586 = vpop.f32.mrf.mxu0
      %v1587 = vpop.f32.mrf.mxu0
      %v1588 = vadd.f32 %v628, %v1587
      %v1589 = vpop.f32.mrf.mxu0
      %1590 = vmatprep.mubr.bf16.mxu0 %v997
      %1591 = vmatmul.mubr.bf16.gmra.mxu0 %v996
      %v1592 = vpop.f32.mrf.mxu0
      %v1593 = vadd.f32 %v628, %v1592
      %v1594 = vpop.f32.mrf.mxu0
      %v1595 = vpop.f32.mrf.mxu0
      %v1596 = vadd.f32 %v628, %v1595
      %v1597 = vpop.f32.mrf.mxu0
      %1598 = vmatprep.mubr.bf16.mxu0 %v1004
      %1599 = vmatmul.mubr.bf16.gmra.mxu0 %v1003
      %v1600 = vpop.f32.mrf.mxu0
      %v1601 = vadd.f32 %v628, %v1600
      %v1602 = vpop.f32.mrf.mxu0
      %v1603 = vpop.f32.mrf.mxu0
      %v1604 = vadd.f32 %v628, %v1603
      %v1605 = vpop.f32.mrf.mxu0
      %1606 = vmatprep.mubr.bf16.mxu0 %v1011
      %1607 = vmatmul.mubr.bf16.gmra.mxu0 %v1010
      %v1608 = vpop.f32.mrf.mxu0
      %v1609 = vadd.f32 %v628, %v1608
      %v1610 = vpop.f32.mrf.mxu0
      %v1611 = vpop.f32.mrf.mxu0
      %v1612 = vadd.f32 %v628, %v1611
      %v1613 = vpop.f32.mrf.mxu0
      %1614 = vmatprep.mubr.bf16.mxu0 %v1018
      %1615 = vmatmul.mubr.bf16.gmra.mxu0 %v1017
      %v1616 = vpop.f32.mrf.mxu0
      %v1617 = vadd.f32 %v628, %v1616
      %v1618 = vpop.f32.mrf.mxu0
      %v1619 = vpop.f32.mrf.mxu0
      %v1620 = vadd.f32 %v628, %v1619
      %v1621 = vpop.f32.mrf.mxu0
      %1622 = vmatprep.mubr.bf16.mxu0 %v1025
      %1623 = vmatmul.mubr.bf16.gmra.mxu0 %v1024
      %v1624 = vpop.f32.mrf.mxu0
      %v1625 = vadd.f32 %v628, %v1624
      %v1626 = vpop.f32.mrf.mxu0
      %v1627 = vpop.f32.mrf.mxu0
      %v1628 = vadd.f32 %v628, %v1627
      %v1629 = vpop.f32.mrf.mxu0
      %1630 = vmatprep.mubr.bf16.mxu0 %v1032
      %1631 = vmatmul.mubr.bf16.gmra.mxu0 %v1031
      %v1632 = vpop.f32.mrf.mxu0
      %v1633 = vadd.f32 %v628, %v1632
      %v1634 = vpop.f32.mrf.mxu0
      %v1635 = vpop.f32.mrf.mxu0
      %v1636 = vadd.f32 %v628, %v1635
      %v1637 = vpop.f32.mrf.mxu0
      %1638 = vmatprep.mubr.bf16.mxu0 %v1039
      %1639 = vmatmul.mubr.bf16.gmra.mxu0 %v1038
      %v1640 = vpop.f32.mrf.mxu0
      %v1641 = vadd.f32 %v628, %v1640
      %v1642 = vpop.f32.mrf.mxu0
      %v1643 = vpop.f32.mrf.mxu0
      %v1644 = vadd.f32 %v628, %v1643
      %v1645 = vpop.f32.mrf.mxu0
      %1646 = vmatprep.mubr.bf16.mxu0 %v1046
      %1647 = vmatmul.mubr.bf16.gmra.mxu0 %v1045
      %v1648 = vpop.f32.mrf.mxu0
      %v1649 = vadd.f32 %v628, %v1648
      %v1650 = vpop.f32.mrf.mxu0
      %v1651 = vpop.f32.mrf.mxu0
      %v1652 = vadd.f32 %v628, %v1651
      %v1653 = vpop.f32.mrf.mxu0
      %1654 = vmatprep.mubr.bf16.mxu0 %v1053
      %1655 = vmatmul.mubr.bf16.gmra.mxu0 %v1052
      %v1656 = vpop.f32.mrf.mxu0
      %v1657 = vadd.f32 %v628, %v1656
      %v1658 = vpop.f32.mrf.mxu0
      %v1659 = vpop.f32.mrf.mxu0
      %v1660 = vadd.f32 %v628, %v1659
      %v1661 = vpop.f32.mrf.mxu0
      %1662 = vmatprep.mubr.bf16.mxu0 %v1060
      %1663 = vmatmul.mubr.bf16.gmra.mxu0 %v1059
      %v1664 = vpop.f32.mrf.mxu0
      %v1665 = vadd.f32 %v628, %v1664
      %v1666 = vpop.f32.mrf.mxu0
      %v1667 = vpop.f32.mrf.mxu0
      %v1668 = vadd.f32 %v628, %v1667
      %v1669 = vpop.f32.mrf.mxu0
      %1670 = vmatprep.mubr.bf16.mxu0 %v1067
      %1671 = vmatmul.mubr.bf16.gmra.mxu0 %v1066
      %v1672 = vpop.f32.mrf.mxu0
      %v1673 = vadd.f32 %v628, %v1672
      %v1674 = vpop.f32.mrf.mxu0
      %v1675 = vpop.f32.mrf.mxu0
      %v1676 = vadd.f32 %v628, %v1675
      %v1677 = vpop.f32.mrf.mxu0
      %1678 = vmatprep.mubr.bf16.mxu0 %v1074
      %1679 = vmatmul.mubr.bf16.gmra.mxu0 %v1073
      %v1680 = vpop.f32.mrf.mxu0
      %v1681 = vadd.f32 %v628, %v1680
      %v1682 = vpop.f32.mrf.mxu0
      %v1683 = vpop.f32.mrf.mxu0
      %v1684 = vadd.f32 %v628, %v1683
      %v1685 = vpop.f32.mrf.mxu0
      %1686 = vmatprep.mubr.bf16.mxu0 %v1081
      %1687 = vmatmul.mubr.bf16.gmra.mxu0 %v1080
      %v1688 = vpop.f32.mrf.mxu0
      %v1689 = vadd.f32 %v628, %v1688
      %v1690 = vpop.f32.mrf.mxu0
      %v1691 = vpop.f32.mrf.mxu0
      %v1692 = vadd.f32 %v628, %v1691
      %v1693 = vpop.f32.mrf.mxu0
      %1694 = vmatprep.mubr.bf16.mxu0 %v1088
      %1695 = vmatmul.mubr.bf16.gmra.mxu0 %v1087
      %v1696 = vpop.f32.mrf.mxu0
      %v1697 = vadd.f32 %v628, %v1696
      %v1698 = vpop.f32.mrf.mxu0
      %v1699 = vpop.f32.mrf.mxu0
      %v1700 = vadd.f32 %v628, %v1699
      %v1701 = vpop.f32.mrf.mxu0
      %1702 = vdwg.mxu0
      %1703 = vmatprep.subr.bf16.mxu0 0
      %1704 = vmatpush1.bf16.msra.mxu0 %v1453
      %1705 = vmatprep.subr.bf16.mxu0 0
      %1706 = vmatpush1.bf16.msra.mxu0 %v1452
      %1707 = vmatprep.subr.bf16.mxu0 0
      %1708 = vmatpush1.bf16.msra.mxu0 %v1451
      %1709 = vmatprep.subr.bf16.mxu0 0
      %1710 = vmatpush1.bf16.msra.mxu0 %v1450
      %1711 = vmatprep.subr.bf16.mxu0 0
      %1712 = vmatpush1.bf16.msra.mxu0 %v1449
      %1713 = vmatprep.subr.bf16.mxu0 0
      %1714 = vmatpush1.bf16.msra.mxu0 %v1448
      %1715 = vmatprep.subr.bf16.mxu0 0
      %1716 = vmatpush1.bf16.msra.mxu0 %v1447
      %1717 = vmatprep.subr.bf16.mxu0 0
      %1718 = vmatpush1.bf16.msra.mxu0 %v1446
      %1719 = vmatprep.subr.bf16.mxu0 0
      %1720 = vmatpush2.bf16.msra.mxu0 %v1461
      %1721 = vmatprep.subr.bf16.mxu0 0
      %1722 = vmatpush2.bf16.msra.mxu0 %v1460
      %1723 = vmatprep.subr.bf16.mxu0 0
      %1724 = vmatpush2.bf16.msra.mxu0 %v1459
      %1725 = vmatprep.subr.bf16.mxu0 0
      %1726 = vmatpush2.bf16.msra.mxu0 %v1458
      %1727 = vmatprep.subr.bf16.mxu0 0
      %1728 = vmatpush2.bf16.msra.mxu0 %v1457
      %1729 = vmatprep.subr.bf16.mxu0 0
      %1730 = vmatpush2.bf16.msra.mxu0 %v1456
      %1731 = vmatprep.subr.bf16.mxu0 0
      %1732 = vmatpush2.bf16.msra.mxu0 %v1455
      %1733 = vmatprep.subr.bf16.mxu0 0
      %1734 = vmatpush2.bf16.msra.mxu0 %v1454
      %1735 = vmatprep.mubr.bf16.mxu0 %v985
      %1736 = vmatmul.mubr.bf16.gmra.mxu0 %v984
      %v1737 = vpop.f32.mrf.mxu0
      %v1738 = vadd.f32 %v1577, %v1737
      %v1739 = vpop.f32.mrf.mxu0
      %v1740 = vpop.f32.mrf.mxu0
      %v1741 = vadd.f32 %v1580, %v1740
      %v1742 = vpop.f32.mrf.mxu0
      %1743 = vmatprep.mubr.bf16.mxu0 %v992
      %1744 = vmatmul.mubr.bf16.gmra.mxu0 %v991
      %v1745 = vpop.f32.mrf.mxu0
      %v1746 = vadd.f32 %v1585, %v1745
      %v1747 = vpop.f32.mrf.mxu0
      %v1748 = vpop.f32.mrf.mxu0
      %v1749 = vadd.f32 %v1588, %v1748
      %v1750 = vpop.f32.mrf.mxu0
      %1751 = vmatprep.mubr.bf16.mxu0 %v999
      %1752 = vmatmul.mubr.bf16.gmra.mxu0 %v998
      %v1753 = vpop.f32.mrf.mxu0
      %v1754 = vadd.f32 %v1593, %v1753
      %v1755 = vpop.f32.mrf.mxu0
      %v1756 = vpop.f32.mrf.mxu0
      %v1757 = vadd.f32 %v1596, %v1756
      %v1758 = vpop.f32.mrf.mxu0
      %1759 = vmatprep.mubr.bf16.mxu0 %v1006
      %1760 = vmatmul.mubr.bf16.gmra.mxu0 %v1005
      %v1761 = vpop.f32.mrf.mxu0
      %v1762 = vadd.f32 %v1601, %v1761
      %v1763 = vpop.f32.mrf.mxu0
      %v1764 = vpop.f32.mrf.mxu0
      %v1765 = vadd.f32 %v1604, %v1764
      %v1766 = vpop.f32.mrf.mxu0
      %1767 = vmatprep.mubr.bf16.mxu0 %v1013
      %1768 = vmatmul.mubr.bf16.gmra.mxu0 %v1012
      %v1769 = vpop.f32.mrf.mxu0
      %v1770 = vadd.f32 %v1609, %v1769
      %v1771 = vpop.f32.mrf.mxu0
      %v1772 = vpop.f32.mrf.mxu0
      %v1773 = vadd.f32 %v1612, %v1772
      %v1774 = vpop.f32.mrf.mxu0
      %1775 = vmatprep.mubr.bf16.mxu0 %v1020
      %1776 = vmatmul.mubr.bf16.gmra.mxu0 %v1019
      %v1777 = vpop.f32.mrf.mxu0
      %v1778 = vadd.f32 %v1617, %v1777
      %v1779 = vpop.f32.mrf.mxu0
      %v1780 = vpop.f32.mrf.mxu0
      %v1781 = vadd.f32 %v1620, %v1780
      %v1782 = vpop.f32.mrf.mxu0
      %1783 = vmatprep.mubr.bf16.mxu0 %v1027
      %1784 = vmatmul.mubr.bf16.gmra.mxu0 %v1026
      %v1785 = vpop.f32.mrf.mxu0
      %v1786 = vadd.f32 %v1625, %v1785
      %v1787 = vpop.f32.mrf.mxu0
      %v1788 = vpop.f32.mrf.mxu0
      %v1789 = vadd.f32 %v1628, %v1788
      %v1790 = vpop.f32.mrf.mxu0
      %1791 = vmatprep.mubr.bf16.mxu0 %v1034
      %1792 = vmatmul.mubr.bf16.gmra.mxu0 %v1033
      %v1793 = vpop.f32.mrf.mxu0
      %v1794 = vadd.f32 %v1633, %v1793
      %v1795 = vpop.f32.mrf.mxu0
      %v1796 = vpop.f32.mrf.mxu0
      %v1797 = vadd.f32 %v1636, %v1796
      %v1798 = vpop.f32.mrf.mxu0
      %1799 = vmatprep.mubr.bf16.mxu0 %v1041
      %1800 = vmatmul.mubr.bf16.gmra.mxu0 %v1040
      %v1801 = vpop.f32.mrf.mxu0
      %v1802 = vadd.f32 %v1641, %v1801
      %v1803 = vpop.f32.mrf.mxu0
      %v1804 = vpop.f32.mrf.mxu0
      %v1805 = vadd.f32 %v1644, %v1804
      %v1806 = vpop.f32.mrf.mxu0
      %1807 = vmatprep.mubr.bf16.mxu0 %v1048
      %1808 = vmatmul.mubr.bf16.gmra.mxu0 %v1047
      %v1809 = vpop.f32.mrf.mxu0
      %v1810 = vadd.f32 %v1649, %v1809
      %v1811 = vpop.f32.mrf.mxu0
      %v1812 = vpop.f32.mrf.mxu0
      %v1813 = vadd.f32 %v1652, %v1812
      %v1814 = vpop.f32.mrf.mxu0
      %1815 = vmatprep.mubr.bf16.mxu0 %v1055
      %1816 = vmatmul.mubr.bf16.gmra.mxu0 %v1054
      %v1817 = vpop.f32.mrf.mxu0
      %v1818 = vadd.f32 %v1657, %v1817
      %v1819 = vpop.f32.mrf.mxu0
      %v1820 = vpop.f32.mrf.mxu0
      %v1821 = vadd.f32 %v1660, %v1820
      %v1822 = vpop.f32.mrf.mxu0
      %1823 = vmatprep.mubr.bf16.mxu0 %v1062
      %1824 = vmatmul.mubr.bf16.gmra.mxu0 %v1061
      %v1825 = vpop.f32.mrf.mxu0
      %v1826 = vadd.f32 %v1665, %v1825
      %v1827 = vpop.f32.mrf.mxu0
      %v1828 = vpop.f32.mrf.mxu0
      %v1829 = vadd.f32 %v1668, %v1828
      %v1830 = vpop.f32.mrf.mxu0
      %1831 = vmatprep.mubr.bf16.mxu0 %v1069
      %1832 = vmatmul.mubr.bf16.gmra.mxu0 %v1068
      %v1833 = vpop.f32.mrf.mxu0
      %v1834 = vadd.f32 %v1673, %v1833
      %v1835 = vpop.f32.mrf.mxu0
      %v1836 = vpop.f32.mrf.mxu0
      %v1837 = vadd.f32 %v1676, %v1836
      %v1838 = vpop.f32.mrf.mxu0
      %1839 = vmatprep.mubr.bf16.mxu0 %v1076
      %1840 = vmatmul.mubr.bf16.gmra.mxu0 %v1075
      %v1841 = vpop.f32.mrf.mxu0
      %v1842 = vadd.f32 %v1681, %v1841
      %v1843 = vpop.f32.mrf.mxu0
      %v1844 = vpop.f32.mrf.mxu0
      %v1845 = vadd.f32 %v1684, %v1844
      %v1846 = vpop.f32.mrf.mxu0
      %1847 = vmatprep.mubr.bf16.mxu0 %v1083
      %1848 = vmatmul.mubr.bf16.gmra.mxu0 %v1082
      %v1849 = vpop.f32.mrf.mxu0
      %v1850 = vadd.f32 %v1689, %v1849
      %v1851 = vpop.f32.mrf.mxu0
      %v1852 = vpop.f32.mrf.mxu0
      %v1853 = vadd.f32 %v1692, %v1852
      %v1854 = vpop.f32.mrf.mxu0
      %1855 = vmatprep.mubr.bf16.mxu0 %v1090
      %1856 = vmatmul.mubr.bf16.gmra.mxu0 %v1089
      %v1857 = vpop.f32.mrf.mxu0
      %v1858 = vadd.f32 %v1697, %v1857
      %v1859 = vpop.f32.mrf.mxu0
      %v1860 = vpop.f32.mrf.mxu0
      %v1861 = vadd.f32 %v1700, %v1860
      %v1862 = vpop.f32.mrf.mxu0
      %1863 = vdwg.mxu0
      %1864 = vmatprep.subr.bf16.mxu0 0
      %1865 = vmatpush1.bf16.msra.mxu0 %v1469
      %1866 = vmatprep.subr.bf16.mxu0 0
      %1867 = vmatpush1.bf16.msra.mxu0 %v1468
      %1868 = vmatprep.subr.bf16.mxu0 0
      %1869 = vmatpush1.bf16.msra.mxu0 %v1467
      %1870 = vmatprep.subr.bf16.mxu0 0
      %1871 = vmatpush1.bf16.msra.mxu0 %v1466
      %1872 = vmatprep.subr.bf16.mxu0 0
      %1873 = vmatpush1.bf16.msra.mxu0 %v1465
      %1874 = vmatprep.subr.bf16.mxu0 0
      %1875 = vmatpush1.bf16.msra.mxu0 %v1464
      %1876 = vmatprep.subr.bf16.mxu0 0
      %1877 = vmatpush1.bf16.msra.mxu0 %v1463
      %1878 = vmatprep.subr.bf16.mxu0 0
      %1879 = vmatpush1.bf16.msra.mxu0 %v1462
      %1880 = vmatprep.subr.bf16.mxu0 0
      %1881 = vmatpush2.bf16.msra.mxu0 %v1477
      %1882 = vmatprep.subr.bf16.mxu0 0
      %1883 = vmatpush2.bf16.msra.mxu0 %v1476
      %1884 = vmatprep.subr.bf16.mxu0 0
      %1885 = vmatpush2.bf16.msra.mxu0 %v1475
      %1886 = vmatprep.subr.bf16.mxu0 0
      %1887 = vmatpush2.bf16.msra.mxu0 %v1474
      %1888 = vmatprep.subr.bf16.mxu0 0
      %1889 = vmatpush2.bf16.msra.mxu0 %v1473
      %1890 = vmatprep.subr.bf16.mxu0 0
      %1891 = vmatpush2.bf16.msra.mxu0 %v1472
      %1892 = vmatprep.subr.bf16.mxu0 0
      %1893 = vmatpush2.bf16.msra.mxu0 %v1471
      %1894 = vmatprep.subr.bf16.mxu0 0
      %1895 = vmatpush2.bf16.msra.mxu0 %v1470
      %1896 = vmatprep.mubr.bf16.mxu0 %v987
      %1897 = vmatmul.mubr.bf16.gmra.mxu0 %v986
      %v1898 = vpop.f32.mrf.mxu0
      %v1899 = vadd.f32 %v1738, %v1898
      %v1900 = vpop.f32.mrf.mxu0
      %v1901 = vpop.f32.mrf.mxu0
      %v1902 = vadd.f32 %v1741, %v1901
      %v1903 = vpop.f32.mrf.mxu0
      %1904 = vmatprep.mubr.bf16.mxu0 %v994
      %1905 = vmatmul.mubr.bf16.gmra.mxu0 %v993
      %v1906 = vpop.f32.mrf.mxu0
      %v1907 = vadd.f32 %v1746, %v1906
      %v1908 = vpop.f32.mrf.mxu0
      %v1909 = vpop.f32.mrf.mxu0
      %v1910 = vadd.f32 %v1749, %v1909
      %v1911 = vpop.f32.mrf.mxu0
      %1912 = vmatprep.mubr.bf16.mxu0 %v1001
      %1913 = vmatmul.mubr.bf16.gmra.mxu0 %v1000
      %v1914 = vpop.f32.mrf.mxu0
      %v1915 = vadd.f32 %v1754, %v1914
      %v1916 = vpop.f32.mrf.mxu0
      %v1917 = vpop.f32.mrf.mxu0
      %v1918 = vadd.f32 %v1757, %v1917
      %v1919 = vpop.f32.mrf.mxu0
      %1920 = vmatprep.mubr.bf16.mxu0 %v1008
      %1921 = vmatmul.mubr.bf16.gmra.mxu0 %v1007
      %v1922 = vpop.f32.mrf.mxu0
      %v1923 = vadd.f32 %v1762, %v1922
      %v1924 = vpop.f32.mrf.mxu0
      %v1925 = vpop.f32.mrf.mxu0
      %v1926 = vadd.f32 %v1765, %v1925
      %v1927 = vpop.f32.mrf.mxu0
      %1928 = vmatprep.mubr.bf16.mxu0 %v1015
      %1929 = vmatmul.mubr.bf16.gmra.mxu0 %v1014
      %v1930 = vpop.f32.mrf.mxu0
      %v1931 = vadd.f32 %v1770, %v1930
      %v1932 = vpop.f32.mrf.mxu0
      %v1933 = vpop.f32.mrf.mxu0
      %v1934 = vadd.f32 %v1773, %v1933
      %v1935 = vpop.f32.mrf.mxu0
      %1936 = vmatprep.mubr.bf16.mxu0 %v1022
      %1937 = vmatmul.mubr.bf16.gmra.mxu0 %v1021
      %v1938 = vpop.f32.mrf.mxu0
      %v1939 = vadd.f32 %v1778, %v1938
      %v1940 = vpop.f32.mrf.mxu0
      %v1941 = vpop.f32.mrf.mxu0
      %v1942 = vadd.f32 %v1781, %v1941
      %v1943 = vpop.f32.mrf.mxu0
      %1944 = vmatprep.mubr.bf16.mxu0 %v1029
      %1945 = vmatmul.mubr.bf16.gmra.mxu0 %v1028
      %v1946 = vpop.f32.mrf.mxu0
      %v1947 = vadd.f32 %v1786, %v1946
      %v1948 = vpop.f32.mrf.mxu0
      %v1949 = vpop.f32.mrf.mxu0
      %v1950 = vadd.f32 %v1789, %v1949
      %v1951 = vpop.f32.mrf.mxu0
      %1952 = vmatprep.mubr.bf16.mxu0 %v1036
      %1953 = vmatmul.mubr.bf16.gmra.mxu0 %v1035
      %v1954 = vpop.f32.mrf.mxu0
      %v1955 = vadd.f32 %v1794, %v1954
      %v1956 = vpop.f32.mrf.mxu0
      %v1957 = vpop.f32.mrf.mxu0
      %v1958 = vadd.f32 %v1797, %v1957
      %v1959 = vpop.f32.mrf.mxu0
      %1960 = vmatprep.mubr.bf16.mxu0 %v1043
      %1961 = vmatmul.mubr.bf16.gmra.mxu0 %v1042
      %v1962 = vpop.f32.mrf.mxu0
      %v1963 = vadd.f32 %v1802, %v1962
      %v1964 = vpop.f32.mrf.mxu0
      %v1965 = vpop.f32.mrf.mxu0
      %v1966 = vadd.f32 %v1805, %v1965
      %v1967 = vpop.f32.mrf.mxu0
      %1968 = vmatprep.mubr.bf16.mxu0 %v1050
      %1969 = vmatmul.mubr.bf16.gmra.mxu0 %v1049
      %v1970 = vpop.f32.mrf.mxu0
      %v1971 = vadd.f32 %v1810, %v1970
      %v1972 = vpop.f32.mrf.mxu0
      %v1973 = vpop.f32.mrf.mxu0
      %v1974 = vadd.f32 %v1813, %v1973
      %v1975 = vpop.f32.mrf.mxu0
      %1976 = vmatprep.mubr.bf16.mxu0 %v1057
      %1977 = vmatmul.mubr.bf16.gmra.mxu0 %v1056
      %v1978 = vpop.f32.mrf.mxu0
      %v1979 = vadd.f32 %v1818, %v1978
      %v1980 = vpop.f32.mrf.mxu0
      %v1981 = vpop.f32.mrf.mxu0
      %v1982 = vadd.f32 %v1821, %v1981
      %v1983 = vpop.f32.mrf.mxu0
      %1984 = vmatprep.mubr.bf16.mxu0 %v1064
      %1985 = vmatmul.mubr.bf16.gmra.mxu0 %v1063
      %v1986 = vpop.f32.mrf.mxu0
      %v1987 = vadd.f32 %v1826, %v1986
      %v1988 = vpop.f32.mrf.mxu0
      %v1989 = vpop.f32.mrf.mxu0
      %v1990 = vadd.f32 %v1829, %v1989
      %v1991 = vpop.f32.mrf.mxu0
      %1992 = vmatprep.mubr.bf16.mxu0 %v1071
      %1993 = vmatmul.mubr.bf16.gmra.mxu0 %v1070
      %v1994 = vpop.f32.mrf.mxu0
      %v1995 = vadd.f32 %v1834, %v1994
      %v1996 = vpop.f32.mrf.mxu0
      %v1997 = vpop.f32.mrf.mxu0
      %v1998 = vadd.f32 %v1837, %v1997
      %v1999 = vpop.f32.mrf.mxu0
      %2000 = vmatprep.mubr.bf16.mxu0 %v1078
      %2001 = vmatmul.mubr.bf16.gmra.mxu0 %v1077
      %v2002 = vpop.f32.mrf.mxu0
      %v2003 = vadd.f32 %v1842, %v2002
      %v2004 = vpop.f32.mrf.mxu0
      %v2005 = vpop.f32.mrf.mxu0
      %v2006 = vadd.f32 %v1845, %v2005
      %v2007 = vpop.f32.mrf.mxu0
      %2008 = vmatprep.mubr.bf16.mxu0 %v1085
      %2009 = vmatmul.mubr.bf16.gmra.mxu0 %v1084
      %v2010 = vpop.f32.mrf.mxu0
      %v2011 = vadd.f32 %v1850, %v2010
      %v2012 = vpop.f32.mrf.mxu0
      %v2013 = vpop.f32.mrf.mxu0
      %v2014 = vadd.f32 %v1853, %v2013
      %v2015 = vpop.f32.mrf.mxu0
      %2016 = vmatprep.mubr.bf16.mxu0 %v1092
      %2017 = vmatmul.mubr.bf16.gmra.mxu0 %v1091
      %v2018 = vpop.f32.mrf.mxu0
      %v2019 = vadd.f32 %v1858, %v2018
      %v2020 = vpop.f32.mrf.mxu0
      %v2021 = vpop.f32.mrf.mxu0
      %v2022 = vadd.f32 %v1861, %v2021
      %v2023 = vpop.f32.mrf.mxu0
      %2024 = vdwg.mxu0
      %2025 = vmatprep.subr.bf16.mxu0 0
      %2026 = vmatpush1.bf16.msra.mxu0 %v1485
      %2027 = vmatprep.subr.bf16.mxu0 0
      %2028 = vmatpush1.bf16.msra.mxu0 %v1484
      %2029 = vmatprep.subr.bf16.mxu0 0
      %2030 = vmatpush1.bf16.msra.mxu0 %v1483
      %2031 = vmatprep.subr.bf16.mxu0 0
      %2032 = vmatpush1.bf16.msra.mxu0 %v1482
      %2033 = vmatprep.subr.bf16.mxu0 0
      %2034 = vmatpush1.bf16.msra.mxu0 %v1481
      %2035 = vmatprep.subr.bf16.mxu0 0
      %2036 = vmatpush1.bf16.msra.mxu0 %v1480
      %2037 = vmatprep.subr.bf16.mxu0 0
      %2038 = vmatpush1.bf16.msra.mxu0 %v1479
      %2039 = vmatprep.subr.bf16.mxu0 0
      %2040 = vmatpush1.bf16.msra.mxu0 %v1478
      %2041 = vmatprep.subr.bf16.mxu0 0
      %2042 = vmatpush2.bf16.msra.mxu0 0
      %2043 = vmatprep.subr.bf16.mxu0 0
      %2044 = vmatpush2.bf16.msra.mxu0 0
      %2045 = vmatprep.subr.bf16.mxu0 0
      %2046 = vmatpush2.bf16.msra.mxu0 0
      %2047 = vmatprep.subr.bf16.mxu0 0
      %2048 = vmatpush2.bf16.msra.mxu0 0
      %2049 = vmatprep.subr.bf16.mxu0 0
      %2050 = vmatpush2.bf16.msra.mxu0 0
      %2051 = vmatprep.subr.bf16.mxu0 0
      %2052 = vmatpush2.bf16.msra.mxu0 0
      %2053 = vmatprep.subr.bf16.mxu0 0
      %2054 = vmatpush2.bf16.msra.mxu0 0
      %2055 = vmatprep.subr.bf16.mxu0 0
      %2056 = vmatpush2.bf16.msra.mxu0 0
      %2057 = vmatprep.mubr.bf16.mxu0 0
      %2058 = vmatmul.mubr.bf16.gmra.mxu0 %v988
      %v2059 = vpop.f32.mrf.mxu0
      %v2060 = vadd.f32 %v1899, %v2059
      %v2061 = vpop.f32.mrf.mxu0
      %v2062 = vpop.f32.mrf.mxu0
      %v2063 = vadd.f32 %v1902, %v2062
      %v2064 = vpop.f32.mrf.mxu0
      %2065 = vmatprep.mubr.bf16.mxu0 0
      %2066 = vmatmul.mubr.bf16.gmra.mxu0 %v995
      %v2067 = vpop.f32.mrf.mxu0
      %v2068 = vadd.f32 %v1907, %v2067
      %v2069 = vpop.f32.mrf.mxu0
      %v2070 = vpop.f32.mrf.mxu0
      %v2071 = vadd.f32 %v1910, %v2070
      %v2072 = vpop.f32.mrf.mxu0
      %2073 = vmatprep.mubr.bf16.mxu0 0
      %2074 = vmatmul.mubr.bf16.gmra.mxu0 %v1002
      %v2075 = vpop.f32.mrf.mxu0
      %v2076 = vadd.f32 %v1915, %v2075
      %v2077 = vpop.f32.mrf.mxu0
      %v2078 = vpop.f32.mrf.mxu0
      %v2079 = vadd.f32 %v1918, %v2078
      %v2080 = vpop.f32.mrf.mxu0
      %2081 = vmatprep.mubr.bf16.mxu0 0
      %2082 = vmatmul.mubr.bf16.gmra.mxu0 %v1009
      %v2083 = vpop.f32.mrf.mxu0
      %v2084 = vadd.f32 %v1923, %v2083
      %v2085 = vpop.f32.mrf.mxu0
      %v2086 = vpop.f32.mrf.mxu0
      %v2087 = vadd.f32 %v1926, %v2086
      %v2088 = vpop.f32.mrf.mxu0
      %2089 = vmatprep.mubr.bf16.mxu0 0
      %2090 = vmatmul.mubr.bf16.gmra.mxu0 %v1016
      %v2091 = vpop.f32.mrf.mxu0
      %v2092 = vadd.f32 %v1931, %v2091
      %v2093 = vpop.f32.mrf.mxu0
      %v2094 = vpop.f32.mrf.mxu0
      %v2095 = vadd.f32 %v1934, %v2094
      %v2096 = vpop.f32.mrf.mxu0
      %2097 = vmatprep.mubr.bf16.mxu0 0
      %2098 = vmatmul.mubr.bf16.gmra.mxu0 %v1023
      %v2099 = vpop.f32.mrf.mxu0
      %v2100 = vadd.f32 %v1939, %v2099
      %v2101 = vpop.f32.mrf.mxu0
      %v2102 = vpop.f32.mrf.mxu0
      %v2103 = vadd.f32 %v1942, %v2102
      %v2104 = vpop.f32.mrf.mxu0
      %2105 = vmatprep.mubr.bf16.mxu0 0
      %2106 = vmatmul.mubr.bf16.gmra.mxu0 %v1030
      %v2107 = vpop.f32.mrf.mxu0
      %v2108 = vadd.f32 %v1947, %v2107
      %v2109 = vpop.f32.mrf.mxu0
      %v2110 = vpop.f32.mrf.mxu0
      %v2111 = vadd.f32 %v1950, %v2110
      %v2112 = vpop.f32.mrf.mxu0
      %2113 = vmatprep.mubr.bf16.mxu0 0
      %2114 = vmatmul.mubr.bf16.gmra.mxu0 %v1037
      %v2115 = vpop.f32.mrf.mxu0
      %v2116 = vadd.f32 %v1955, %v2115
      %v2117 = vpop.f32.mrf.mxu0
      %v2118 = vpop.f32.mrf.mxu0
      %v2119 = vadd.f32 %v1958, %v2118
      %v2120 = vpop.f32.mrf.mxu0
      %2121 = vmatprep.mubr.bf16.mxu0 0
      %2122 = vmatmul.mubr.bf16.gmra.mxu0 %v1044
      %v2123 = vpop.f32.mrf.mxu0
      %v2124 = vadd.f32 %v1963, %v2123
      %v2125 = vpop.f32.mrf.mxu0
      %v2126 = vpop.f32.mrf.mxu0
      %v2127 = vadd.f32 %v1966, %v2126
      %v2128 = vpop.f32.mrf.mxu0
      %2129 = vmatprep.mubr.bf16.mxu0 0
      %2130 = vmatmul.mubr.bf16.gmra.mxu0 %v1051
      %v2131 = vpop.f32.mrf.mxu0
      %v2132 = vadd.f32 %v1971, %v2131
      %v2133 = vpop.f32.mrf.mxu0
      %v2134 = vpop.f32.mrf.mxu0
      %v2135 = vadd.f32 %v1974, %v2134
      %v2136 = vpop.f32.mrf.mxu0
      %2137 = vmatprep.mubr.bf16.mxu0 0
      %2138 = vmatmul.mubr.bf16.gmra.mxu0 %v1058
      %v2139 = vpop.f32.mrf.mxu0
      %v2140 = vadd.f32 %v1979, %v2139
      %v2141 = vpop.f32.mrf.mxu0
      %v2142 = vpop.f32.mrf.mxu0
      %v2143 = vadd.f32 %v1982, %v2142
      %v2144 = vpop.f32.mrf.mxu0
      %2145 = vmatprep.mubr.bf16.mxu0 0
      %2146 = vmatmul.mubr.bf16.gmra.mxu0 %v1065
      %v2147 = vpop.f32.mrf.mxu0
      %v2148 = vadd.f32 %v1987, %v2147
      %v2149 = vpop.f32.mrf.mxu0
      %v2150 = vpop.f32.mrf.mxu0
      %v2151 = vadd.f32 %v1990, %v2150
      %v2152 = vpop.f32.mrf.mxu0
      %2153 = vmatprep.mubr.bf16.mxu0 0
      %2154 = vmatmul.mubr.bf16.gmra.mxu0 %v1072
      %v2155 = vpop.f32.mrf.mxu0
      %v2156 = vadd.f32 %v1995, %v2155
      %v2157 = vpop.f32.mrf.mxu0
      %v2158 = vpop.f32.mrf.mxu0
      %v2159 = vadd.f32 %v1998, %v2158
      %v2160 = vpop.f32.mrf.mxu0
      %2161 = vmatprep.mubr.bf16.mxu0 0
      %2162 = vmatmul.mubr.bf16.gmra.mxu0 %v1079
      %v2163 = vpop.f32.mrf.mxu0
      %v2164 = vadd.f32 %v2003, %v2163
      %v2165 = vpop.f32.mrf.mxu0
      %v2166 = vpop.f32.mrf.mxu0
      %v2167 = vadd.f32 %v2006, %v2166
      %v2168 = vpop.f32.mrf.mxu0
      %2169 = vmatprep.mubr.bf16.mxu0 0
      %2170 = vmatmul.mubr.bf16.gmra.mxu0 %v1086
      %v2171 = vpop.f32.mrf.mxu0
      %v2172 = vadd.f32 %v2011, %v2171
      %v2173 = vpop.f32.mrf.mxu0
      %v2174 = vpop.f32.mrf.mxu0
      %v2175 = vadd.f32 %v2014, %v2174
      %v2176 = vpop.f32.mrf.mxu0
      %2177 = vmatprep.mubr.bf16.mxu0 0
      %2178 = vmatmul.mubr.bf16.gmra.mxu0 %v1093
      %v2179 = vpop.f32.mrf.mxu0
      %v2180 = vadd.f32 %v2019, %v2179
      %v2181 = vpop.f32.mrf.mxu0
      %v2182 = vpop.f32.mrf.mxu0
      %v2183 = vadd.f32 %v2022, %v2182
      %v2184 = vpop.f32.mrf.mxu0
      %2185 = vdwg.mxu0
      %v2186 = vmax.f32 %v2060, 0.0
      %v2187 = vmax.f32 %v2063, 0.0
      %v2188 = vmax.f32 %v2068, 0.0
      %v2189 = vmax.f32 %v2071, 0.0
      %v2190 = vmax.f32 %v2076, 0.0
      %v2191 = vmax.f32 %v2079, 0.0
      %v2192 = vmax.f32 %v2084, 0.0
      %v2193 = vmax.f32 %v2087, 0.0
      %v2194 = vmax.f32 %v2092, 0.0
      %v2195 = vmax.f32 %v2095, 0.0
      %v2196 = vmax.f32 %v2100, 0.0
      %v2197 = vmax.f32 %v2103, 0.0
      %v2198 = vmax.f32 %v2108, 0.0
      %v2199 = vmax.f32 %v2111, 0.0
      %v2200 = vmax.f32 %v2116, 0.0
      %v2201 = vmax.f32 %v2119, 0.0
      %v2202 = vmax.f32 %v2124, 0.0
      %v2203 = vmax.f32 %v2127, 0.0
      %v2204 = vmax.f32 %v2132, 0.0
      %v2205 = vmax.f32 %v2135, 0.0
      %v2206 = vmax.f32 %v2140, 0.0
      %v2207 = vmax.f32 %v2143, 0.0
      %v2208 = vmax.f32 %v2148, 0.0
      %v2209 = vmax.f32 %v2151, 0.0
      %v2210 = vmax.f32 %v2156, 0.0
      %v2211 = vmax.f32 %v2159, 0.0
      %v2212 = vmax.f32 %v2164, 0.0
      %v2213 = vmax.f32 %v2167, 0.0
      %v2214 = vmax.f32 %v2172, 0.0
      %v2215 = vmax.f32 %v2175, 0.0
      %v2216 = vmax.f32 %v2180, 0.0
      %v2217 = vmax.f32 %v2183, 0.0
      %v2218 = vpack.c.bf16 %v2187, %v2186
      %v2219 = vpack.c.bf16 %v2189, %v2188
      %v2220 = vpack.c.bf16 %v2191, %v2190
      %v2221 = vpack.c.bf16 %v2193, %v2192
      %v2222 = vpack.c.bf16 %v2195, %v2194
      %v2223 = vpack.c.bf16 %v2197, %v2196
      %v2224 = vpack.c.bf16 %v2199, %v2198
      %v2225 = vpack.c.bf16 %v2201, %v2200
      %v2226 = vpack.c.bf16 %v2203, %v2202
      %v2227 = vpack.c.bf16 %v2205, %v2204
      %v2228 = vpack.c.bf16 %v2207, %v2206
      %v2229 = vpack.c.bf16 %v2209, %v2208
      %v2230 = vpack.c.bf16 %v2211, %v2210
      %v2231 = vpack.c.bf16 %v2213, %v2212
      %v2232 = vpack.c.bf16 %v2215, %v2214
      %v2233 = vpack.c.bf16 %v2217, %v2216
      %v2234 = vld [vmem:[%s3] sm:$0xf]
      %v2235 = vld [vmem:[%s3 + $0x4] sm:$0xf]
      %v2236 = vld [vmem:[%s3 + $0x8] sm:$0xf]
      %v2237 = vld [vmem:[%s3 + $0xc] sm:$0xf]
      %v2238 = vld [vmem:[%s3 + $0x10] sm:$0xf]
      %v2239 = vld [vmem:[%s3 + $0x14] sm:$0xf]
      %v2240 = vld [vmem:[%s3 + $0x18] sm:$0xf]
      %v2241 = vld [vmem:[%s3 + $0x1c] sm:$0xf]
      %v2242 = vld [vmem:[%s3 + $0x20] sm:$0xf]
      %v2243 = vld [vmem:[%s3 + $0x24] sm:$0xf]
      %v2244 = vld [vmem:[%s3 + $0x28] sm:$0xf]
      %v2245 = vld [vmem:[%s3 + $0x2c] sm:$0xf]
      %v2246 = vld [vmem:[%s3 + $0x30] sm:$0xf]
      %v2247 = vld [vmem:[%s3 + $0x34] sm:$0xf]
      %v2248 = vld [vmem:[%s3 + $0x38] sm:$0xf]
      %v2249 = vld [vmem:[%s3 + $0x3c] sm:$0xf]
      %v2250 = vld [vmem:[%s4] sm:$0x1]
      %v2252 = vlaneseq
      %v2253 = vshrl.u32 %v2252, 7
      %v2254 = vsub.s32 0, %v2253
      %v2255 = vrot.slane %v2250, %v2254
      %v2273 = vunpack.c.l.b16 %v2234
      %v2274 = vunpack.c.l.b16 %v2235
      %v2275 = vunpack.c.l.b16 %v2236
      %v2276 = vunpack.c.l.b16 %v2237
      %v2277 = vunpack.c.l.b16 %v2238
      %v2278 = vunpack.c.l.b16 %v2239
      %v2279 = vunpack.c.l.b16 %v2240
      %v2280 = vunpack.c.l.b16 %v2241
      %v2281 = vunpack.c.l.b16 %v2242
      %v2282 = vunpack.c.l.b16 %v2243
      %v2283 = vunpack.c.l.b16 %v2244
      %v2284 = vunpack.c.l.b16 %v2245
      %v2285 = vunpack.c.l.b16 %v2246
      %v2286 = vunpack.c.l.b16 %v2247
      %v2287 = vunpack.c.l.b16 %v2248
      %v2288 = vunpack.c.l.b16 %v2249
      %v2289 = vpack.c.b16 %v2274, %v2273
      %v2290 = vpack.c.b16 %v2276, %v2275
      %v2291 = vpack.c.b16 %v2278, %v2277
      %v2292 = vpack.c.b16 %v2280, %v2279
      %v2293 = vpack.c.b16 %v2282, %v2281
      %v2294 = vpack.c.b16 %v2284, %v2283
      %v2295 = vpack.c.b16 %v2286, %v2285
      %v2296 = vpack.c.b16 %v2288, %v2287
      %2305 = vmatprep.subr.bf16.mxu0 0
      %2306 = vmatpush1.bf16.msra.mxu0 %v2296
      %2307 = vmatprep.subr.bf16.mxu0 0
      %2308 = vmatpush1.bf16.msra.mxu0 %v2295
      %2309 = vmatprep.subr.bf16.mxu0 0
      %2310 = vmatpush1.bf16.msra.mxu0 %v2294
      %2311 = vmatprep.subr.bf16.mxu0 0
      %2312 = vmatpush1.bf16.msra.mxu0 %v2293
      %2313 = vmatprep.subr.bf16.mxu0 0
      %2314 = vmatpush1.bf16.msra.mxu0 %v2292
      %2315 = vmatprep.subr.bf16.mxu0 0
      %2316 = vmatpush1.bf16.msra.mxu0 %v2291
      %2317 = vmatprep.subr.bf16.mxu0 0
      %2318 = vmatpush1.bf16.msra.mxu0 %v2290
      %2319 = vmatprep.subr.bf16.mxu0 0
      %2320 = vmatpush1.bf16.msra.mxu0 %v2289
      %2321 = vmatprep.subr.bf16.mxu0 0
      %2322 = vmatpush2.bf16.msra.mxu0 0
      %2323 = vmatprep.subr.bf16.mxu0 0
      %2324 = vmatpush2.bf16.msra.mxu0 0
      %2325 = vmatprep.subr.bf16.mxu0 0
      %2326 = vmatpush2.bf16.msra.mxu0 0
      %2327 = vmatprep.subr.bf16.mxu0 0
      %2328 = vmatpush2.bf16.msra.mxu0 0
      %2329 = vmatprep.subr.bf16.mxu0 0
      %2330 = vmatpush2.bf16.msra.mxu0 0
      %2331 = vmatprep.subr.bf16.mxu0 0
      %2332 = vmatpush2.bf16.msra.mxu0 0
      %2333 = vmatprep.subr.bf16.mxu0 0
      %2334 = vmatpush2.bf16.msra.mxu0 0
      %2335 = vmatprep.subr.bf16.mxu0 0
      %2336 = vmatpush2.bf16.msra.mxu0 0
      %2337 = vmatprep.mubr.bf16.mxu0 0
      %2338 = vmatmul.mubr.bf16.gmra.mxu0 %v2218
      %v2339 = vpop.f32.mrf.mxu0
      %v2340 = vadd.f32 %v2255, %v2339
      %v2341 = vpop.f32.mrf.mxu0
      %v2342 = vpop.f32.mrf.mxu0
      %v2343 = vadd.f32 %v2255, %v2342
      %v2344 = vpop.f32.mrf.mxu0
      %2345 = vmatprep.mubr.bf16.mxu0 0
      %2346 = vmatmul.mubr.bf16.gmra.mxu0 %v2219
      %v2347 = vpop.f32.mrf.mxu0
      %v2348 = vadd.f32 %v2255, %v2347
      %v2349 = vpop.f32.mrf.mxu0
      %v2350 = vpop.f32.mrf.mxu0
      %v2351 = vadd.f32 %v2255, %v2350
      %v2352 = vpop.f32.mrf.mxu0
      %2353 = vmatprep.mubr.bf16.mxu0 0
      %2354 = vmatmul.mubr.bf16.gmra.mxu0 %v2220
      %v2355 = vpop.f32.mrf.mxu0
      %v2356 = vadd.f32 %v2255, %v2355
      %v2357 = vpop.f32.mrf.mxu0
      %v2358 = vpop.f32.mrf.mxu0
      %v2359 = vadd.f32 %v2255, %v2358
      %v2360 = vpop.f32.mrf.mxu0
      %2361 = vmatprep.mubr.bf16.mxu0 0
      %2362 = vmatmul.mubr.bf16.gmra.mxu0 %v2221
      %v2363 = vpop.f32.mrf.mxu0
      %v2364 = vadd.f32 %v2255, %v2363
      %v2365 = vpop.f32.mrf.mxu0
      %v2366 = vpop.f32.mrf.mxu0
      %v2367 = vadd.f32 %v2255, %v2366
      %v2368 = vpop.f32.mrf.mxu0
      %2369 = vmatprep.mubr.bf16.mxu0 0
      %2370 = vmatmul.mubr.bf16.gmra.mxu0 %v2222
      %v2371 = vpop.f32.mrf.mxu0
      %v2372 = vadd.f32 %v2255, %v2371
      %v2373 = vpop.f32.mrf.mxu0
      %v2374 = vpop.f32.mrf.mxu0
      %v2375 = vadd.f32 %v2255, %v2374
      %v2376 = vpop.f32.mrf.mxu0
      %2377 = vmatprep.mubr.bf16.mxu0 0
      %2378 = vmatmul.mubr.bf16.gmra.mxu0 %v2223
      %v2379 = vpop.f32.mrf.mxu0
      %v2380 = vadd.f32 %v2255, %v2379
      %v2381 = vpop.f32.mrf.mxu0
      %v2382 = vpop.f32.mrf.mxu0
      %v2383 = vadd.f32 %v2255, %v2382
      %v2384 = vpop.f32.mrf.mxu0
      %2385 = vmatprep.mubr.bf16.mxu0 0
      %2386 = vmatmul.mubr.bf16.gmra.mxu0 %v2224
      %v2387 = vpop.f32.mrf.mxu0
      %v2388 = vadd.f32 %v2255, %v2387
      %v2389 = vpop.f32.mrf.mxu0
      %v2390 = vpop.f32.mrf.mxu0
      %v2391 = vadd.f32 %v2255, %v2390
      %v2392 = vpop.f32.mrf.mxu0
      %2393 = vmatprep.mubr.bf16.mxu0 0
      %2394 = vmatmul.mubr.bf16.gmra.mxu0 %v2225
      %v2395 = vpop.f32.mrf.mxu0
      %v2396 = vadd.f32 %v2255, %v2395
      %v2397 = vpop.f32.mrf.mxu0
      %v2398 = vpop.f32.mrf.mxu0
      %v2399 = vadd.f32 %v2255, %v2398
      %v2400 = vpop.f32.mrf.mxu0
      %2401 = vmatprep.mubr.bf16.mxu0 0
      %2402 = vmatmul.mubr.bf16.gmra.mxu0 %v2226
      %v2403 = vpop.f32.mrf.mxu0
      %v2404 = vadd.f32 %v2255, %v2403
      %v2405 = vpop.f32.mrf.mxu0
      %v2406 = vpop.f32.mrf.mxu0
      %v2407 = vadd.f32 %v2255, %v2406
      %v2408 = vpop.f32.mrf.mxu0
      %2409 = vmatprep.mubr.bf16.mxu0 0
      %2410 = vmatmul.mubr.bf16.gmra.mxu0 %v2227
      %v2411 = vpop.f32.mrf.mxu0
      %v2412 = vadd.f32 %v2255, %v2411
      %v2413 = vpop.f32.mrf.mxu0
      %v2414 = vpop.f32.mrf.mxu0
      %v2415 = vadd.f32 %v2255, %v2414
      %v2416 = vpop.f32.mrf.mxu0
      %2417 = vmatprep.mubr.bf16.mxu0 0
      %2418 = vmatmul.mubr.bf16.gmra.mxu0 %v2228
      %v2419 = vpop.f32.mrf.mxu0
      %v2420 = vadd.f32 %v2255, %v2419
      %v2421 = vpop.f32.mrf.mxu0
      %v2422 = vpop.f32.mrf.mxu0
      %v2423 = vadd.f32 %v2255, %v2422
      %v2424 = vpop.f32.mrf.mxu0
      %2425 = vmatprep.mubr.bf16.mxu0 0
      %2426 = vmatmul.mubr.bf16.gmra.mxu0 %v2229
      %v2427 = vpop.f32.mrf.mxu0
      %v2428 = vadd.f32 %v2255, %v2427
      %v2429 = vpop.f32.mrf.mxu0
      %v2430 = vpop.f32.mrf.mxu0
      %v2431 = vadd.f32 %v2255, %v2430
      %v2432 = vpop.f32.mrf.mxu0
      %2433 = vmatprep.mubr.bf16.mxu0 0
      %2434 = vmatmul.mubr.bf16.gmra.mxu0 %v2230
      %v2435 = vpop.f32.mrf.mxu0
      %v2436 = vadd.f32 %v2255, %v2435
      %v2437 = vpop.f32.mrf.mxu0
      %v2438 = vpop.f32.mrf.mxu0
      %v2439 = vadd.f32 %v2255, %v2438
      %v2440 = vpop.f32.mrf.mxu0
      %2441 = vmatprep.mubr.bf16.mxu0 0
      %2442 = vmatmul.mubr.bf16.gmra.mxu0 %v2231
      %v2443 = vpop.f32.mrf.mxu0
      %v2444 = vadd.f32 %v2255, %v2443
      %v2445 = vpop.f32.mrf.mxu0
      %v2446 = vpop.f32.mrf.mxu0
      %v2447 = vadd.f32 %v2255, %v2446
      %v2448 = vpop.f32.mrf.mxu0
      %2449 = vmatprep.mubr.bf16.mxu0 0
      %2450 = vmatmul.mubr.bf16.gmra.mxu0 %v2232
      %v2451 = vpop.f32.mrf.mxu0
      %v2452 = vadd.f32 %v2255, %v2451
      %v2453 = vpop.f32.mrf.mxu0
      %v2454 = vpop.f32.mrf.mxu0
      %v2455 = vadd.f32 %v2255, %v2454
      %v2456 = vpop.f32.mrf.mxu0
      %2457 = vmatprep.mubr.bf16.mxu0 0
      %2458 = vmatmul.mubr.bf16.gmra.mxu0 %v2233
      %v2459 = vpop.f32.mrf.mxu0
      %v2460 = vadd.f32 %v2255, %v2459
      %v2461 = vpop.f32.mrf.mxu0
      %v2462 = vpop.f32.mrf.mxu0
      %v2463 = vadd.f32 %v2255, %v2462
      %v2464 = vpop.f32.mrf.mxu0
      %2465 = vdwg.mxu0
      %v2466 = vpack.c.bf16 %v2343, %v2340
      %v2467 = vpack.c.bf16 %v2351, %v2348
      %v2468 = vpack.c.bf16 %v2359, %v2356
      %v2469 = vpack.c.bf16 %v2367, %v2364
      %v2470 = vpack.c.bf16 %v2375, %v2372
      %v2471 = vpack.c.bf16 %v2383, %v2380
      %v2472 = vpack.c.bf16 %v2391, %v2388
      %v2473 = vpack.c.bf16 %v2399, %v2396
      %v2474 = vpack.c.bf16 %v2407, %v2404
      %v2475 = vpack.c.bf16 %v2415, %v2412
      %v2476 = vpack.c.bf16 %v2423, %v2420
      %v2477 = vpack.c.bf16 %v2431, %v2428
      %v2478 = vpack.c.bf16 %v2439, %v2436
      %v2479 = vpack.c.bf16 %v2447, %v2444
      %v2480 = vpack.c.bf16 %v2455, %v2452
      %v2481 = vpack.c.bf16 %v2463, %v2460
      %v2482 = vld [vmem:[%s5] sm:$0xf]
      %v2483 = vld [vmem:[%s5 + $0x4] sm:$0xf]
      %v2484 = vld [vmem:[%s5 + $0x8] sm:$0xf]
      %v2485 = vld [vmem:[%s5 + $0xc] sm:$0xf]
      %v2486 = vld [vmem:[%s5 + $0x10] sm:$0xf]
      %v2487 = vld [vmem:[%s5 + $0x14] sm:$0xf]
      %v2488 = vld [vmem:[%s5 + $0x18] sm:$0xf]
      %v2489 = vld [vmem:[%s5 + $0x1c] sm:$0xf]
      %v2490 = vld [vmem:[%s5 + $0x20] sm:$0xf]
      %v2491 = vld [vmem:[%s5 + $0x24] sm:$0xf]
      %v2492 = vld [vmem:[%s5 + $0x28] sm:$0xf]
      %v2493 = vld [vmem:[%s5 + $0x2c] sm:$0xf]
      %v2494 = vld [vmem:[%s5 + $0x30] sm:$0xf]
      %v2495 = vld [vmem:[%s5 + $0x34] sm:$0xf]
      %v2496 = vld [vmem:[%s5 + $0x38] sm:$0xf]
      %v2497 = vld [vmem:[%s5 + $0x3c] sm:$0xf]
      %v2498 = vld [vmem:[%s6] sm:$0x1]
      %v2500 = vlaneseq
      %v2501 = vshrl.u32 %v2500, 7
      %v2502 = vsub.s32 0, %v2501
      %v2503 = vrot.slane %v2498, %v2502
      %v2521 = vunpack.c.l.b16 %v2482
      %v2522 = vunpack.c.l.b16 %v2483
      %v2523 = vunpack.c.l.b16 %v2484
      %v2524 = vunpack.c.l.b16 %v2485
      %v2525 = vunpack.c.l.b16 %v2486
      %v2526 = vunpack.c.l.b16 %v2487
      %v2527 = vunpack.c.l.b16 %v2488
      %v2528 = vunpack.c.l.b16 %v2489
      %v2529 = vunpack.c.l.b16 %v2490
      %v2530 = vunpack.c.l.b16 %v2491
      %v2531 = vunpack.c.l.b16 %v2492
      %v2532 = vunpack.c.l.b16 %v2493
      %v2533 = vunpack.c.l.b16 %v2494
      %v2534 = vunpack.c.l.b16 %v2495
      %v2535 = vunpack.c.l.b16 %v2496
      %v2536 = vunpack.c.l.b16 %v2497
      %v2537 = vpack.c.b16 %v2522, %v2521
      %v2538 = vpack.c.b16 %v2524, %v2523
      %v2539 = vpack.c.b16 %v2526, %v2525
      %v2540 = vpack.c.b16 %v2528, %v2527
      %v2541 = vpack.c.b16 %v2530, %v2529
      %v2542 = vpack.c.b16 %v2532, %v2531
      %v2543 = vpack.c.b16 %v2534, %v2533
      %v2544 = vpack.c.b16 %v2536, %v2535
      %2553 = vmatprep.subr.bf16.mxu0 0
      %2554 = vmatpush1.bf16.msra.mxu0 %v2544
      %2555 = vmatprep.subr.bf16.mxu0 0
      %2556 = vmatpush1.bf16.msra.mxu0 %v2543
      %2557 = vmatprep.subr.bf16.mxu0 0
      %2558 = vmatpush1.bf16.msra.mxu0 %v2542
      %2559 = vmatprep.subr.bf16.mxu0 0
      %2560 = vmatpush1.bf16.msra.mxu0 %v2541
      %2561 = vmatprep.subr.bf16.mxu0 0
      %2562 = vmatpush1.bf16.msra.mxu0 %v2540
      %2563 = vmatprep.subr.bf16.mxu0 0
      %2564 = vmatpush1.bf16.msra.mxu0 %v2539
      %2565 = vmatprep.subr.bf16.mxu0 0
      %2566 = vmatpush1.bf16.msra.mxu0 %v2538
      %2567 = vmatprep.subr.bf16.mxu0 0
      %2568 = vmatpush1.bf16.msra.mxu0 %v2537
      %2569 = vmatprep.subr.bf16.mxu0 0
      %2570 = vmatpush2.bf16.msra.mxu0 0
      %2571 = vmatprep.subr.bf16.mxu0 0
      %2572 = vmatpush2.bf16.msra.mxu0 0
      %2573 = vmatprep.subr.bf16.mxu0 0
      %2574 = vmatpush2.bf16.msra.mxu0 0
      %2575 = vmatprep.subr.bf16.mxu0 0
      %2576 = vmatpush2.bf16.msra.mxu0 0
      %2577 = vmatprep.subr.bf16.mxu0 0
      %2578 = vmatpush2.bf16.msra.mxu0 0
      %2579 = vmatprep.subr.bf16.mxu0 0
      %2580 = vmatpush2.bf16.msra.mxu0 0
      %2581 = vmatprep.subr.bf16.mxu0 0
      %2582 = vmatpush2.bf16.msra.mxu0 0
      %2583 = vmatprep.subr.bf16.mxu0 0
      %2584 = vmatpush2.bf16.msra.mxu0 0
      %2585 = vmatprep.mubr.bf16.mxu0 0
      %2586 = vmatmul.mubr.bf16.gmra.mxu0 %v2466
      %v2587 = vpop.f32.mrf.mxu0
      %v2588 = vadd.f32 %v2503, %v2587
      %v2589 = vpop.f32.mrf.mxu0
      %v2590 = vpop.f32.mrf.mxu0
      %v2591 = vadd.f32 %v2503, %v2590
      %v2592 = vpop.f32.mrf.mxu0
      %2593 = vmatprep.mubr.bf16.mxu0 0
      %2594 = vmatmul.mubr.bf16.gmra.mxu0 %v2467
      %v2595 = vpop.f32.mrf.mxu0
      %v2596 = vadd.f32 %v2503, %v2595
      %v2597 = vpop.f32.mrf.mxu0
      %v2598 = vpop.f32.mrf.mxu0
      %v2599 = vadd.f32 %v2503, %v2598
      %v2600 = vpop.f32.mrf.mxu0
      %2601 = vmatprep.mubr.bf16.mxu0 0
      %2602 = vmatmul.mubr.bf16.gmra.mxu0 %v2468
      %v2603 = vpop.f32.mrf.mxu0
      %v2604 = vadd.f32 %v2503, %v2603
      %v2605 = vpop.f32.mrf.mxu0
      %v2606 = vpop.f32.mrf.mxu0
      %v2607 = vadd.f32 %v2503, %v2606
      %v2608 = vpop.f32.mrf.mxu0
      %2609 = vmatprep.mubr.bf16.mxu0 0
      %2610 = vmatmul.mubr.bf16.gmra.mxu0 %v2469
      %v2611 = vpop.f32.mrf.mxu0
      %v2612 = vadd.f32 %v2503, %v2611
      %v2613 = vpop.f32.mrf.mxu0
      %v2614 = vpop.f32.mrf.mxu0
      %v2615 = vadd.f32 %v2503, %v2614
      %v2616 = vpop.f32.mrf.mxu0
      %2617 = vmatprep.mubr.bf16.mxu0 0
      %2618 = vmatmul.mubr.bf16.gmra.mxu0 %v2470
      %v2619 = vpop.f32.mrf.mxu0
      %v2620 = vadd.f32 %v2503, %v2619
      %v2621 = vpop.f32.mrf.mxu0
      %v2622 = vpop.f32.mrf.mxu0
      %v2623 = vadd.f32 %v2503, %v2622
      %v2624 = vpop.f32.mrf.mxu0
      %2625 = vmatprep.mubr.bf16.mxu0 0
      %2626 = vmatmul.mubr.bf16.gmra.mxu0 %v2471
      %v2627 = vpop.f32.mrf.mxu0
      %v2628 = vadd.f32 %v2503, %v2627
      %v2629 = vpop.f32.mrf.mxu0
      %v2630 = vpop.f32.mrf.mxu0
      %v2631 = vadd.f32 %v2503, %v2630
      %v2632 = vpop.f32.mrf.mxu0
      %2633 = vmatprep.mubr.bf16.mxu0 0
      %2634 = vmatmul.mubr.bf16.gmra.mxu0 %v2472
      %v2635 = vpop.f32.mrf.mxu0
      %v2636 = vadd.f32 %v2503, %v2635
      %v2637 = vpop.f32.mrf.mxu0
      %v2638 = vpop.f32.mrf.mxu0
      %v2639 = vadd.f32 %v2503, %v2638
      %v2640 = vpop.f32.mrf.mxu0
      %2641 = vmatprep.mubr.bf16.mxu0 0
      %2642 = vmatmul.mubr.bf16.gmra.mxu0 %v2473
      %v2643 = vpop.f32.mrf.mxu0
      %v2644 = vadd.f32 %v2503, %v2643
      %v2645 = vpop.f32.mrf.mxu0
      %v2646 = vpop.f32.mrf.mxu0
      %v2647 = vadd.f32 %v2503, %v2646
      %v2648 = vpop.f32.mrf.mxu0
      %2649 = vmatprep.mubr.bf16.mxu0 0
      %2650 = vmatmul.mubr.bf16.gmra.mxu0 %v2474
      %v2651 = vpop.f32.mrf.mxu0
      %v2652 = vadd.f32 %v2503, %v2651
      %v2653 = vpop.f32.mrf.mxu0
      %v2654 = vpop.f32.mrf.mxu0
      %v2655 = vadd.f32 %v2503, %v2654
      %v2656 = vpop.f32.mrf.mxu0
      %2657 = vmatprep.mubr.bf16.mxu0 0
      %2658 = vmatmul.mubr.bf16.gmra.mxu0 %v2475
      %v2659 = vpop.f32.mrf.mxu0
      %v2660 = vadd.f32 %v2503, %v2659
      %v2661 = vpop.f32.mrf.mxu0
      %v2662 = vpop.f32.mrf.mxu0
      %v2663 = vadd.f32 %v2503, %v2662
      %v2664 = vpop.f32.mrf.mxu0
      %2665 = vmatprep.mubr.bf16.mxu0 0
      %2666 = vmatmul.mubr.bf16.gmra.mxu0 %v2476
      %v2667 = vpop.f32.mrf.mxu0
      %v2668 = vadd.f32 %v2503, %v2667
      %v2669 = vpop.f32.mrf.mxu0
      %v2670 = vpop.f32.mrf.mxu0
      %v2671 = vadd.f32 %v2503, %v2670
      %v2672 = vpop.f32.mrf.mxu0
      %2673 = vmatprep.mubr.bf16.mxu0 0
      %2674 = vmatmul.mubr.bf16.gmra.mxu0 %v2477
      %v2675 = vpop.f32.mrf.mxu0
      %v2676 = vadd.f32 %v2503, %v2675
      %v2677 = vpop.f32.mrf.mxu0
      %v2678 = vpop.f32.mrf.mxu0
      %v2679 = vadd.f32 %v2503, %v2678
      %v2680 = vpop.f32.mrf.mxu0
      %2681 = vmatprep.mubr.bf16.mxu0 0
      %2682 = vmatmul.mubr.bf16.gmra.mxu0 %v2478
      %v2683 = vpop.f32.mrf.mxu0
      %v2684 = vadd.f32 %v2503, %v2683
      %v2685 = vpop.f32.mrf.mxu0
      %v2686 = vpop.f32.mrf.mxu0
      %v2687 = vadd.f32 %v2503, %v2686
      %v2688 = vpop.f32.mrf.mxu0
      %2689 = vmatprep.mubr.bf16.mxu0 0
      %2690 = vmatmul.mubr.bf16.gmra.mxu0 %v2479
      %v2691 = vpop.f32.mrf.mxu0
      %v2692 = vadd.f32 %v2503, %v2691
      %v2693 = vpop.f32.mrf.mxu0
      %v2694 = vpop.f32.mrf.mxu0
      %v2695 = vadd.f32 %v2503, %v2694
      %v2696 = vpop.f32.mrf.mxu0
      %2697 = vmatprep.mubr.bf16.mxu0 0
      %2698 = vmatmul.mubr.bf16.gmra.mxu0 %v2480
      %v2699 = vpop.f32.mrf.mxu0
      %v2700 = vadd.f32 %v2503, %v2699
      %v2701 = vpop.f32.mrf.mxu0
      %v2702 = vpop.f32.mrf.mxu0
      %v2703 = vadd.f32 %v2503, %v2702
      %v2704 = vpop.f32.mrf.mxu0
      %2705 = vmatprep.mubr.bf16.mxu0 0
      %2706 = vmatmul.mubr.bf16.gmra.mxu0 %v2481
      %v2707 = vpop.f32.mrf.mxu0
      %v2708 = vadd.f32 %v2503, %v2707
      %v2709 = vpop.f32.mrf.mxu0
      %v2710 = vpop.f32.mrf.mxu0
      %v2711 = vadd.f32 %v2503, %v2710
      %v2712 = vpop.f32.mrf.mxu0
      %2713 = vdwg.mxu0
      %v2714 = vmax.f32 %v2588, 0.0
      %v2715 = vmax.f32 %v2591, 0.0
      %v2716 = vmax.f32 %v2596, 0.0
      %v2717 = vmax.f32 %v2599, 0.0
      %v2718 = vmax.f32 %v2604, 0.0
      %v2719 = vmax.f32 %v2607, 0.0
      %v2720 = vmax.f32 %v2612, 0.0
      %v2721 = vmax.f32 %v2615, 0.0
      %v2722 = vmax.f32 %v2620, 0.0
      %v2723 = vmax.f32 %v2623, 0.0
      %v2724 = vmax.f32 %v2628, 0.0
      %v2725 = vmax.f32 %v2631, 0.0
      %v2726 = vmax.f32 %v2636, 0.0
      %v2727 = vmax.f32 %v2639, 0.0
      %v2728 = vmax.f32 %v2644, 0.0
      %v2729 = vmax.f32 %v2647, 0.0
      %v2730 = vmax.f32 %v2652, 0.0
      %v2731 = vmax.f32 %v2655, 0.0
      %v2732 = vmax.f32 %v2660, 0.0
      %v2733 = vmax.f32 %v2663, 0.0
      %v2734 = vmax.f32 %v2668, 0.0
      %v2735 = vmax.f32 %v2671, 0.0
      %v2736 = vmax.f32 %v2676, 0.0
      %v2737 = vmax.f32 %v2679, 0.0
      %v2738 = vmax.f32 %v2684, 0.0
      %v2739 = vmax.f32 %v2687, 0.0
      %v2740 = vmax.f32 %v2692, 0.0
      %v2741 = vmax.f32 %v2695, 0.0
      %v2742 = vmax.f32 %v2700, 0.0
      %v2743 = vmax.f32 %v2703, 0.0
      %v2744 = vmax.f32 %v2708, 0.0
      %v2745 = vmax.f32 %v2711, 0.0
      %v2746 = vpack.c.bf16 %v2715, %v2714
      %v2747 = vpack.c.bf16 %v2717, %v2716
      %v2748 = vpack.c.bf16 %v2719, %v2718
      %v2749 = vpack.c.bf16 %v2721, %v2720
      %v2750 = vpack.c.bf16 %v2723, %v2722
      %v2751 = vpack.c.bf16 %v2725, %v2724
      %v2752 = vpack.c.bf16 %v2727, %v2726
      %v2753 = vpack.c.bf16 %v2729, %v2728
      %v2754 = vpack.c.bf16 %v2731, %v2730
      %v2755 = vpack.c.bf16 %v2733, %v2732
      %v2756 = vpack.c.bf16 %v2735, %v2734
      %v2757 = vpack.c.bf16 %v2737, %v2736
      %v2758 = vpack.c.bf16 %v2739, %v2738
      %v2759 = vpack.c.bf16 %v2741, %v2740
      %v2760 = vpack.c.bf16 %v2743, %v2742
      %v2761 = vpack.c.bf16 %v2745, %v2744
      %v2762 = vld [vmem:[%s7] sm:$0xff]
      %v2763 = vld [vmem:[%s7 + $0x8] sm:$0xff]
      %v2764 = vld [vmem:[%s7 + $0x10] sm:$0xff]
      %v2765 = vld [vmem:[%s7 + $0x18] sm:$0xf]
      %v2766 = vld [vmem:[%s7 + $0x1c] sm:$0xff]
      %v2767 = vld [vmem:[%s7 + $0x24] sm:$0xff]
      %v2768 = vld [vmem:[%s7 + $0x2c] sm:$0xff]
      %v2769 = vld [vmem:[%s7 + $0x34] sm:$0xf]
      %v2770 = vld [vmem:[%s7 + $0x38] sm:$0xff]
      %v2771 = vld [vmem:[%s7 + $0x40] sm:$0xff]
      %v2772 = vld [vmem:[%s7 + $0x48] sm:$0xff]
      %v2773 = vld [vmem:[%s7 + $0x50] sm:$0xf]
      %v2774 = vld [vmem:[%s7 + $0x54] sm:$0xff]
      %v2775 = vld [vmem:[%s7 + $0x5c] sm:$0xff]
      %v2776 = vld [vmem:[%s7 + $0x64] sm:$0xff]
      %v2777 = vld [vmem:[%s7 + $0x6c] sm:$0xf]
      %v2778 = vld [vmem:[%s7 + $0x70] sm:$0xff]
      %v2779 = vld [vmem:[%s7 + $0x78] sm:$0xff]
      %v2780 = vld [vmem:[%s7 + $0x80] sm:$0xff]
      %v2781 = vld [vmem:[%s7 + $0x88] sm:$0xf]
      %v2782 = vld [vmem:[%s7 + $0x8c] sm:$0xff]
      %v2783 = vld [vmem:[%s7 + $0x94] sm:$0xff]
      %v2784 = vld [vmem:[%s7 + $0x9c] sm:$0xff]
      %v2785 = vld [vmem:[%s7 + $0xa4] sm:$0xf]
      %v2786 = vld [vmem:[%s7 + $0xa8] sm:$0xff]
      %v2787 = vld [vmem:[%s7 + $0xb0] sm:$0xff]
      %v2788 = vld [vmem:[%s7 + $0xb8] sm:$0xff]
      %v2789 = vld [vmem:[%s7 + $0xc0] sm:$0xf]
      %v2790 = vld [vmem:[%s7 + $0xc4] sm:$0xff]
      %v2791 = vld [vmem:[%s7 + $0xcc] sm:$0xff]
      %v2792 = vld [vmem:[%s7 + $0xd4] sm:$0xff]
      %v2793 = vld [vmem:[%s7 + $0xdc] sm:$0xf]
      %v2794 = vld [vmem:[%s7 + $0xe0] sm:$0xff]
      %v2795 = vld [vmem:[%s7 + $0xe8] sm:$0xff]
      %v2796 = vld [vmem:[%s7 + $0xf0] sm:$0xff]
      %v2797 = vld [vmem:[%s7 + $0xf8] sm:$0xf]
      %v2798 = vld [vmem:[%s7 + $0xfc] sm:$0xff]
      %v2799 = vld [vmem:[%s7 + $0x104] sm:$0xff]
      %v2800 = vld [vmem:[%s7 + $0x10c] sm:$0xff]
      %v2801 = vld [vmem:[%s7 + $0x114] sm:$0xf]
      %v2802 = vld [vmem:[%s7 + $0x118] sm:$0xff]
      %v2803 = vld [vmem:[%s7 + $0x120] sm:$0xff]
      %v2804 = vld [vmem:[%s7 + $0x128] sm:$0xff]
      %v2805 = vld [vmem:[%s7 + $0x130] sm:$0xf]
      %v2806 = vld [vmem:[%s7 + $0x134] sm:$0xff]
      %v2807 = vld [vmem:[%s7 + $0x13c] sm:$0xff]
      %v2808 = vld [vmem:[%s7 + $0x144] sm:$0xff]
      %v2809 = vld [vmem:[%s7 + $0x14c] sm:$0xf]
      %v2810 = vld [vmem:[%s7 + $0x150] sm:$0xff]
      %v2811 = vld [vmem:[%s7 + $0x158] sm:$0xff]
      %v2812 = vld [vmem:[%s7 + $0x160] sm:$0xff]
      %v2813 = vld [vmem:[%s7 + $0x168] sm:$0xf]
      %v2814 = vld [vmem:[%s7 + $0x16c] sm:$0xff]
      %v2815 = vld [vmem:[%s7 + $0x174] sm:$0xff]
      %v2816 = vld [vmem:[%s7 + $0x17c] sm:$0xff]
      %v2817 = vld [vmem:[%s7 + $0x184] sm:$0xf]
      %v2818 = vld [vmem:[%s7 + $0x188] sm:$0xff]
      %v2819 = vld [vmem:[%s7 + $0x190] sm:$0xff]
      %v2820 = vld [vmem:[%s7 + $0x198] sm:$0xff]
      %v2821 = vld [vmem:[%s7 + $0x1a0] sm:$0xf]
      %v2822 = vld [vmem:[%s7 + $0x1a4] sm:$0xff]
      %v2823 = vld [vmem:[%s7 + $0x1ac] sm:$0xff]
      %v2824 = vld [vmem:[%s7 + $0x1b4] sm:$0xff]
      %v2825 = vld [vmem:[%s7 + $0x1bc] sm:$0xf]
      %v2826 = vld [vmem:[%s8] sm:$0xff]
      %v2828 = vlaneseq
      %v2829 = vshrl.u32 %v2828, 7
      %v2830 = vsub.s32 0, %v2829
      %v2831 = vrot.slane %v2826, %v2830
      %v2832 = vlaneseq
      %v2833 = vshrl.u32 %v2832, 7
      %v2834 = vsub.s32 1, %v2833
      %v2835 = vrot.slane %v2826, %v2834
      %v2836 = vlaneseq
      %v2837 = vshrl.u32 %v2836, 7
      %v2838 = vsub.s32 2, %v2837
      %v2839 = vrot.slane %v2826, %v2838
      %v2840 = vlaneseq
      %v2841 = vshrl.u32 %v2840, 7
      %v2842 = vsub.s32 3, %v2841
      %v2843 = vrot.slane %v2826, %v2842
      %v2844 = vlaneseq
      %v2845 = vshrl.u32 %v2844, 7
      %v2846 = vsub.s32 4, %v2845
      %v2847 = vrot.slane %v2826, %v2846
      %v2848 = vlaneseq
      %v2849 = vshrl.u32 %v2848, 7
      %v2850 = vsub.s32 5, %v2849
      %v2851 = vrot.slane %v2826, %v2850
      %v2852 = vlaneseq
      %v2853 = vshrl.u32 %v2852, 7
      %v2854 = vsub.s32 6, %v2853
      %v2855 = vrot.slane %v2826, %v2854
      %v2927 = vunpack.c.l.b16 %v2762
      %v2928 = vunpack.c.h.b16 %v2762
      %v2929 = vunpack.c.l.b16 %v2763
      %v2930 = vunpack.c.h.b16 %v2763
      %v2931 = vunpack.c.l.b16 %v2764
      %v2932 = vunpack.c.h.b16 %v2764
      %v2933 = vunpack.c.l.b16 %v2765
      %v2934 = vunpack.c.l.b16 %v2766
      %v2935 = vunpack.c.h.b16 %v2766
      %v2936 = vunpack.c.l.b16 %v2767
      %v2937 = vunpack.c.h.b16 %v2767
      %v2938 = vunpack.c.l.b16 %v2768
      %v2939 = vunpack.c.h.b16 %v2768
      %v2940 = vunpack.c.l.b16 %v2769
      %v2941 = vunpack.c.l.b16 %v2770
      %v2942 = vunpack.c.h.b16 %v2770
      %v2943 = vunpack.c.l.b16 %v2771
      %v2944 = vunpack.c.h.b16 %v2771
      %v2945 = vunpack.c.l.b16 %v2772
      %v2946 = vunpack.c.h.b16 %v2772
      %v2947 = vunpack.c.l.b16 %v2773
      %v2948 = vunpack.c.l.b16 %v2774
      %v2949 = vunpack.c.h.b16 %v2774
      %v2950 = vunpack.c.l.b16 %v2775
      %v2951 = vunpack.c.h.b16 %v2775
      %v2952 = vunpack.c.l.b16 %v2776
      %v2953 = vunpack.c.h.b16 %v2776
      %v2954 = vunpack.c.l.b16 %v2777
      %v2955 = vunpack.c.l.b16 %v2778
      %v2956 = vunpack.c.h.b16 %v2778
      %v2957 = vunpack.c.l.b16 %v2779
      %v2958 = vunpack.c.h.b16 %v2779
      %v2959 = vunpack.c.l.b16 %v2780
      %v2960 = vunpack.c.h.b16 %v2780
      %v2961 = vunpack.c.l.b16 %v2781
      %v2962 = vunpack.c.l.b16 %v2782
      %v2963 = vunpack.c.h.b16 %v2782
      %v2964 = vunpack.c.l.b16 %v2783
      %v2965 = vunpack.c.h.b16 %v2783
      %v2966 = vunpack.c.l.b16 %v2784
      %v2967 = vunpack.c.h.b16 %v2784
      %v2968 = vunpack.c.l.b16 %v2785
      %v2969 = vunpack.c.l.b16 %v2786
      %v2970 = vunpack.c.h.b16 %v2786
      %v2971 = vunpack.c.l.b16 %v2787
      %v2972 = vunpack.c.h.b16 %v2787
      %v2973 = vunpack.c.l.b16 %v2788
      %v2974 = vunpack.c.h.b16 %v2788
      %v2975 = vunpack.c.l.b16 %v2789
      %v2976 = vunpack.c.l.b16 %v2790
      %v2977 = vunpack.c.h.b16 %v2790
      %v2978 = vunpack.c.l.b16 %v2791
      %v2979 = vunpack.c.h.b16 %v2791
      %v2980 = vunpack.c.l.b16 %v2792
      %v2981 = vunpack.c.h.b16 %v2792
      %v2982 = vunpack.c.l.b16 %v2793
      %v2983 = vunpack.c.l.b16 %v2794
      %v2984 = vunpack.c.h.b16 %v2794
      %v2985 = vunpack.c.l.b16 %v2795
      %v2986 = vunpack.c.h.b16 %v2795
      %v2987 = vunpack.c.l.b16 %v2796
      %v2988 = vunpack.c.h.b16 %v2796
      %v2989 = vunpack.c.l.b16 %v2797
      %v2990 = vunpack.c.l.b16 %v2798
      %v2991 = vunpack.c.h.b16 %v2798
      %v2992 = vunpack.c.l.b16 %v2799
      %v2993 = vunpack.c.h.b16 %v2799
      %v2994 = vunpack.c.l.b16 %v2800
      %v2995 = vunpack.c.h.b16 %v2800
      %v2996 = vunpack.c.l.b16 %v2801
      %v2997 = vunpack.c.l.b16 %v2802
      %v2998 = vunpack.c.h.b16 %v2802
      %v2999 = vunpack.c.l.b16 %v2803
      %v3000 = vunpack.c.h.b16 %v2803
      %v3001 = vunpack.c.l.b16 %v2804
      %v3002 = vunpack.c.h.b16 %v2804
      %v3003 = vunpack.c.l.b16 %v2805
      %v3004 = vunpack.c.l.b16 %v2806
      %v3005 = vunpack.c.h.b16 %v2806
      %v3006 = vunpack.c.l.b16 %v2807
      %v3007 = vunpack.c.h.b16 %v2807
      %v3008 = vunpack.c.l.b16 %v2808
      %v3009 = vunpack.c.h.b16 %v2808
      %v3010 = vunpack.c.l.b16 %v2809
      %v3011 = vunpack.c.l.b16 %v2810
      %v3012 = vunpack.c.h.b16 %v2810
      %v3013 = vunpack.c.l.b16 %v2811
      %v3014 = vunpack.c.h.b16 %v2811
      %v3015 = vunpack.c.l.b16 %v2812
      %v3016 = vunpack.c.h.b16 %v2812
      %v3017 = vunpack.c.l.b16 %v2813
      %v3018 = vunpack.c.l.b16 %v2814
      %v3019 = vunpack.c.h.b16 %v2814
      %v3020 = vunpack.c.l.b16 %v2815
      %v3021 = vunpack.c.h.b16 %v2815
      %v3022 = vunpack.c.l.b16 %v2816
      %v3023 = vunpack.c.h.b16 %v2816
      %v3024 = vunpack.c.l.b16 %v2817
      %v3025 = vunpack.c.l.b16 %v2818
      %v3026 = vunpack.c.h.b16 %v2818
      %v3027 = vunpack.c.l.b16 %v2819
      %v3028 = vunpack.c.h.b16 %v2819
      %v3029 = vunpack.c.l.b16 %v2820
      %v3030 = vunpack.c.h.b16 %v2820
      %v3031 = vunpack.c.l.b16 %v2821
      %v3032 = vunpack.c.l.b16 %v2822
      %v3033 = vunpack.c.h.b16 %v2822
      %v3034 = vunpack.c.l.b16 %v2823
      %v3035 = vunpack.c.h.b16 %v2823
      %v3036 = vunpack.c.l.b16 %v2824
      %v3037 = vunpack.c.h.b16 %v2824
      %v3038 = vunpack.c.l.b16 %v2825
      %v3039 = vpack.c.b16 %v2934, %v2927
      %v3040 = vpack.c.b16 %v2935, %v2928
      %v3041 = vpack.c.b16 %v2936, %v2929
      %v3042 = vpack.c.b16 %v2937, %v2930
      %v3043 = vpack.c.b16 %v2938, %v2931
      %v3044 = vpack.c.b16 %v2939, %v2932
      %v3045 = vpack.c.b16 %v2940, %v2933
      %v3046 = vpack.c.b16 %v2948, %v2941
      %v3047 = vpack.c.b16 %v2949, %v2942
      %v3048 = vpack.c.b16 %v2950, %v2943
      %v3049 = vpack.c.b16 %v2951, %v2944
      %v3050 = vpack.c.b16 %v2952, %v2945
      %v3051 = vpack.c.b16 %v2953, %v2946
      %v3052 = vpack.c.b16 %v2954, %v2947
      %v3053 = vpack.c.b16 %v2962, %v2955
      %v3054 = vpack.c.b16 %v2963, %v2956
      %v3055 = vpack.c.b16 %v2964, %v2957
      %v3056 = vpack.c.b16 %v2965, %v2958
      %v3057 = vpack.c.b16 %v2966, %v2959
      %v3058 = vpack.c.b16 %v2967, %v2960
      %v3059 = vpack.c.b16 %v2968, %v2961
      %v3060 = vpack.c.b16 %v2976, %v2969
      %v3061 = vpack.c.b16 %v2977, %v2970
      %v3062 = vpack.c.b16 %v2978, %v2971
      %v3063 = vpack.c.b16 %v2979, %v2972
      %v3064 = vpack.c.b16 %v2980, %v2973
      %v3065 = vpack.c.b16 %v2981, %v2974
      %v3066 = vpack.c.b16 %v2982, %v2975
      %v3067 = vpack.c.b16 %v2990, %v2983
      %v3068 = vpack.c.b16 %v2991, %v2984
      %v3069 = vpack.c.b16 %v2992, %v2985
      %v3070 = vpack.c.b16 %v2993, %v2986
      %v3071 = vpack.c.b16 %v2994, %v2987
      %v3072 = vpack.c.b16 %v2995, %v2988
      %v3073 = vpack.c.b16 %v2996, %v2989
      %v3074 = vpack.c.b16 %v3004, %v2997
      %v3075 = vpack.c.b16 %v3005, %v2998
      %v3076 = vpack.c.b16 %v3006, %v2999
      %v3077 = vpack.c.b16 %v3007, %v3000
      %v3078 = vpack.c.b16 %v3008, %v3001
      %v3079 = vpack.c.b16 %v3009, %v3002
      %v3080 = vpack.c.b16 %v3010, %v3003
      %v3081 = vpack.c.b16 %v3018, %v3011
      %v3082 = vpack.c.b16 %v3019, %v3012
      %v3083 = vpack.c.b16 %v3020, %v3013
      %v3084 = vpack.c.b16 %v3021, %v3014
      %v3085 = vpack.c.b16 %v3022, %v3015
      %v3086 = vpack.c.b16 %v3023, %v3016
      %v3087 = vpack.c.b16 %v3024, %v3017
      %v3088 = vpack.c.b16 %v3032, %v3025
      %v3089 = vpack.c.b16 %v3033, %v3026
      %v3090 = vpack.c.b16 %v3034, %v3027
      %v3091 = vpack.c.b16 %v3035, %v3028
      %v3092 = vpack.c.b16 %v3036, %v3029
      %v3093 = vpack.c.b16 %v3037, %v3030
      %v3094 = vpack.c.b16 %v3038, %v3031
      %3151 = vmatprep.subr.bf16.mxu0 %v3089
      %3152 = vmatpush1.bf16.msra.mxu0 %v3088
      %3153 = vmatprep.subr.bf16.mxu0 %v3082
      %3154 = vmatpush1.bf16.msra.mxu0 %v3081
      %3155 = vmatprep.subr.bf16.mxu0 %v3075
      %3156 = vmatpush1.bf16.msra.mxu0 %v3074
      %3157 = vmatprep.subr.bf16.mxu0 %v3068
      %3158 = vmatpush1.bf16.msra.mxu0 %v3067
      %3159 = vmatprep.subr.bf16.mxu0 %v3061
      %3160 = vmatpush1.bf16.msra.mxu0 %v3060
      %3161 = vmatprep.subr.bf16.mxu0 %v3054
      %3162 = vmatpush1.bf16.msra.mxu0 %v3053
      %3163 = vmatprep.subr.bf16.mxu0 %v3047
      %3164 = vmatpush1.bf16.msra.mxu0 %v3046
      %3165 = vmatprep.subr.bf16.mxu0 %v3040
      %3166 = vmatpush1.bf16.msra.mxu0 %v3039
      %3167 = vmatprep.subr.bf16.mxu0 0
      %3168 = vmatpush2.bf16.msra.mxu0 0
      %3169 = vmatprep.subr.bf16.mxu0 0
      %3170 = vmatpush2.bf16.msra.mxu0 0
      %3171 = vmatprep.subr.bf16.mxu0 0
      %3172 = vmatpush2.bf16.msra.mxu0 0
      %3173 = vmatprep.subr.bf16.mxu0 0
      %3174 = vmatpush2.bf16.msra.mxu0 0
      %3175 = vmatprep.subr.bf16.mxu0 0
      %3176 = vmatpush2.bf16.msra.mxu0 0
      %3177 = vmatprep.subr.bf16.mxu0 0
      %3178 = vmatpush2.bf16.msra.mxu0 0
      %3179 = vmatprep.subr.bf16.mxu0 0
      %3180 = vmatpush2.bf16.msra.mxu0 0
      %3181 = vmatprep.subr.bf16.mxu0 0
      %3182 = vmatpush2.bf16.msra.mxu0 0
      %3183 = vmatprep.mubr.bf16.mxu0 0
      %3184 = vmatmul.mubr.bf16.gmra.mxu0 %v2746
      %v3185 = vpop.f32.mrf.mxu0
      %v3186 = vadd.f32 %v2831, %v3185
      %v3187 = vpop.f32.mrf.mxu0
      %v3188 = vadd.f32 %v2835, %v3187
      %v3189 = vpop.f32.mrf.mxu0
      %v3190 = vadd.f32 %v2831, %v3189
      %v3191 = vpop.f32.mrf.mxu0
      %v3192 = vadd.f32 %v2835, %v3191
      %3193 = vmatprep.mubr.bf16.mxu0 0
      %3194 = vmatmul.mubr.bf16.gmra.mxu0 %v2747
      %v3195 = vpop.f32.mrf.mxu0
      %v3196 = vadd.f32 %v2831, %v3195
      %v3197 = vpop.f32.mrf.mxu0
      %v3198 = vadd.f32 %v2835, %v3197
      %v3199 = vpop.f32.mrf.mxu0
      %v3200 = vadd.f32 %v2831, %v3199
      %v3201 = vpop.f32.mrf.mxu0
      %v3202 = vadd.f32 %v2835, %v3201
      %3203 = vmatprep.mubr.bf16.mxu0 0
      %3204 = vmatmul.mubr.bf16.gmra.mxu0 %v2748
      %v3205 = vpop.f32.mrf.mxu0
      %v3206 = vadd.f32 %v2831, %v3205
      %v3207 = vpop.f32.mrf.mxu0
      %v3208 = vadd.f32 %v2835, %v3207
      %v3209 = vpop.f32.mrf.mxu0
      %v3210 = vadd.f32 %v2831, %v3209
      %v3211 = vpop.f32.mrf.mxu0
      %v3212 = vadd.f32 %v2835, %v3211
      %3213 = vmatprep.mubr.bf16.mxu0 0
      %3214 = vmatmul.mubr.bf16.gmra.mxu0 %v2749
      %v3215 = vpop.f32.mrf.mxu0
      %v3216 = vadd.f32 %v2831, %v3215
      %v3217 = vpop.f32.mrf.mxu0
      %v3218 = vadd.f32 %v2835, %v3217
      %v3219 = vpop.f32.mrf.mxu0
      %v3220 = vadd.f32 %v2831, %v3219
      %v3221 = vpop.f32.mrf.mxu0
      %v3222 = vadd.f32 %v2835, %v3221
      %3223 = vmatprep.mubr.bf16.mxu0 0
      %3224 = vmatmul.mubr.bf16.gmra.mxu0 %v2750
      %v3225 = vpop.f32.mrf.mxu0
      %v3226 = vadd.f32 %v2831, %v3225
      %v3227 = vpop.f32.mrf.mxu0
      %v3228 = vadd.f32 %v2835, %v3227
      %v3229 = vpop.f32.mrf.mxu0
      %v3230 = vadd.f32 %v2831, %v3229
      %v3231 = vpop.f32.mrf.mxu0
      %v3232 = vadd.f32 %v2835, %v3231
      %3233 = vmatprep.mubr.bf16.mxu0 0
      %3234 = vmatmul.mubr.bf16.gmra.mxu0 %v2751
      %v3235 = vpop.f32.mrf.mxu0
      %v3236 = vadd.f32 %v2831, %v3235
      %v3237 = vpop.f32.mrf.mxu0
      %v3238 = vadd.f32 %v2835, %v3237
      %v3239 = vpop.f32.mrf.mxu0
      %v3240 = vadd.f32 %v2831, %v3239
      %v3241 = vpop.f32.mrf.mxu0
      %v3242 = vadd.f32 %v2835, %v3241
      %3243 = vmatprep.mubr.bf16.mxu0 0
      %3244 = vmatmul.mubr.bf16.gmra.mxu0 %v2752
      %v3245 = vpop.f32.mrf.mxu0
      %v3246 = vadd.f32 %v2831, %v3245
      %v3247 = vpop.f32.mrf.mxu0
      %v3248 = vadd.f32 %v2835, %v3247
      %v3249 = vpop.f32.mrf.mxu0
      %v3250 = vadd.f32 %v2831, %v3249
      %v3251 = vpop.f32.mrf.mxu0
      %v3252 = vadd.f32 %v2835, %v3251
      %3253 = vmatprep.mubr.bf16.mxu0 0
      %3254 = vmatmul.mubr.bf16.gmra.mxu0 %v2753
      %v3255 = vpop.f32.mrf.mxu0
      %v3256 = vadd.f32 %v2831, %v3255
      %v3257 = vpop.f32.mrf.mxu0
      %v3258 = vadd.f32 %v2835, %v3257
      %v3259 = vpop.f32.mrf.mxu0
      %v3260 = vadd.f32 %v2831, %v3259
      %v3261 = vpop.f32.mrf.mxu0
      %v3262 = vadd.f32 %v2835, %v3261
      %3263 = vmatprep.mubr.bf16.mxu0 0
      %3264 = vmatmul.mubr.bf16.gmra.mxu0 %v2754
      %v3265 = vpop.f32.mrf.mxu0
      %v3266 = vadd.f32 %v2831, %v3265
      %v3267 = vpop.f32.mrf.mxu0
      %v3268 = vadd.f32 %v2835, %v3267
      %v3269 = vpop.f32.mrf.mxu0
      %v3270 = vadd.f32 %v2831, %v3269
      %v3271 = vpop.f32.mrf.mxu0
      %v3272 = vadd.f32 %v2835, %v3271
      %3273 = vmatprep.mubr.bf16.mxu0 0
      %3274 = vmatmul.mubr.bf16.gmra.mxu0 %v2755
      %v3275 = vpop.f32.mrf.mxu0
      %v3276 = vadd.f32 %v2831, %v3275
      %v3277 = vpop.f32.mrf.mxu0
      %v3278 = vadd.f32 %v2835, %v3277
      %v3279 = vpop.f32.mrf.mxu0
      %v3280 = vadd.f32 %v2831, %v3279
      %v3281 = vpop.f32.mrf.mxu0
      %v3282 = vadd.f32 %v2835, %v3281
      %3283 = vmatprep.mubr.bf16.mxu0 0
      %3284 = vmatmul.mubr.bf16.gmra.mxu0 %v2756
      %v3285 = vpop.f32.mrf.mxu0
      %v3286 = vadd.f32 %v2831, %v3285
      %v3287 = vpop.f32.mrf.mxu0
      %v3288 = vadd.f32 %v2835, %v3287
      %v3289 = vpop.f32.mrf.mxu0
      %v3290 = vadd.f32 %v2831, %v3289
      %v3291 = vpop.f32.mrf.mxu0
      %v3292 = vadd.f32 %v2835, %v3291
      %3293 = vmatprep.mubr.bf16.mxu0 0
      %3294 = vmatmul.mubr.bf16.gmra.mxu0 %v2757
      %v3295 = vpop.f32.mrf.mxu0
      %v3296 = vadd.f32 %v2831, %v3295
      %v3297 = vpop.f32.mrf.mxu0
      %v3298 = vadd.f32 %v2835, %v3297
      %v3299 = vpop.f32.mrf.mxu0
      %v3300 = vadd.f32 %v2831, %v3299
      %v3301 = vpop.f32.mrf.mxu0
      %v3302 = vadd.f32 %v2835, %v3301
      %3303 = vmatprep.mubr.bf16.mxu0 0
      %3304 = vmatmul.mubr.bf16.gmra.mxu0 %v2758
      %v3305 = vpop.f32.mrf.mxu0
      %v3306 = vadd.f32 %v2831, %v3305
      %v3307 = vpop.f32.mrf.mxu0
      %v3308 = vadd.f32 %v2835, %v3307
      %v3309 = vpop.f32.mrf.mxu0
      %v3310 = vadd.f32 %v2831, %v3309
      %v3311 = vpop.f32.mrf.mxu0
      %v3312 = vadd.f32 %v2835, %v3311
      %3313 = vmatprep.mubr.bf16.mxu0 0
      %3314 = vmatmul.mubr.bf16.gmra.mxu0 %v2759
      %v3315 = vpop.f32.mrf.mxu0
      %v3316 = vadd.f32 %v2831, %v3315
      %v3317 = vpop.f32.mrf.mxu0
      %v3318 = vadd.f32 %v2835, %v3317
      %v3319 = vpop.f32.mrf.mxu0
      %v3320 = vadd.f32 %v2831, %v3319
      %v3321 = vpop.f32.mrf.mxu0
      %v3322 = vadd.f32 %v2835, %v3321
      %3323 = vmatprep.mubr.bf16.mxu0 0
      %3324 = vmatmul.mubr.bf16.gmra.mxu0 %v2760
      %v3325 = vpop.f32.mrf.mxu0
      %v3326 = vadd.f32 %v2831, %v3325
      %v3327 = vpop.f32.mrf.mxu0
      %v3328 = vadd.f32 %v2835, %v3327
      %v3329 = vpop.f32.mrf.mxu0
      %v3330 = vadd.f32 %v2831, %v3329
      %v3331 = vpop.f32.mrf.mxu0
      %v3332 = vadd.f32 %v2835, %v3331
      %3333 = vmatprep.mubr.bf16.mxu0 0
      %3334 = vmatmul.mubr.bf16.gmra.mxu0 %v2761
      %v3335 = vpop.f32.mrf.mxu0
      %v3336 = vadd.f32 %v2831, %v3335
      %v3337 = vpop.f32.mrf.mxu0
      %v3338 = vadd.f32 %v2835, %v3337
      %v3339 = vpop.f32.mrf.mxu0
      %v3340 = vadd.f32 %v2831, %v3339
      %v3341 = vpop.f32.mrf.mxu0
      %v3342 = vadd.f32 %v2835, %v3341
      %3343 = vdwg.mxu0
      %3344 = vmatprep.subr.bf16.mxu0 %v3091
      %3345 = vmatpush1.bf16.msra.mxu0 %v3090
      %3346 = vmatprep.subr.bf16.mxu0 %v3084
      %3347 = vmatpush1.bf16.msra.mxu0 %v3083
      %3348 = vmatprep.subr.bf16.mxu0 %v3077
      %3349 = vmatpush1.bf16.msra.mxu0 %v3076
      %3350 = vmatprep.subr.bf16.mxu0 %v3070
      %3351 = vmatpush1.bf16.msra.mxu0 %v3069
      %3352 = vmatprep.subr.bf16.mxu0 %v3063
      %3353 = vmatpush1.bf16.msra.mxu0 %v3062
      %3354 = vmatprep.subr.bf16.mxu0 %v3056
      %3355 = vmatpush1.bf16.msra.mxu0 %v3055
      %3356 = vmatprep.subr.bf16.mxu0 %v3049
      %3357 = vmatpush1.bf16.msra.mxu0 %v3048
      %3358 = vmatprep.subr.bf16.mxu0 %v3042
      %3359 = vmatpush1.bf16.msra.mxu0 %v3041
      %3360 = vmatprep.subr.bf16.mxu0 0
      %3361 = vmatpush2.bf16.msra.mxu0 0
      %3362 = vmatprep.subr.bf16.mxu0 0
      %3363 = vmatpush2.bf16.msra.mxu0 0
      %3364 = vmatprep.subr.bf16.mxu0 0
      %3365 = vmatpush2.bf16.msra.mxu0 0
      %3366 = vmatprep.subr.bf16.mxu0 0
      %3367 = vmatpush2.bf16.msra.mxu0 0
      %3368 = vmatprep.subr.bf16.mxu0 0
      %3369 = vmatpush2.bf16.msra.mxu0 0
      %3370 = vmatprep.subr.bf16.mxu0 0
      %3371 = vmatpush2.bf16.msra.mxu0 0
      %3372 = vmatprep.subr.bf16.mxu0 0
      %3373 = vmatpush2.bf16.msra.mxu0 0
      %3374 = vmatprep.subr.bf16.mxu0 0
      %3375 = vmatpush2.bf16.msra.mxu0 0
      %3376 = vmatprep.mubr.bf16.mxu0 0
      %3377 = vmatmul.mubr.bf16.gmra.mxu0 %v2746
      %v3378 = vpop.f32.mrf.mxu0
      %v3379 = vadd.f32 %v2839, %v3378
      %v3380 = vpop.f32.mrf.mxu0
      %v3381 = vadd.f32 %v2843, %v3380
      %v3382 = vpop.f32.mrf.mxu0
      %v3383 = vadd.f32 %v2839, %v3382
      %v3384 = vpop.f32.mrf.mxu0
      %v3385 = vadd.f32 %v2843, %v3384
      %3386 = vmatprep.mubr.bf16.mxu0 0
      %3387 = vmatmul.mubr.bf16.gmra.mxu0 %v2747
      %v3388 = vpop.f32.mrf.mxu0
      %v3389 = vadd.f32 %v2839, %v3388
      %v3390 = vpop.f32.mrf.mxu0
      %v3391 = vadd.f32 %v2843, %v3390
      %v3392 = vpop.f32.mrf.mxu0
      %v3393 = vadd.f32 %v2839, %v3392
      %v3394 = vpop.f32.mrf.mxu0
      %v3395 = vadd.f32 %v2843, %v3394
      %3396 = vmatprep.mubr.bf16.mxu0 0
      %3397 = vmatmul.mubr.bf16.gmra.mxu0 %v2748
      %v3398 = vpop.f32.mrf.mxu0
      %v3399 = vadd.f32 %v2839, %v3398
      %v3400 = vpop.f32.mrf.mxu0
      %v3401 = vadd.f32 %v2843, %v3400
      %v3402 = vpop.f32.mrf.mxu0
      %v3403 = vadd.f32 %v2839, %v3402
      %v3404 = vpop.f32.mrf.mxu0
      %v3405 = vadd.f32 %v2843, %v3404
      %3406 = vmatprep.mubr.bf16.mxu0 0
      %3407 = vmatmul.mubr.bf16.gmra.mxu0 %v2749
      %v3408 = vpop.f32.mrf.mxu0
      %v3409 = vadd.f32 %v2839, %v3408
      %v3410 = vpop.f32.mrf.mxu0
      %v3411 = vadd.f32 %v2843, %v3410
      %v3412 = vpop.f32.mrf.mxu0
      %v3413 = vadd.f32 %v2839, %v3412
      %v3414 = vpop.f32.mrf.mxu0
      %v3415 = vadd.f32 %v2843, %v3414
      %3416 = vmatprep.mubr.bf16.mxu0 0
      %3417 = vmatmul.mubr.bf16.gmra.mxu0 %v2750
      %v3418 = vpop.f32.mrf.mxu0
      %v3419 = vadd.f32 %v2839, %v3418
      %v3420 = vpop.f32.mrf.mxu0
      %v3421 = vadd.f32 %v2843, %v3420
      %v3422 = vpop.f32.mrf.mxu0
      %v3423 = vadd.f32 %v2839, %v3422
      %v3424 = vpop.f32.mrf.mxu0
      %v3425 = vadd.f32 %v2843, %v3424
      %3426 = vmatprep.mubr.bf16.mxu0 0
      %3427 = vmatmul.mubr.bf16.gmra.mxu0 %v2751
      %v3428 = vpop.f32.mrf.mxu0
      %v3429 = vadd.f32 %v2839, %v3428
      %v3430 = vpop.f32.mrf.mxu0
      %v3431 = vadd.f32 %v2843, %v3430
      %v3432 = vpop.f32.mrf.mxu0
      %v3433 = vadd.f32 %v2839, %v3432
      %v3434 = vpop.f32.mrf.mxu0
      %v3435 = vadd.f32 %v2843, %v3434
      %3436 = vmatprep.mubr.bf16.mxu0 0
      %3437 = vmatmul.mubr.bf16.gmra.mxu0 %v2752
      %v3438 = vpop.f32.mrf.mxu0
      %v3439 = vadd.f32 %v2839, %v3438
      %v3440 = vpop.f32.mrf.mxu0
      %v3441 = vadd.f32 %v2843, %v3440
      %v3442 = vpop.f32.mrf.mxu0
      %v3443 = vadd.f32 %v2839, %v3442
      %v3444 = vpop.f32.mrf.mxu0
      %v3445 = vadd.f32 %v2843, %v3444
      %3446 = vmatprep.mubr.bf16.mxu0 0
      %3447 = vmatmul.mubr.bf16.gmra.mxu0 %v2753
      %v3448 = vpop.f32.mrf.mxu0
      %v3449 = vadd.f32 %v2839, %v3448
      %v3450 = vpop.f32.mrf.mxu0
      %v3451 = vadd.f32 %v2843, %v3450
      %v3452 = vpop.f32.mrf.mxu0
      %v3453 = vadd.f32 %v2839, %v3452
      %v3454 = vpop.f32.mrf.mxu0
      %v3455 = vadd.f32 %v2843, %v3454
      %3456 = vmatprep.mubr.bf16.mxu0 0
      %3457 = vmatmul.mubr.bf16.gmra.mxu0 %v2754
      %v3458 = vpop.f32.mrf.mxu0
      %v3459 = vadd.f32 %v2839, %v3458
      %v3460 = vpop.f32.mrf.mxu0
      %v3461 = vadd.f32 %v2843, %v3460
      %v3462 = vpop.f32.mrf.mxu0
      %v3463 = vadd.f32 %v2839, %v3462
      %v3464 = vpop.f32.mrf.mxu0
      %v3465 = vadd.f32 %v2843, %v3464
      %3466 = vmatprep.mubr.bf16.mxu0 0
      %3467 = vmatmul.mubr.bf16.gmra.mxu0 %v2755
      %v3468 = vpop.f32.mrf.mxu0
      %v3469 = vadd.f32 %v2839, %v3468
      %v3470 = vpop.f32.mrf.mxu0
      %v3471 = vadd.f32 %v2843, %v3470
      %v3472 = vpop.f32.mrf.mxu0
      %v3473 = vadd.f32 %v2839, %v3472
      %v3474 = vpop.f32.mrf.mxu0
      %v3475 = vadd.f32 %v2843, %v3474
      %3476 = vmatprep.mubr.bf16.mxu0 0
      %3477 = vmatmul.mubr.bf16.gmra.mxu0 %v2756
      %v3478 = vpop.f32.mrf.mxu0
      %v3479 = vadd.f32 %v2839, %v3478
      %v3480 = vpop.f32.mrf.mxu0
      %v3481 = vadd.f32 %v2843, %v3480
      %v3482 = vpop.f32.mrf.mxu0
      %v3483 = vadd.f32 %v2839, %v3482
      %v3484 = vpop.f32.mrf.mxu0
      %v3485 = vadd.f32 %v2843, %v3484
      %3486 = vmatprep.mubr.bf16.mxu0 0
      %3487 = vmatmul.mubr.bf16.gmra.mxu0 %v2757
      %v3488 = vpop.f32.mrf.mxu0
      %v3489 = vadd.f32 %v2839, %v3488
      %v3490 = vpop.f32.mrf.mxu0
      %v3491 = vadd.f32 %v2843, %v3490
      %v3492 = vpop.f32.mrf.mxu0
      %v3493 = vadd.f32 %v2839, %v3492
      %v3494 = vpop.f32.mrf.mxu0
      %v3495 = vadd.f32 %v2843, %v3494
      %3496 = vmatprep.mubr.bf16.mxu0 0
      %3497 = vmatmul.mubr.bf16.gmra.mxu0 %v2758
      %v3498 = vpop.f32.mrf.mxu0
      %v3499 = vadd.f32 %v2839, %v3498
      %v3500 = vpop.f32.mrf.mxu0
      %v3501 = vadd.f32 %v2843, %v3500
      %v3502 = vpop.f32.mrf.mxu0
      %v3503 = vadd.f32 %v2839, %v3502
      %v3504 = vpop.f32.mrf.mxu0
      %v3505 = vadd.f32 %v2843, %v3504
      %3506 = vmatprep.mubr.bf16.mxu0 0
      %3507 = vmatmul.mubr.bf16.gmra.mxu0 %v2759
      %v3508 = vpop.f32.mrf.mxu0
      %v3509 = vadd.f32 %v2839, %v3508
      %v3510 = vpop.f32.mrf.mxu0
      %v3511 = vadd.f32 %v2843, %v3510
      %v3512 = vpop.f32.mrf.mxu0
      %v3513 = vadd.f32 %v2839, %v3512
      %v3514 = vpop.f32.mrf.mxu0
      %v3515 = vadd.f32 %v2843, %v3514
      %3516 = vmatprep.mubr.bf16.mxu0 0
      %3517 = vmatmul.mubr.bf16.gmra.mxu0 %v2760
      %v3518 = vpop.f32.mrf.mxu0
      %v3519 = vadd.f32 %v2839, %v3518
      %v3520 = vpop.f32.mrf.mxu0
      %v3521 = vadd.f32 %v2843, %v3520
      %v3522 = vpop.f32.mrf.mxu0
      %v3523 = vadd.f32 %v2839, %v3522
      %v3524 = vpop.f32.mrf.mxu0
      %v3525 = vadd.f32 %v2843, %v3524
      %3526 = vmatprep.mubr.bf16.mxu0 0
      %3527 = vmatmul.mubr.bf16.gmra.mxu0 %v2761
      %v3528 = vpop.f32.mrf.mxu0
      %v3529 = vadd.f32 %v2839, %v3528
      %v3530 = vpop.f32.mrf.mxu0
      %v3531 = vadd.f32 %v2843, %v3530
      %v3532 = vpop.f32.mrf.mxu0
      %v3533 = vadd.f32 %v2839, %v3532
      %v3534 = vpop.f32.mrf.mxu0
      %v3535 = vadd.f32 %v2843, %v3534
      %3536 = vdwg.mxu0
      %3537 = vmatprep.subr.bf16.mxu0 %v3093
      %3538 = vmatpush1.bf16.msra.mxu0 %v3092
      %3539 = vmatprep.subr.bf16.mxu0 %v3086
      %3540 = vmatpush1.bf16.msra.mxu0 %v3085
      %3541 = vmatprep.subr.bf16.mxu0 %v3079
      %3542 = vmatpush1.bf16.msra.mxu0 %v3078
      %3543 = vmatprep.subr.bf16.mxu0 %v3072
      %3544 = vmatpush1.bf16.msra.mxu0 %v3071
      %3545 = vmatprep.subr.bf16.mxu0 %v3065
      %3546 = vmatpush1.bf16.msra.mxu0 %v3064
      %3547 = vmatprep.subr.bf16.mxu0 %v3058
      %3548 = vmatpush1.bf16.msra.mxu0 %v3057
      %3549 = vmatprep.subr.bf16.mxu0 %v3051
      %3550 = vmatpush1.bf16.msra.mxu0 %v3050
      %3551 = vmatprep.subr.bf16.mxu0 %v3044
      %3552 = vmatpush1.bf16.msra.mxu0 %v3043
      %3553 = vmatprep.subr.bf16.mxu0 0
      %3554 = vmatpush2.bf16.msra.mxu0 0
      %3555 = vmatprep.subr.bf16.mxu0 0
      %3556 = vmatpush2.bf16.msra.mxu0 0
      %3557 = vmatprep.subr.bf16.mxu0 0
      %3558 = vmatpush2.bf16.msra.mxu0 0
      %3559 = vmatprep.subr.bf16.mxu0 0
      %3560 = vmatpush2.bf16.msra.mxu0 0
      %3561 = vmatprep.subr.bf16.mxu0 0
      %3562 = vmatpush2.bf16.msra.mxu0 0
      %3563 = vmatprep.subr.bf16.mxu0 0
      %3564 = vmatpush2.bf16.msra.mxu0 0
      %3565 = vmatprep.subr.bf16.mxu0 0
      %3566 = vmatpush2.bf16.msra.mxu0 0
      %3567 = vmatprep.subr.bf16.mxu0 0
      %3568 = vmatpush2.bf16.msra.mxu0 0
      %3569 = vmatprep.mubr.bf16.mxu0 0
      %3570 = vmatmul.mubr.bf16.gmra.mxu0 %v2746
      %v3571 = vpop.f32.mrf.mxu0
      %v3572 = vadd.f32 %v2847, %v3571
      %v3573 = vpop.f32.mrf.mxu0
      %v3574 = vadd.f32 %v2851, %v3573
      %v3575 = vpop.f32.mrf.mxu0
      %v3576 = vadd.f32 %v2847, %v3575
      %v3577 = vpop.f32.mrf.mxu0
      %v3578 = vadd.f32 %v2851, %v3577
      %3579 = vmatprep.mubr.bf16.mxu0 0
      %3580 = vmatmul.mubr.bf16.gmra.mxu0 %v2747
      %v3581 = vpop.f32.mrf.mxu0
      %v3582 = vadd.f32 %v2847, %v3581
      %v3583 = vpop.f32.mrf.mxu0
      %v3584 = vadd.f32 %v2851, %v3583
      %v3585 = vpop.f32.mrf.mxu0
      %v3586 = vadd.f32 %v2847, %v3585
      %v3587 = vpop.f32.mrf.mxu0
      %v3588 = vadd.f32 %v2851, %v3587
      %3589 = vmatprep.mubr.bf16.mxu0 0
      %3590 = vmatmul.mubr.bf16.gmra.mxu0 %v2748
      %v3591 = vpop.f32.mrf.mxu0
      %v3592 = vadd.f32 %v2847, %v3591
      %v3593 = vpop.f32.mrf.mxu0
      %v3594 = vadd.f32 %v2851, %v3593
      %v3595 = vpop.f32.mrf.mxu0
      %v3596 = vadd.f32 %v2847, %v3595
      %v3597 = vpop.f32.mrf.mxu0
      %v3598 = vadd.f32 %v2851, %v3597
      %3599 = vmatprep.mubr.bf16.mxu0 0
      %3600 = vmatmul.mubr.bf16.gmra.mxu0 %v2749
      %v3601 = vpop.f32.mrf.mxu0
      %v3602 = vadd.f32 %v2847, %v3601
      %v3603 = vpop.f32.mrf.mxu0
      %v3604 = vadd.f32 %v2851, %v3603
      %v3605 = vpop.f32.mrf.mxu0
      %v3606 = vadd.f32 %v2847, %v3605
      %v3607 = vpop.f32.mrf.mxu0
      %v3608 = vadd.f32 %v2851, %v3607
      %3609 = vmatprep.mubr.bf16.mxu0 0
      %3610 = vmatmul.mubr.bf16.gmra.mxu0 %v2750
      %v3611 = vpop.f32.mrf.mxu0
      %v3612 = vadd.f32 %v2847, %v3611
      %v3613 = vpop.f32.mrf.mxu0
      %v3614 = vadd.f32 %v2851, %v3613
      %v3615 = vpop.f32.mrf.mxu0
      %v3616 = vadd.f32 %v2847, %v3615
      %v3617 = vpop.f32.mrf.mxu0
      %v3618 = vadd.f32 %v2851, %v3617
      %3619 = vmatprep.mubr.bf16.mxu0 0
      %3620 = vmatmul.mubr.bf16.gmra.mxu0 %v2751
      %v3621 = vpop.f32.mrf.mxu0
      %v3622 = vadd.f32 %v2847, %v3621
      %v3623 = vpop.f32.mrf.mxu0
      %v3624 = vadd.f32 %v2851, %v3623
      %v3625 = vpop.f32.mrf.mxu0
      %v3626 = vadd.f32 %v2847, %v3625
      %v3627 = vpop.f32.mrf.mxu0
      %v3628 = vadd.f32 %v2851, %v3627
      %3629 = vmatprep.mubr.bf16.mxu0 0
      %3630 = vmatmul.mubr.bf16.gmra.mxu0 %v2752
      %v3631 = vpop.f32.mrf.mxu0
      %v3632 = vadd.f32 %v2847, %v3631
      %v3633 = vpop.f32.mrf.mxu0
      %v3634 = vadd.f32 %v2851, %v3633
      %v3635 = vpop.f32.mrf.mxu0
      %v3636 = vadd.f32 %v2847, %v3635
      %v3637 = vpop.f32.mrf.mxu0
      %v3638 = vadd.f32 %v2851, %v3637
      %3639 = vmatprep.mubr.bf16.mxu0 0
      %3640 = vmatmul.mubr.bf16.gmra.mxu0 %v2753
      %v3641 = vpop.f32.mrf.mxu0
      %v3642 = vadd.f32 %v2847, %v3641
      %v3643 = vpop.f32.mrf.mxu0
      %v3644 = vadd.f32 %v2851, %v3643
      %v3645 = vpop.f32.mrf.mxu0
      %v3646 = vadd.f32 %v2847, %v3645
      %v3647 = vpop.f32.mrf.mxu0
      %v3648 = vadd.f32 %v2851, %v3647
      %3649 = vmatprep.mubr.bf16.mxu0 0
      %3650 = vmatmul.mubr.bf16.gmra.mxu0 %v2754
      %v3651 = vpop.f32.mrf.mxu0
      %v3652 = vadd.f32 %v2847, %v3651
      %v3653 = vpop.f32.mrf.mxu0
      %v3654 = vadd.f32 %v2851, %v3653
      %v3655 = vpop.f32.mrf.mxu0
      %v3656 = vadd.f32 %v2847, %v3655
      %v3657 = vpop.f32.mrf.mxu0
      %v3658 = vadd.f32 %v2851, %v3657
      %3659 = vmatprep.mubr.bf16.mxu0 0
      %3660 = vmatmul.mubr.bf16.gmra.mxu0 %v2755
      %v3661 = vpop.f32.mrf.mxu0
      %v3662 = vadd.f32 %v2847, %v3661
      %v3663 = vpop.f32.mrf.mxu0
      %v3664 = vadd.f32 %v2851, %v3663
      %v3665 = vpop.f32.mrf.mxu0
      %v3666 = vadd.f32 %v2847, %v3665
      %v3667 = vpop.f32.mrf.mxu0
      %v3668 = vadd.f32 %v2851, %v3667
      %3669 = vmatprep.mubr.bf16.mxu0 0
      %3670 = vmatmul.mubr.bf16.gmra.mxu0 %v2756
      %v3671 = vpop.f32.mrf.mxu0
      %v3672 = vadd.f32 %v2847, %v3671
      %v3673 = vpop.f32.mrf.mxu0
      %v3674 = vadd.f32 %v2851, %v3673
      %v3675 = vpop.f32.mrf.mxu0
      %v3676 = vadd.f32 %v2847, %v3675
      %v3677 = vpop.f32.mrf.mxu0
      %v3678 = vadd.f32 %v2851, %v3677
      %3679 = vmatprep.mubr.bf16.mxu0 0
      %3680 = vmatmul.mubr.bf16.gmra.mxu0 %v2757
      %v3681 = vpop.f32.mrf.mxu0
      %v3682 = vadd.f32 %v2847, %v3681
      %v3683 = vpop.f32.mrf.mxu0
      %v3684 = vadd.f32 %v2851, %v3683
      %v3685 = vpop.f32.mrf.mxu0
      %v3686 = vadd.f32 %v2847, %v3685
      %v3687 = vpop.f32.mrf.mxu0
      %v3688 = vadd.f32 %v2851, %v3687
      %3689 = vmatprep.mubr.bf16.mxu0 0
      %3690 = vmatmul.mubr.bf16.gmra.mxu0 %v2758
      %v3691 = vpop.f32.mrf.mxu0
      %v3692 = vadd.f32 %v2847, %v3691
      %v3693 = vpop.f32.mrf.mxu0
      %v3694 = vadd.f32 %v2851, %v3693
      %v3695 = vpop.f32.mrf.mxu0
      %v3696 = vadd.f32 %v2847, %v3695
      %v3697 = vpop.f32.mrf.mxu0
      %v3698 = vadd.f32 %v2851, %v3697
      %3699 = vmatprep.mubr.bf16.mxu0 0
      %3700 = vmatmul.mubr.bf16.gmra.mxu0 %v2759
      %v3701 = vpop.f32.mrf.mxu0
      %v3702 = vadd.f32 %v2847, %v3701
      %v3703 = vpop.f32.mrf.mxu0
      %v3704 = vadd.f32 %v2851, %v3703
      %v3705 = vpop.f32.mrf.mxu0
      %v3706 = vadd.f32 %v2847, %v3705
      %v3707 = vpop.f32.mrf.mxu0
      %v3708 = vadd.f32 %v2851, %v3707
      %3709 = vmatprep.mubr.bf16.mxu0 0
      %3710 = vmatmul.mubr.bf16.gmra.mxu0 %v2760
      %v3711 = vpop.f32.mrf.mxu0
      %v3712 = vadd.f32 %v2847, %v3711
      %v3713 = vpop.f32.mrf.mxu0
      %v3714 = vadd.f32 %v2851, %v3713
      %v3715 = vpop.f32.mrf.mxu0
      %v3716 = vadd.f32 %v2847, %v3715
      %v3717 = vpop.f32.mrf.mxu0
      %v3718 = vadd.f32 %v2851, %v3717
      %3719 = vmatprep.mubr.bf16.mxu0 0
      %3720 = vmatmul.mubr.bf16.gmra.mxu0 %v2761
      %v3721 = vpop.f32.mrf.mxu0
      %v3722 = vadd.f32 %v2847, %v3721
      %v3723 = vpop.f32.mrf.mxu0
      %v3724 = vadd.f32 %v2851, %v3723
      %v3725 = vpop.f32.mrf.mxu0
      %v3726 = vadd.f32 %v2847, %v3725
      %v3727 = vpop.f32.mrf.mxu0
      %v3728 = vadd.f32 %v2851, %v3727
      %3729 = vdwg.mxu0
      %3730 = vmatprep.subr.bf16.mxu0 0
      %3731 = vmatpush1.bf16.msra.mxu0 %v3094
      %3732 = vmatprep.subr.bf16.mxu0 0
      %3733 = vmatpush1.bf16.msra.mxu0 %v3087
      %3734 = vmatprep.subr.bf16.mxu0 0
      %3735 = vmatpush1.bf16.msra.mxu0 %v3080
      %3736 = vmatprep.subr.bf16.mxu0 0
      %3737 = vmatpush1.bf16.msra.mxu0 %v3073
      %3738 = vmatprep.subr.bf16.mxu0 0
      %3739 = vmatpush1.bf16.msra.mxu0 %v3066
      %3740 = vmatprep.subr.bf16.mxu0 0
      %3741 = vmatpush1.bf16.msra.mxu0 %v3059
      %3742 = vmatprep.subr.bf16.mxu0 0
      %3743 = vmatpush1.bf16.msra.mxu0 %v3052
      %3744 = vmatprep.subr.bf16.mxu0 0
      %3745 = vmatpush1.bf16.msra.mxu0 %v3045
      %3746 = vmatprep.subr.bf16.mxu0 0
      %3747 = vmatpush2.bf16.msra.mxu0 0
      %3748 = vmatprep.subr.bf16.mxu0 0
      %3749 = vmatpush2.bf16.msra.mxu0 0
      %3750 = vmatprep.subr.bf16.mxu0 0
      %3751 = vmatpush2.bf16.msra.mxu0 0
      %3752 = vmatprep.subr.bf16.mxu0 0
      %3753 = vmatpush2.bf16.msra.mxu0 0
      %3754 = vmatprep.subr.bf16.mxu0 0
      %3755 = vmatpush2.bf16.msra.mxu0 0
      %3756 = vmatprep.subr.bf16.mxu0 0
      %3757 = vmatpush2.bf16.msra.mxu0 0
      %3758 = vmatprep.subr.bf16.mxu0 0
      %3759 = vmatpush2.bf16.msra.mxu0 0
      %3760 = vmatprep.subr.bf16.mxu0 0
      %3761 = vmatpush2.bf16.msra.mxu0 0
      %3762 = vmatprep.mubr.bf16.mxu0 0
      %3763 = vmatmul.mubr.bf16.gmra.mxu0 %v2746
      %v3764 = vpop.f32.mrf.mxu0
      %v3765 = vadd.f32 %v2855, %v3764
      %v3766 = vpop.f32.mrf.mxu0
      %v3767 = vpop.f32.mrf.mxu0
      %v3768 = vadd.f32 %v2855, %v3767
      %v3769 = vpop.f32.mrf.mxu0
      %3770 = vmatprep.mubr.bf16.mxu0 0
      %3771 = vmatmul.mubr.bf16.gmra.mxu0 %v2747
      %v3772 = vpop.f32.mrf.mxu0
      %v3773 = vadd.f32 %v2855, %v3772
      %v3774 = vpop.f32.mrf.mxu0
      %v3775 = vpop.f32.mrf.mxu0
      %v3776 = vadd.f32 %v2855, %v3775
      %v3777 = vpop.f32.mrf.mxu0
      %3778 = vmatprep.mubr.bf16.mxu0 0
      %3779 = vmatmul.mubr.bf16.gmra.mxu0 %v2748
      %v3780 = vpop.f32.mrf.mxu0
      %v3781 = vadd.f32 %v2855, %v3780
      %v3782 = vpop.f32.mrf.mxu0
      %v3783 = vpop.f32.mrf.mxu0
      %v3784 = vadd.f32 %v2855, %v3783
      %v3785 = vpop.f32.mrf.mxu0
      %3786 = vmatprep.mubr.bf16.mxu0 0
      %3787 = vmatmul.mubr.bf16.gmra.mxu0 %v2749
      %v3788 = vpop.f32.mrf.mxu0
      %v3789 = vadd.f32 %v2855, %v3788
      %v3790 = vpop.f32.mrf.mxu0
      %v3791 = vpop.f32.mrf.mxu0
      %v3792 = vadd.f32 %v2855, %v3791
      %v3793 = vpop.f32.mrf.mxu0
      %3794 = vmatprep.mubr.bf16.mxu0 0
      %3795 = vmatmul.mubr.bf16.gmra.mxu0 %v2750
      %v3796 = vpop.f32.mrf.mxu0
      %v3797 = vadd.f32 %v2855, %v3796
      %v3798 = vpop.f32.mrf.mxu0
      %v3799 = vpop.f32.mrf.mxu0
      %v3800 = vadd.f32 %v2855, %v3799
      %v3801 = vpop.f32.mrf.mxu0
      %3802 = vmatprep.mubr.bf16.mxu0 0
      %3803 = vmatmul.mubr.bf16.gmra.mxu0 %v2751
      %v3804 = vpop.f32.mrf.mxu0
      %v3805 = vadd.f32 %v2855, %v3804
      %v3806 = vpop.f32.mrf.mxu0
      %v3807 = vpop.f32.mrf.mxu0
      %v3808 = vadd.f32 %v2855, %v3807
      %v3809 = vpop.f32.mrf.mxu0
      %3810 = vmatprep.mubr.bf16.mxu0 0
      %3811 = vmatmul.mubr.bf16.gmra.mxu0 %v2752
      %v3812 = vpop.f32.mrf.mxu0
      %v3813 = vadd.f32 %v2855, %v3812
      %v3814 = vpop.f32.mrf.mxu0
      %v3815 = vpop.f32.mrf.mxu0
      %v3816 = vadd.f32 %v2855, %v3815
      %v3817 = vpop.f32.mrf.mxu0
      %3818 = vmatprep.mubr.bf16.mxu0 0
      %3819 = vmatmul.mubr.bf16.gmra.mxu0 %v2753
      %v3820 = vpop.f32.mrf.mxu0
      %v3821 = vadd.f32 %v2855, %v3820
      %v3822 = vpop.f32.mrf.mxu0
      %v3823 = vpop.f32.mrf.mxu0
      %v3824 = vadd.f32 %v2855, %v3823
      %v3825 = vpop.f32.mrf.mxu0
      %3826 = vmatprep.mubr.bf16.mxu0 0
      %3827 = vmatmul.mubr.bf16.gmra.mxu0 %v2754
      %v3828 = vpop.f32.mrf.mxu0
      %v3829 = vadd.f32 %v2855, %v3828
      %v3830 = vpop.f32.mrf.mxu0
      %v3831 = vpop.f32.mrf.mxu0
      %v3832 = vadd.f32 %v2855, %v3831
      %v3833 = vpop.f32.mrf.mxu0
      %3834 = vmatprep.mubr.bf16.mxu0 0
      %3835 = vmatmul.mubr.bf16.gmra.mxu0 %v2755
      %v3836 = vpop.f32.mrf.mxu0
      %v3837 = vadd.f32 %v2855, %v3836
      %v3838 = vpop.f32.mrf.mxu0
      %v3839 = vpop.f32.mrf.mxu0
      %v3840 = vadd.f32 %v2855, %v3839
      %v3841 = vpop.f32.mrf.mxu0
      %3842 = vmatprep.mubr.bf16.mxu0 0
      %3843 = vmatmul.mubr.bf16.gmra.mxu0 %v2756
      %v3844 = vpop.f32.mrf.mxu0
      %v3845 = vadd.f32 %v2855, %v3844
      %v3846 = vpop.f32.mrf.mxu0
      %v3847 = vpop.f32.mrf.mxu0
      %v3848 = vadd.f32 %v2855, %v3847
      %v3849 = vpop.f32.mrf.mxu0
      %3850 = vmatprep.mubr.bf16.mxu0 0
      %3851 = vmatmul.mubr.bf16.gmra.mxu0 %v2757
      %v3852 = vpop.f32.mrf.mxu0
      %v3853 = vadd.f32 %v2855, %v3852
      %v3854 = vpop.f32.mrf.mxu0
      %v3855 = vpop.f32.mrf.mxu0
      %v3856 = vadd.f32 %v2855, %v3855
      %v3857 = vpop.f32.mrf.mxu0
      %3858 = vmatprep.mubr.bf16.mxu0 0
      %3859 = vmatmul.mubr.bf16.gmra.mxu0 %v2758
      %v3860 = vpop.f32.mrf.mxu0
      %v3861 = vadd.f32 %v2855, %v3860
      %v3862 = vpop.f32.mrf.mxu0
      %v3863 = vpop.f32.mrf.mxu0
      %v3864 = vadd.f32 %v2855, %v3863
      %v3865 = vpop.f32.mrf.mxu0
      %3866 = vmatprep.mubr.bf16.mxu0 0
      %3867 = vmatmul.mubr.bf16.gmra.mxu0 %v2759
      %v3868 = vpop.f32.mrf.mxu0
      %v3869 = vadd.f32 %v2855, %v3868
      %v3870 = vpop.f32.mrf.mxu0
      %v3871 = vpop.f32.mrf.mxu0
      %v3872 = vadd.f32 %v2855, %v3871
      %v3873 = vpop.f32.mrf.mxu0
      %3874 = vmatprep.mubr.bf16.mxu0 0
      %3875 = vmatmul.mubr.bf16.gmra.mxu0 %v2760
      %v3876 = vpop.f32.mrf.mxu0
      %v3877 = vadd.f32 %v2855, %v3876
      %v3878 = vpop.f32.mrf.mxu0
      %v3879 = vpop.f32.mrf.mxu0
      %v3880 = vadd.f32 %v2855, %v3879
      %v3881 = vpop.f32.mrf.mxu0
      %3882 = vmatprep.mubr.bf16.mxu0 0
      %3883 = vmatmul.mubr.bf16.gmra.mxu0 %v2761
      %v3884 = vpop.f32.mrf.mxu0
      %v3885 = vadd.f32 %v2855, %v3884
      %v3886 = vpop.f32.mrf.mxu0
      %v3887 = vpop.f32.mrf.mxu0
      %v3888 = vadd.f32 %v2855, %v3887
      %v3889 = vpop.f32.mrf.mxu0
      %3890 = vdwg.mxu0
      %v3891 = vxor.u32 %v3186, 2147483648
      %v3892 = vxor.u32 %v3188, 2147483648
      %v3893 = vxor.u32 %v3379, 2147483648
      %v3894 = vxor.u32 %v3381, 2147483648
      %v3895 = vxor.u32 %v3572, 2147483648
      %v3896 = vxor.u32 %v3574, 2147483648
      %v3897 = vxor.u32 %v3765, 2147483648
      %v3898 = vxor.u32 %v3190, 2147483648
      %v3899 = vxor.u32 %v3192, 2147483648
      %v3900 = vxor.u32 %v3383, 2147483648
      %v3901 = vxor.u32 %v3385, 2147483648
      %v3902 = vxor.u32 %v3576, 2147483648
      %v3903 = vxor.u32 %v3578, 2147483648
      %v3904 = vxor.u32 %v3768, 2147483648
      %v3905 = vxor.u32 %v3196, 2147483648
      %v3906 = vxor.u32 %v3198, 2147483648
      %v3907 = vxor.u32 %v3389, 2147483648
      %v3908 = vxor.u32 %v3391, 2147483648
      %v3909 = vxor.u32 %v3582, 2147483648
      %v3910 = vxor.u32 %v3584, 2147483648
      %v3911 = vxor.u32 %v3773, 2147483648
      %v3912 = vxor.u32 %v3200, 2147483648
      %v3913 = vxor.u32 %v3202, 2147483648
      %v3914 = vxor.u32 %v3393, 2147483648
      %v3915 = vxor.u32 %v3395, 2147483648
      %v3916 = vxor.u32 %v3586, 2147483648
      %v3917 = vxor.u32 %v3588, 2147483648
      %v3918 = vxor.u32 %v3776, 2147483648
      %v3919 = vxor.u32 %v3206, 2147483648
      %v3920 = vxor.u32 %v3208, 2147483648
      %v3921 = vxor.u32 %v3399, 2147483648
      %v3922 = vxor.u32 %v3401, 2147483648
      %v3923 = vxor.u32 %v3592, 2147483648
      %v3924 = vxor.u32 %v3594, 2147483648
      %v3925 = vxor.u32 %v3781, 2147483648
      %v3926 = vxor.u32 %v3210, 2147483648
      %v3927 = vxor.u32 %v3212, 2147483648
      %v3928 = vxor.u32 %v3403, 2147483648
      %v3929 = vxor.u32 %v3405, 2147483648
      %v3930 = vxor.u32 %v3596, 2147483648
      %v3931 = vxor.u32 %v3598, 2147483648
      %v3932 = vxor.u32 %v3784, 2147483648
      %v3933 = vxor.u32 %v3216, 2147483648
      %v3934 = vxor.u32 %v3218, 2147483648
      %v3935 = vxor.u32 %v3409, 2147483648
      %v3936 = vxor.u32 %v3411, 2147483648
      %v3937 = vxor.u32 %v3602, 2147483648
      %v3938 = vxor.u32 %v3604, 2147483648
      %v3939 = vxor.u32 %v3789, 2147483648
      %v3940 = vxor.u32 %v3220, 2147483648
      %v3941 = vxor.u32 %v3222, 2147483648
      %v3942 = vxor.u32 %v3413, 2147483648
      %v3943 = vxor.u32 %v3415, 2147483648
      %v3944 = vxor.u32 %v3606, 2147483648
      %v3945 = vxor.u32 %v3608, 2147483648
      %v3946 = vxor.u32 %v3792, 2147483648
      %v3947 = vxor.u32 %v3226, 2147483648
      %v3948 = vxor.u32 %v3228, 2147483648
      %v3949 = vxor.u32 %v3419, 2147483648
      %v3950 = vxor.u32 %v3421, 2147483648
      %v3951 = vxor.u32 %v3612, 2147483648
      %v3952 = vxor.u32 %v3614, 2147483648
      %v3953 = vxor.u32 %v3797, 2147483648
      %v3954 = vxor.u32 %v3230, 2147483648
      %v3955 = vxor.u32 %v3232, 2147483648
      %v3956 = vxor.u32 %v3423, 2147483648
      %v3957 = vxor.u32 %v3425, 2147483648
      %v3958 = vxor.u32 %v3616, 2147483648
      %v3959 = vxor.u32 %v3618, 2147483648
      %v3960 = vxor.u32 %v3800, 2147483648
      %v3961 = vxor.u32 %v3236, 2147483648
      %v3962 = vxor.u32 %v3238, 2147483648
      %v3963 = vxor.u32 %v3429, 2147483648
      %v3964 = vxor.u32 %v3431, 2147483648
      %v3965 = vxor.u32 %v3622, 2147483648
      %v3966 = vxor.u32 %v3624, 2147483648
      %v3967 = vxor.u32 %v3805, 2147483648
      %v3968 = vxor.u32 %v3240, 2147483648
      %v3969 = vxor.u32 %v3242, 2147483648
      %v3970 = vxor.u32 %v3433, 2147483648
      %v3971 = vxor.u32 %v3435, 2147483648
      %v3972 = vxor.u32 %v3626, 2147483648
      %v3973 = vxor.u32 %v3628, 2147483648
      %v3974 = vxor.u32 %v3808, 2147483648
      %v3975 = vxor.u32 %v3246, 2147483648
      %v3976 = vxor.u32 %v3248, 2147483648
      %v3977 = vxor.u32 %v3439, 2147483648
      %v3978 = vxor.u32 %v3441, 2147483648
      %v3979 = vxor.u32 %v3632, 2147483648
      %v3980 = vxor.u32 %v3634, 2147483648
      %v3981 = vxor.u32 %v3813, 2147483648
      %v3982 = vxor.u32 %v3250, 2147483648
      %v3983 = vxor.u32 %v3252, 2147483648
      %v3984 = vxor.u32 %v3443, 2147483648
      %v3985 = vxor.u32 %v3445, 2147483648
      %v3986 = vxor.u32 %v3636, 2147483648
      %v3987 = vxor.u32 %v3638, 2147483648
      %v3988 = vxor.u32 %v3816, 2147483648
      %v3989 = vxor.u32 %v3256, 2147483648
      %v3990 = vxor.u32 %v3258, 2147483648
      %v3991 = vxor.u32 %v3449, 2147483648
      %v3992 = vxor.u32 %v3451, 2147483648
      %v3993 = vxor.u32 %v3642, 2147483648
      %v3994 = vxor.u32 %v3644, 2147483648
      %v3995 = vxor.u32 %v3821, 2147483648
      %v3996 = vxor.u32 %v3260, 2147483648
      %v3997 = vxor.u32 %v3262, 2147483648
      %v3998 = vxor.u32 %v3453, 2147483648
      %v3999 = vxor.u32 %v3455, 2147483648
      %v4000 = vxor.u32 %v3646, 2147483648
      %v4001 = vxor.u32 %v3648, 2147483648
      %v4002 = vxor.u32 %v3824, 2147483648
      %v4003 = vxor.u32 %v3266, 2147483648
      %v4004 = vxor.u32 %v3268, 2147483648
      %v4005 = vxor.u32 %v3459, 2147483648
      %v4006 = vxor.u32 %v3461, 2147483648
      %v4007 = vxor.u32 %v3652, 2147483648
      %v4008 = vxor.u32 %v3654, 2147483648
      %v4009 = vxor.u32 %v3829, 2147483648
      %v4010 = vxor.u32 %v3270, 2147483648
      %v4011 = vxor.u32 %v3272, 2147483648
      %v4012 = vxor.u32 %v3463, 2147483648
      %v4013 = vxor.u32 %v3465, 2147483648
      %v4014 = vxor.u32 %v3656, 2147483648
      %v4015 = vxor.u32 %v3658, 2147483648
      %v4016 = vxor.u32 %v3832, 2147483648
      %v4017 = vxor.u32 %v3276, 2147483648
      %v4018 = vxor.u32 %v3278, 2147483648
      %v4019 = vxor.u32 %v3469, 2147483648
      %v4020 = vxor.u32 %v3471, 2147483648
      %v4021 = vxor.u32 %v3662, 2147483648
      %v4022 = vxor.u32 %v3664, 2147483648
      %v4023 = vxor.u32 %v3837, 2147483648
      %v4024 = vxor.u32 %v3280, 2147483648
      %v4025 = vxor.u32 %v3282, 2147483648
      %v4026 = vxor.u32 %v3473, 2147483648
      %v4027 = vxor.u32 %v3475, 2147483648
      %v4028 = vxor.u32 %v3666, 2147483648
      %v4029 = vxor.u32 %v3668, 2147483648
      %v4030 = vxor.u32 %v3840, 2147483648
      %v4031 = vxor.u32 %v3286, 2147483648
      %v4032 = vxor.u32 %v3288, 2147483648
      %v4033 = vxor.u32 %v3479, 2147483648
      %v4034 = vxor.u32 %v3481, 2147483648
      %v4035 = vxor.u32 %v3672, 2147483648
      %v4036 = vxor.u32 %v3674, 2147483648
      %v4037 = vxor.u32 %v3845, 2147483648
      %v4038 = vxor.u32 %v3290, 2147483648
      %v4039 = vxor.u32 %v3292, 2147483648
      %v4040 = vxor.u32 %v3483, 2147483648
      %v4041 = vxor.u32 %v3485, 2147483648
      %v4042 = vxor.u32 %v3676, 2147483648
      %v4043 = vxor.u32 %v3678, 2147483648
      %v4044 = vxor.u32 %v3848, 2147483648
      %v4045 = vxor.u32 %v3296, 2147483648
      %v4046 = vxor.u32 %v3298, 2147483648
      %v4047 = vxor.u32 %v3489, 2147483648
      %v4048 = vxor.u32 %v3491, 2147483648
      %v4049 = vxor.u32 %v3682, 2147483648
      %v4050 = vxor.u32 %v3684, 2147483648
      %v4051 = vxor.u32 %v3853, 2147483648
      %v4052 = vxor.u32 %v3300, 2147483648
      %v4053 = vxor.u32 %v3302, 2147483648
      %v4054 = vxor.u32 %v3493, 2147483648
      %v4055 = vxor.u32 %v3495, 2147483648
      %v4056 = vxor.u32 %v3686, 2147483648
      %v4057 = vxor.u32 %v3688, 2147483648
      %v4058 = vxor.u32 %v3856, 2147483648
      %v4059 = vxor.u32 %v3306, 2147483648
      %v4060 = vxor.u32 %v3308, 2147483648
      %v4061 = vxor.u32 %v3499, 2147483648
      %v4062 = vxor.u32 %v3501, 2147483648
      %v4063 = vxor.u32 %v3692, 2147483648
      %v4064 = vxor.u32 %v3694, 2147483648
      %v4065 = vxor.u32 %v3861, 2147483648
      %v4066 = vxor.u32 %v3310, 2147483648
      %v4067 = vxor.u32 %v3312, 2147483648
      %v4068 = vxor.u32 %v3503, 2147483648
      %v4069 = vxor.u32 %v3505, 2147483648
      %v4070 = vxor.u32 %v3696, 2147483648
      %v4071 = vxor.u32 %v3698, 2147483648
      %v4072 = vxor.u32 %v3864, 2147483648
      %v4073 = vxor.u32 %v3316, 2147483648
      %v4074 = vxor.u32 %v3318, 2147483648
      %v4075 = vxor.u32 %v3509, 2147483648
      %v4076 = vxor.u32 %v3511, 2147483648
      %v4077 = vxor.u32 %v3702, 2147483648
      %v4078 = vxor.u32 %v3704, 2147483648
      %v4079 = vxor.u32 %v3869, 2147483648
      %v4080 = vxor.u32 %v3320, 2147483648
      %v4081 = vxor.u32 %v3322, 2147483648
      %v4082 = vxor.u32 %v3513, 2147483648
      %v4083 = vxor.u32 %v3515, 2147483648
      %v4084 = vxor.u32 %v3706, 2147483648
      %v4085 = vxor.u32 %v3708, 2147483648
      %v4086 = vxor.u32 %v3872, 2147483648
      %v4087 = vxor.u32 %v3326, 2147483648
      %v4088 = vxor.u32 %v3328, 2147483648
      %v4089 = vxor.u32 %v3519, 2147483648
      %v4090 = vxor.u32 %v3521, 2147483648
      %v4091 = vxor.u32 %v3712, 2147483648
      %v4092 = vxor.u32 %v3714, 2147483648
      %v4093 = vxor.u32 %v3877, 2147483648
      %v4094 = vxor.u32 %v3330, 2147483648
      %v4095 = vxor.u32 %v3332, 2147483648
      %v4096 = vxor.u32 %v3523, 2147483648
      %v4097 = vxor.u32 %v3525, 2147483648
      %v4098 = vxor.u32 %v3716, 2147483648
      %v4099 = vxor.u32 %v3718, 2147483648
      %v4100 = vxor.u32 %v3880, 2147483648
      %v4101 = vxor.u32 %v3336, 2147483648
      %v4102 = vxor.u32 %v3338, 2147483648
      %v4103 = vxor.u32 %v3529, 2147483648
      %v4104 = vxor.u32 %v3531, 2147483648
      %v4105 = vxor.u32 %v3722, 2147483648
      %v4106 = vxor.u32 %v3724, 2147483648
      %v4107 = vxor.u32 %v3885, 2147483648
      %v4108 = vxor.u32 %v3340, 2147483648
      %v4109 = vxor.u32 %v3342, 2147483648
      %v4110 = vxor.u32 %v3533, 2147483648
      %v4111 = vxor.u32 %v3535, 2147483648
      %v4112 = vxor.u32 %v3726, 2147483648
      %v4113 = vxor.u32 %v3728, 2147483648
      %v4114 = vxor.u32 %v3888, 2147483648
      %v4115 = vmul.f32 %v3891, 1.442695
      %v4116 = vpow.pop %v4115
      %v4117 = vmul.f32 %v3892, 1.442695
      %v4118 = vpow.pop %v4117
      %v4119 = vmul.f32 %v3893, 1.442695
      %v4120 = vpow.pop %v4119
      %v4121 = vmul.f32 %v3894, 1.442695
      %v4122 = vpow.pop %v4121
      %v4123 = vmul.f32 %v3895, 1.442695
      %v4124 = vpow.pop %v4123
      %v4125 = vmul.f32 %v3896, 1.442695
      %v4126 = vpow.pop %v4125
      %v4127 = vmul.f32 %v3897, 1.442695
      %v4128 = vpow.pop %v4127
      %v4129 = vmul.f32 %v3898, 1.442695
      %v4130 = vpow.pop %v4129
      %v4131 = vmul.f32 %v3899, 1.442695
      %v4132 = vpow.pop %v4131
      %v4133 = vmul.f32 %v3900, 1.442695
      %v4134 = vpow.pop %v4133
      %v4135 = vmul.f32 %v3901, 1.442695
      %v4136 = vpow.pop %v4135
      %v4137 = vmul.f32 %v3902, 1.442695
      %v4138 = vpow.pop %v4137
      %v4139 = vmul.f32 %v3903, 1.442695
      %v4140 = vpow.pop %v4139
      %v4141 = vmul.f32 %v3904, 1.442695
      %v4142 = vpow.pop %v4141
      %v4143 = vmul.f32 %v3905, 1.442695
      %v4144 = vpow.pop %v4143
      %v4145 = vmul.f32 %v3906, 1.442695
      %v4146 = vpow.pop %v4145
      %v4147 = vmul.f32 %v3907, 1.442695
      %v4148 = vpow.pop %v4147
      %v4149 = vmul.f32 %v3908, 1.442695
      %v4150 = vpow.pop %v4149
      %v4151 = vmul.f32 %v3909, 1.442695
      %v4152 = vpow.pop %v4151
      %v4153 = vmul.f32 %v3910, 1.442695
      %v4154 = vpow.pop %v4153
      %v4155 = vmul.f32 %v3911, 1.442695
      %v4156 = vpow.pop %v4155
      %v4157 = vmul.f32 %v3912, 1.442695
      %v4158 = vpow.pop %v4157
      %v4159 = vmul.f32 %v3913, 1.442695
      %v4160 = vpow.pop %v4159
      %v4161 = vmul.f32 %v3914, 1.442695
      %v4162 = vpow.pop %v4161
      %v4163 = vmul.f32 %v3915, 1.442695
      %v4164 = vpow.pop %v4163
      %v4165 = vmul.f32 %v3916, 1.442695
      %v4166 = vpow.pop %v4165
      %v4167 = vmul.f32 %v3917, 1.442695
      %v4168 = vpow.pop %v4167
      %v4169 = vmul.f32 %v3918, 1.442695
      %v4170 = vpow.pop %v4169
      %v4171 = vmul.f32 %v3919, 1.442695
      %v4172 = vpow.pop %v4171
      %v4173 = vmul.f32 %v3920, 1.442695
      %v4174 = vpow.pop %v4173
      %v4175 = vmul.f32 %v3921, 1.442695
      %v4176 = vpow.pop %v4175
      %v4177 = vmul.f32 %v3922, 1.442695
      %v4178 = vpow.pop %v4177
      %v4179 = vmul.f32 %v3923, 1.442695
      %v4180 = vpow.pop %v4179
      %v4181 = vmul.f32 %v3924, 1.442695
      %v4182 = vpow.pop %v4181
      %v4183 = vmul.f32 %v3925, 1.442695
      %v4184 = vpow.pop %v4183
      %v4185 = vmul.f32 %v3926, 1.442695
      %v4186 = vpow.pop %v4185
      %v4187 = vmul.f32 %v3927, 1.442695
      %v4188 = vpow.pop %v4187
      %v4189 = vmul.f32 %v3928, 1.442695
      %v4190 = vpow.pop %v4189
      %v4191 = vmul.f32 %v3929, 1.442695
      %v4192 = vpow.pop %v4191
      %v4193 = vmul.f32 %v3930, 1.442695
      %v4194 = vpow.pop %v4193
      %v4195 = vmul.f32 %v3931, 1.442695
      %v4196 = vpow.pop %v4195
      %v4197 = vmul.f32 %v3932, 1.442695
      %v4198 = vpow.pop %v4197
      %v4199 = vmul.f32 %v3933, 1.442695
      %v4200 = vpow.pop %v4199
      %v4201 = vmul.f32 %v3934, 1.442695
      %v4202 = vpow.pop %v4201
      %v4203 = vmul.f32 %v3935, 1.442695
      %v4204 = vpow.pop %v4203
      %v4205 = vmul.f32 %v3936, 1.442695
      %v4206 = vpow.pop %v4205
      %v4207 = vmul.f32 %v3937, 1.442695
      %v4208 = vpow.pop %v4207
      %v4209 = vmul.f32 %v3938, 1.442695
      %v4210 = vpow.pop %v4209
      %v4211 = vmul.f32 %v3939, 1.442695
      %v4212 = vpow.pop %v4211
      %v4213 = vmul.f32 %v3940, 1.442695
      %v4214 = vpow.pop %v4213
      %v4215 = vmul.f32 %v3941, 1.442695
      %v4216 = vpow.pop %v4215
      %v4217 = vmul.f32 %v3942, 1.442695
      %v4218 = vpow.pop %v4217
      %v4219 = vmul.f32 %v3943, 1.442695
      %v4220 = vpow.pop %v4219
      %v4221 = vmul.f32 %v3944, 1.442695
      %v4222 = vpow.pop %v4221
      %v4223 = vmul.f32 %v3945, 1.442695
      %v4224 = vpow.pop %v4223
      %v4225 = vmul.f32 %v3946, 1.442695
      %v4226 = vpow.pop %v4225
      %v4227 = vmul.f32 %v3947, 1.442695
      %v4228 = vpow.pop %v4227
      %v4229 = vmul.f32 %v3948, 1.442695
      %v4230 = vpow.pop %v4229
      %v4231 = vmul.f32 %v3949, 1.442695
      %v4232 = vpow.pop %v4231
      %v4233 = vmul.f32 %v3950, 1.442695
      %v4234 = vpow.pop %v4233
      %v4235 = vmul.f32 %v3951, 1.442695
      %v4236 = vpow.pop %v4235
      %v4237 = vmul.f32 %v3952, 1.442695
      %v4238 = vpow.pop %v4237
      %v4239 = vmul.f32 %v3953, 1.442695
      %v4240 = vpow.pop %v4239
      %v4241 = vmul.f32 %v3954, 1.442695
      %v4242 = vpow.pop %v4241
      %v4243 = vmul.f32 %v3955, 1.442695
      %v4244 = vpow.pop %v4243
      %v4245 = vmul.f32 %v3956, 1.442695
      %v4246 = vpow.pop %v4245
      %v4247 = vmul.f32 %v3957, 1.442695
      %v4248 = vpow.pop %v4247
      %v4249 = vmul.f32 %v3958, 1.442695
      %v4250 = vpow.pop %v4249
      %v4251 = vmul.f32 %v3959, 1.442695
      %v4252 = vpow.pop %v4251
      %v4253 = vmul.f32 %v3960, 1.442695
      %v4254 = vpow.pop %v4253
      %v4255 = vmul.f32 %v3961, 1.442695
      %v4256 = vpow.pop %v4255
      %v4257 = vmul.f32 %v3962, 1.442695
      %v4258 = vpow.pop %v4257
      %v4259 = vmul.f32 %v3963, 1.442695
      %v4260 = vpow.pop %v4259
      %v4261 = vmul.f32 %v3964, 1.442695
      %v4262 = vpow.pop %v4261
      %v4263 = vmul.f32 %v3965, 1.442695
      %v4264 = vpow.pop %v4263
      %v4265 = vmul.f32 %v3966, 1.442695
      %v4266 = vpow.pop %v4265
      %v4267 = vmul.f32 %v3967, 1.442695
      %v4268 = vpow.pop %v4267
      %v4269 = vmul.f32 %v3968, 1.442695
      %v4270 = vpow.pop %v4269
      %v4271 = vmul.f32 %v3969, 1.442695
      %v4272 = vpow.pop %v4271
      %v4273 = vmul.f32 %v3970, 1.442695
      %v4274 = vpow.pop %v4273
      %v4275 = vmul.f32 %v3971, 1.442695
      %v4276 = vpow.pop %v4275
      %v4277 = vmul.f32 %v3972, 1.442695
      %v4278 = vpow.pop %v4277
      %v4279 = vmul.f32 %v3973, 1.442695
      %v4280 = vpow.pop %v4279
      %v4281 = vmul.f32 %v3974, 1.442695
      %v4282 = vpow.pop %v4281
      %v4283 = vmul.f32 %v3975, 1.442695
      %v4284 = vpow.pop %v4283
      %v4285 = vmul.f32 %v3976, 1.442695
      %v4286 = vpow.pop %v4285
      %v4287 = vmul.f32 %v3977, 1.442695
      %v4288 = vpow.pop %v4287
      %v4289 = vmul.f32 %v3978, 1.442695
      %v4290 = vpow.pop %v4289
      %v4291 = vmul.f32 %v3979, 1.442695
      %v4292 = vpow.pop %v4291
      %v4293 = vmul.f32 %v3980, 1.442695
      %v4294 = vpow.pop %v4293
      %v4295 = vmul.f32 %v3981, 1.442695
      %v4296 = vpow.pop %v4295
      %v4297 = vmul.f32 %v3982, 1.442695
      %v4298 = vpow.pop %v4297
      %v4299 = vmul.f32 %v3983, 1.442695
      %v4300 = vpow.pop %v4299
      %v4301 = vmul.f32 %v3984, 1.442695
      %v4302 = vpow.pop %v4301
      %v4303 = vmul.f32 %v3985, 1.442695
      %v4304 = vpow.pop %v4303
      %v4305 = vmul.f32 %v3986, 1.442695
      %v4306 = vpow.pop %v4305
      %v4307 = vmul.f32 %v3987, 1.442695
      %v4308 = vpow.pop %v4307
      %v4309 = vmul.f32 %v3988, 1.442695
      %v4310 = vpow.pop %v4309
      %v4311 = vmul.f32 %v3989, 1.442695
      %v4312 = vpow.pop %v4311
      %v4313 = vmul.f32 %v3990, 1.442695
      %v4314 = vpow.pop %v4313
      %v4315 = vmul.f32 %v3991, 1.442695
      %v4316 = vpow.pop %v4315
      %v4317 = vmul.f32 %v3992, 1.442695
      %v4318 = vpow.pop %v4317
      %v4319 = vmul.f32 %v3993, 1.442695
      %v4320 = vpow.pop %v4319
      %v4321 = vmul.f32 %v3994, 1.442695
      %v4322 = vpow.pop %v4321
      %v4323 = vmul.f32 %v3995, 1.442695
      %v4324 = vpow.pop %v4323
      %v4325 = vmul.f32 %v3996, 1.442695
      %v4326 = vpow.pop %v4325
      %v4327 = vmul.f32 %v3997, 1.442695
      %v4328 = vpow.pop %v4327
      %v4329 = vmul.f32 %v3998, 1.442695
      %v4330 = vpow.pop %v4329
      %v4331 = vmul.f32 %v3999, 1.442695
      %v4332 = vpow.pop %v4331
      %v4333 = vmul.f32 %v4000, 1.442695
      %v4334 = vpow.pop %v4333
      %v4335 = vmul.f32 %v4001, 1.442695
      %v4336 = vpow.pop %v4335
      %v4337 = vmul.f32 %v4002, 1.442695
      %v4338 = vpow.pop %v4337
      %v4339 = vmul.f32 %v4003, 1.442695
      %v4340 = vpow.pop %v4339
      %v4341 = vmul.f32 %v4004, 1.442695
      %v4342 = vpow.pop %v4341
      %v4343 = vmul.f32 %v4005, 1.442695
      %v4344 = vpow.pop %v4343
      %v4345 = vmul.f32 %v4006, 1.442695
      %v4346 = vpow.pop %v4345
      %v4347 = vmul.f32 %v4007, 1.442695
      %v4348 = vpow.pop %v4347
      %v4349 = vmul.f32 %v4008, 1.442695
      %v4350 = vpow.pop %v4349
      %v4351 = vmul.f32 %v4009, 1.442695
      %v4352 = vpow.pop %v4351
      %v4353 = vmul.f32 %v4010, 1.442695
      %v4354 = vpow.pop %v4353
      %v4355 = vmul.f32 %v4011, 1.442695
      %v4356 = vpow.pop %v4355
      %v4357 = vmul.f32 %v4012, 1.442695
      %v4358 = vpow.pop %v4357
      %v4359 = vmul.f32 %v4013, 1.442695
      %v4360 = vpow.pop %v4359
      %v4361 = vmul.f32 %v4014, 1.442695
      %v4362 = vpow.pop %v4361
      %v4363 = vmul.f32 %v4015, 1.442695
      %v4364 = vpow.pop %v4363
      %v4365 = vmul.f32 %v4016, 1.442695
      %v4366 = vpow.pop %v4365
      %v4367 = vmul.f32 %v4017, 1.442695
      %v4368 = vpow.pop %v4367
      %v4369 = vmul.f32 %v4018, 1.442695
      %v4370 = vpow.pop %v4369
      %v4371 = vmul.f32 %v4019, 1.442695
      %v4372 = vpow.pop %v4371
      %v4373 = vmul.f32 %v4020, 1.442695
      %v4374 = vpow.pop %v4373
      %v4375 = vmul.f32 %v4021, 1.442695
      %v4376 = vpow.pop %v4375
      %v4377 = vmul.f32 %v4022, 1.442695
      %v4378 = vpow.pop %v4377
      %v4379 = vmul.f32 %v4023, 1.442695
      %v4380 = vpow.pop %v4379
      %v4381 = vmul.f32 %v4024, 1.442695
      %v4382 = vpow.pop %v4381
      %v4383 = vmul.f32 %v4025, 1.442695
      %v4384 = vpow.pop %v4383
      %v4385 = vmul.f32 %v4026, 1.442695
      %v4386 = vpow.pop %v4385
      %v4387 = vmul.f32 %v4027, 1.442695
      %v4388 = vpow.pop %v4387
      %v4389 = vmul.f32 %v4028, 1.442695
      %v4390 = vpow.pop %v4389
      %v4391 = vmul.f32 %v4029, 1.442695
      %v4392 = vpow.pop %v4391
      %v4393 = vmul.f32 %v4030, 1.442695
      %v4394 = vpow.pop %v4393
      %v4395 = vmul.f32 %v4031, 1.442695
      %v4396 = vpow.pop %v4395
      %v4397 = vmul.f32 %v4032, 1.442695
      %v4398 = vpow.pop %v4397
      %v4399 = vmul.f32 %v4033, 1.442695
      %v4400 = vpow.pop %v4399
      %v4401 = vmul.f32 %v4034, 1.442695
      %v4402 = vpow.pop %v4401
      %v4403 = vmul.f32 %v4035, 1.442695
      %v4404 = vpow.pop %v4403
      %v4405 = vmul.f32 %v4036, 1.442695
      %v4406 = vpow.pop %v4405
      %v4407 = vmul.f32 %v4037, 1.442695
      %v4408 = vpow.pop %v4407
      %v4409 = vmul.f32 %v4038, 1.442695
      %v4410 = vpow.pop %v4409
      %v4411 = vmul.f32 %v4039, 1.442695
      %v4412 = vpow.pop %v4411
      %v4413 = vmul.f32 %v4040, 1.442695
      %v4414 = vpow.pop %v4413
      %v4415 = vmul.f32 %v4041, 1.442695
      %v4416 = vpow.pop %v4415
      %v4417 = vmul.f32 %v4042, 1.442695
      %v4418 = vpow.pop %v4417
      %v4419 = vmul.f32 %v4043, 1.442695
      %v4420 = vpow.pop %v4419
      %v4421 = vmul.f32 %v4044, 1.442695
      %v4422 = vpow.pop %v4421
      %v4423 = vmul.f32 %v4045, 1.442695
      %v4424 = vpow.pop %v4423
      %v4425 = vmul.f32 %v4046, 1.442695
      %v4426 = vpow.pop %v4425
      %v4427 = vmul.f32 %v4047, 1.442695
      %v4428 = vpow.pop %v4427
      %v4429 = vmul.f32 %v4048, 1.442695
      %v4430 = vpow.pop %v4429
      %v4431 = vmul.f32 %v4049, 1.442695
      %v4432 = vpow.pop %v4431
      %v4433 = vmul.f32 %v4050, 1.442695
      %v4434 = vpow.pop %v4433
      %v4435 = vmul.f32 %v4051, 1.442695
      %v4436 = vpow.pop %v4435
      %v4437 = vmul.f32 %v4052, 1.442695
      %v4438 = vpow.pop %v4437
      %v4439 = vmul.f32 %v4053, 1.442695
      %v4440 = vpow.pop %v4439
      %v4441 = vmul.f32 %v4054, 1.442695
      %v4442 = vpow.pop %v4441
      %v4443 = vmul.f32 %v4055, 1.442695
      %v4444 = vpow.pop %v4443
      %v4445 = vmul.f32 %v4056, 1.442695
      %v4446 = vpow.pop %v4445
      %v4447 = vmul.f32 %v4057, 1.442695
      %v4448 = vpow.pop %v4447
      %v4449 = vmul.f32 %v4058, 1.442695
      %v4450 = vpow.pop %v4449
      %v4451 = vmul.f32 %v4059, 1.442695
      %v4452 = vpow.pop %v4451
      %v4453 = vmul.f32 %v4060, 1.442695
      %v4454 = vpow.pop %v4453
      %v4455 = vmul.f32 %v4061, 1.442695
      %v4456 = vpow.pop %v4455
      %v4457 = vmul.f32 %v4062, 1.442695
      %v4458 = vpow.pop %v4457
      %v4459 = vmul.f32 %v4063, 1.442695
      %v4460 = vpow.pop %v4459
      %v4461 = vmul.f32 %v4064, 1.442695
      %v4462 = vpow.pop %v4461
      %v4463 = vmul.f32 %v4065, 1.442695
      %v4464 = vpow.pop %v4463
      %v4465 = vmul.f32 %v4066, 1.442695
      %v4466 = vpow.pop %v4465
      %v4467 = vmul.f32 %v4067, 1.442695
      %v4468 = vpow.pop %v4467
      %v4469 = vmul.f32 %v4068, 1.442695
      %v4470 = vpow.pop %v4469
      %v4471 = vmul.f32 %v4069, 1.442695
      %v4472 = vpow.pop %v4471
      %v4473 = vmul.f32 %v4070, 1.442695
      %v4474 = vpow.pop %v4473
      %v4475 = vmul.f32 %v4071, 1.442695
      %v4476 = vpow.pop %v4475
      %v4477 = vmul.f32 %v4072, 1.442695
      %v4478 = vpow.pop %v4477
      %v4479 = vmul.f32 %v4073, 1.442695
      %v4480 = vpow.pop %v4479
      %v4481 = vmul.f32 %v4074, 1.442695
      %v4482 = vpow.pop %v4481
      %v4483 = vmul.f32 %v4075, 1.442695
      %v4484 = vpow.pop %v4483
      %v4485 = vmul.f32 %v4076, 1.442695
      %v4486 = vpow.pop %v4485
      %v4487 = vmul.f32 %v4077, 1.442695
      %v4488 = vpow.pop %v4487
      %v4489 = vmul.f32 %v4078, 1.442695
      %v4490 = vpow.pop %v4489
      %v4491 = vmul.f32 %v4079, 1.442695
      %v4492 = vpow.pop %v4491
      %v4493 = vmul.f32 %v4080, 1.442695
      %v4494 = vpow.pop %v4493
      %v4495 = vmul.f32 %v4081, 1.442695
      %v4496 = vpow.pop %v4495
      %v4497 = vmul.f32 %v4082, 1.442695
      %v4498 = vpow.pop %v4497
      %v4499 = vmul.f32 %v4083, 1.442695
      %v4500 = vpow.pop %v4499
      %v4501 = vmul.f32 %v4084, 1.442695
      %v4502 = vpow.pop %v4501
      %v4503 = vmul.f32 %v4085, 1.442695
      %v4504 = vpow.pop %v4503
      %v4505 = vmul.f32 %v4086, 1.442695
      %v4506 = vpow.pop %v4505
      %v4507 = vmul.f32 %v4087, 1.442695
      %v4508 = vpow.pop %v4507
      %v4509 = vmul.f32 %v4088, 1.442695
      %v4510 = vpow.pop %v4509
      %v4511 = vmul.f32 %v4089, 1.442695
      %v4512 = vpow.pop %v4511
      %v4513 = vmul.f32 %v4090, 1.442695
      %v4514 = vpow.pop %v4513
      %v4515 = vmul.f32 %v4091, 1.442695
      %v4516 = vpow.pop %v4515
      %v4517 = vmul.f32 %v4092, 1.442695
      %v4518 = vpow.pop %v4517
      %v4519 = vmul.f32 %v4093, 1.442695
      %v4520 = vpow.pop %v4519
      %v4521 = vmul.f32 %v4094, 1.442695
      %v4522 = vpow.pop %v4521
      %v4523 = vmul.f32 %v4095, 1.442695
      %v4524 = vpow.pop %v4523
      %v4525 = vmul.f32 %v4096, 1.442695
      %v4526 = vpow.pop %v4525
      %v4527 = vmul.f32 %v4097, 1.442695
      %v4528 = vpow.pop %v4527
      %v4529 = vmul.f32 %v4098, 1.442695
      %v4530 = vpow.pop %v4529
      %v4531 = vmul.f32 %v4099, 1.442695
      %v4532 = vpow.pop %v4531
      %v4533 = vmul.f32 %v4100, 1.442695
      %v4534 = vpow.pop %v4533
      %v4535 = vmul.f32 %v4101, 1.442695
      %v4536 = vpow.pop %v4535
      %v4537 = vmul.f32 %v4102, 1.442695
      %v4538 = vpow.pop %v4537
      %v4539 = vmul.f32 %v4103, 1.442695
      %v4540 = vpow.pop %v4539
      %v4541 = vmul.f32 %v4104, 1.442695
      %v4542 = vpow.pop %v4541
      %v4543 = vmul.f32 %v4105, 1.442695
      %v4544 = vpow.pop %v4543
      %v4545 = vmul.f32 %v4106, 1.442695
      %v4546 = vpow.pop %v4545
      %v4547 = vmul.f32 %v4107, 1.442695
      %v4548 = vpow.pop %v4547
      %v4549 = vmul.f32 %v4108, 1.442695
      %v4550 = vpow.pop %v4549
      %v4551 = vmul.f32 %v4109, 1.442695
      %v4552 = vpow.pop %v4551
      %v4553 = vmul.f32 %v4110, 1.442695
      %v4554 = vpow.pop %v4553
      %v4555 = vmul.f32 %v4111, 1.442695
      %v4556 = vpow.pop %v4555
      %v4557 = vmul.f32 %v4112, 1.442695
      %v4558 = vpow.pop %v4557
      %v4559 = vmul.f32 %v4113, 1.442695
      %v4560 = vpow.pop %v4559
      %v4561 = vmul.f32 %v4114, 1.442695
      %v4562 = vpow.pop %v4561
      %v4563 = vadd.f32 %v4116, 1.0
      %v4564 = vadd.f32 %v4118, 1.0
      %v4565 = vadd.f32 %v4120, 1.0
      %v4566 = vadd.f32 %v4122, 1.0
      %v4567 = vadd.f32 %v4124, 1.0
      %v4568 = vadd.f32 %v4126, 1.0
      %v4569 = vadd.f32 %v4128, 1.0
      %v4570 = vadd.f32 %v4130, 1.0
      %v4571 = vadd.f32 %v4132, 1.0
      %v4572 = vadd.f32 %v4134, 1.0
      %v4573 = vadd.f32 %v4136, 1.0
      %v4574 = vadd.f32 %v4138, 1.0
      %v4575 = vadd.f32 %v4140, 1.0
      %v4576 = vadd.f32 %v4142, 1.0
      %v4577 = vadd.f32 %v4144, 1.0
      %v4578 = vadd.f32 %v4146, 1.0
      %v4579 = vadd.f32 %v4148, 1.0
      %v4580 = vadd.f32 %v4150, 1.0
      %v4581 = vadd.f32 %v4152, 1.0
      %v4582 = vadd.f32 %v4154, 1.0
      %v4583 = vadd.f32 %v4156, 1.0
      %v4584 = vadd.f32 %v4158, 1.0
      %v4585 = vadd.f32 %v4160, 1.0
      %v4586 = vadd.f32 %v4162, 1.0
      %v4587 = vadd.f32 %v4164, 1.0
      %v4588 = vadd.f32 %v4166, 1.0
      %v4589 = vadd.f32 %v4168, 1.0
      %v4590 = vadd.f32 %v4170, 1.0
      %v4591 = vadd.f32 %v4172, 1.0
      %v4592 = vadd.f32 %v4174, 1.0
      %v4593 = vadd.f32 %v4176, 1.0
      %v4594 = vadd.f32 %v4178, 1.0
      %v4595 = vadd.f32 %v4180, 1.0
      %v4596 = vadd.f32 %v4182, 1.0
      %v4597 = vadd.f32 %v4184, 1.0
      %v4598 = vadd.f32 %v4186, 1.0
      %v4599 = vadd.f32 %v4188, 1.0
      %v4600 = vadd.f32 %v4190, 1.0
      %v4601 = vadd.f32 %v4192, 1.0
      %v4602 = vadd.f32 %v4194, 1.0
      %v4603 = vadd.f32 %v4196, 1.0
      %v4604 = vadd.f32 %v4198, 1.0
      %v4605 = vadd.f32 %v4200, 1.0
      %v4606 = vadd.f32 %v4202, 1.0
      %v4607 = vadd.f32 %v4204, 1.0
      %v4608 = vadd.f32 %v4206, 1.0
      %v4609 = vadd.f32 %v4208, 1.0
      %v4610 = vadd.f32 %v4210, 1.0
      %v4611 = vadd.f32 %v4212, 1.0
      %v4612 = vadd.f32 %v4214, 1.0
      %v4613 = vadd.f32 %v4216, 1.0
      %v4614 = vadd.f32 %v4218, 1.0
      %v4615 = vadd.f32 %v4220, 1.0
      %v4616 = vadd.f32 %v4222, 1.0
      %v4617 = vadd.f32 %v4224, 1.0
      %v4618 = vadd.f32 %v4226, 1.0
      %v4619 = vadd.f32 %v4228, 1.0
      %v4620 = vadd.f32 %v4230, 1.0
      %v4621 = vadd.f32 %v4232, 1.0
      %v4622 = vadd.f32 %v4234, 1.0
      %v4623 = vadd.f32 %v4236, 1.0
      %v4624 = vadd.f32 %v4238, 1.0
      %v4625 = vadd.f32 %v4240, 1.0
      %v4626 = vadd.f32 %v4242, 1.0
      %v4627 = vadd.f32 %v4244, 1.0
      %v4628 = vadd.f32 %v4246, 1.0
      %v4629 = vadd.f32 %v4248, 1.0
      %v4630 = vadd.f32 %v4250, 1.0
      %v4631 = vadd.f32 %v4252, 1.0
      %v4632 = vadd.f32 %v4254, 1.0
      %v4633 = vadd.f32 %v4256, 1.0
      %v4634 = vadd.f32 %v4258, 1.0
      %v4635 = vadd.f32 %v4260, 1.0
      %v4636 = vadd.f32 %v4262, 1.0
      %v4637 = vadd.f32 %v4264, 1.0
      %v4638 = vadd.f32 %v4266, 1.0
      %v4639 = vadd.f32 %v4268, 1.0
      %v4640 = vadd.f32 %v4270, 1.0
      %v4641 = vadd.f32 %v4272, 1.0
      %v4642 = vadd.f32 %v4274, 1.0
      %v4643 = vadd.f32 %v4276, 1.0
      %v4644 = vadd.f32 %v4278, 1.0
      %v4645 = vadd.f32 %v4280, 1.0
      %v4646 = vadd.f32 %v4282, 1.0
      %v4647 = vadd.f32 %v4284, 1.0
      %v4648 = vadd.f32 %v4286, 1.0
      %v4649 = vadd.f32 %v4288, 1.0
      %v4650 = vadd.f32 %v4290, 1.0
      %v4651 = vadd.f32 %v4292, 1.0
      %v4652 = vadd.f32 %v4294, 1.0
      %v4653 = vadd.f32 %v4296, 1.0
      %v4654 = vadd.f32 %v4298, 1.0
      %v4655 = vadd.f32 %v4300, 1.0
      %v4656 = vadd.f32 %v4302, 1.0
      %v4657 = vadd.f32 %v4304, 1.0
      %v4658 = vadd.f32 %v4306, 1.0
      %v4659 = vadd.f32 %v4308, 1.0
      %v4660 = vadd.f32 %v4310, 1.0
      %v4661 = vadd.f32 %v4312, 1.0
      %v4662 = vadd.f32 %v4314, 1.0
      %v4663 = vadd.f32 %v4316, 1.0
      %v4664 = vadd.f32 %v4318, 1.0
      %v4665 = vadd.f32 %v4320, 1.0
      %v4666 = vadd.f32 %v4322, 1.0
      %v4667 = vadd.f32 %v4324, 1.0
      %v4668 = vadd.f32 %v4326, 1.0
      %v4669 = vadd.f32 %v4328, 1.0
      %v4670 = vadd.f32 %v4330, 1.0
      %v4671 = vadd.f32 %v4332, 1.0
      %v4672 = vadd.f32 %v4334, 1.0
      %v4673 = vadd.f32 %v4336, 1.0
      %v4674 = vadd.f32 %v4338, 1.0
      %v4675 = vadd.f32 %v4340, 1.0
      %v4676 = vadd.f32 %v4342, 1.0
      %v4677 = vadd.f32 %v4344, 1.0
      %v4678 = vadd.f32 %v4346, 1.0
      %v4679 = vadd.f32 %v4348, 1.0
      %v4680 = vadd.f32 %v4350, 1.0
      %v4681 = vadd.f32 %v4352, 1.0
      %v4682 = vadd.f32 %v4354, 1.0
      %v4683 = vadd.f32 %v4356, 1.0
      %v4684 = vadd.f32 %v4358, 1.0
      %v4685 = vadd.f32 %v4360, 1.0
      %v4686 = vadd.f32 %v4362, 1.0
      %v4687 = vadd.f32 %v4364, 1.0
      %v4688 = vadd.f32 %v4366, 1.0
      %v4689 = vadd.f32 %v4368, 1.0
      %v4690 = vadd.f32 %v4370, 1.0
      %v4691 = vadd.f32 %v4372, 1.0
      %v4692 = vadd.f32 %v4374, 1.0
      %v4693 = vadd.f32 %v4376, 1.0
      %v4694 = vadd.f32 %v4378, 1.0
      %v4695 = vadd.f32 %v4380, 1.0
      %v4696 = vadd.f32 %v4382, 1.0
      %v4697 = vadd.f32 %v4384, 1.0
      %v4698 = vadd.f32 %v4386, 1.0
      %v4699 = vadd.f32 %v4388, 1.0
      %v4700 = vadd.f32 %v4390, 1.0
      %v4701 = vadd.f32 %v4392, 1.0
      %v4702 = vadd.f32 %v4394, 1.0
      %v4703 = vadd.f32 %v4396, 1.0
      %v4704 = vadd.f32 %v4398, 1.0
      %v4705 = vadd.f32 %v4400, 1.0
      %v4706 = vadd.f32 %v4402, 1.0
      %v4707 = vadd.f32 %v4404, 1.0
      %v4708 = vadd.f32 %v4406, 1.0
      %v4709 = vadd.f32 %v4408, 1.0
      %v4710 = vadd.f32 %v4410, 1.0
      %v4711 = vadd.f32 %v4412, 1.0
      %v4712 = vadd.f32 %v4414, 1.0
      %v4713 = vadd.f32 %v4416, 1.0
      %v4714 = vadd.f32 %v4418, 1.0
      %v4715 = vadd.f32 %v4420, 1.0
      %v4716 = vadd.f32 %v4422, 1.0
      %v4717 = vadd.f32 %v4424, 1.0
      %v4718 = vadd.f32 %v4426, 1.0
      %v4719 = vadd.f32 %v4428, 1.0
      %v4720 = vadd.f32 %v4430, 1.0
      %v4721 = vadd.f32 %v4432, 1.0
      %v4722 = vadd.f32 %v4434, 1.0
      %v4723 = vadd.f32 %v4436, 1.0
      %v4724 = vadd.f32 %v4438, 1.0
      %v4725 = vadd.f32 %v4440, 1.0
      %v4726 = vadd.f32 %v4442, 1.0
      %v4727 = vadd.f32 %v4444, 1.0
      %v4728 = vadd.f32 %v4446, 1.0
      %v4729 = vadd.f32 %v4448, 1.0
      %v4730 = vadd.f32 %v4450, 1.0
      %v4731 = vadd.f32 %v4452, 1.0
      %v4732 = vadd.f32 %v4454, 1.0
      %v4733 = vadd.f32 %v4456, 1.0
      %v4734 = vadd.f32 %v4458, 1.0
      %v4735 = vadd.f32 %v4460, 1.0
      %v4736 = vadd.f32 %v4462, 1.0
      %v4737 = vadd.f32 %v4464, 1.0
      %v4738 = vadd.f32 %v4466, 1.0
      %v4739 = vadd.f32 %v4468, 1.0
      %v4740 = vadd.f32 %v4470, 1.0
      %v4741 = vadd.f32 %v4472, 1.0
      %v4742 = vadd.f32 %v4474, 1.0
      %v4743 = vadd.f32 %v4476, 1.0
      %v4744 = vadd.f32 %v4478, 1.0
      %v4745 = vadd.f32 %v4480, 1.0
      %v4746 = vadd.f32 %v4482, 1.0
      %v4747 = vadd.f32 %v4484, 1.0
      %v4748 = vadd.f32 %v4486, 1.0
      %v4749 = vadd.f32 %v4488, 1.0
      %v4750 = vadd.f32 %v4490, 1.0
      %v4751 = vadd.f32 %v4492, 1.0
      %v4752 = vadd.f32 %v4494, 1.0
      %v4753 = vadd.f32 %v4496, 1.0
      %v4754 = vadd.f32 %v4498, 1.0
      %v4755 = vadd.f32 %v4500, 1.0
      %v4756 = vadd.f32 %v4502, 1.0
      %v4757 = vadd.f32 %v4504, 1.0
      %v4758 = vadd.f32 %v4506, 1.0
      %v4759 = vadd.f32 %v4508, 1.0
      %v4760 = vadd.f32 %v4510, 1.0
      %v4761 = vadd.f32 %v4512, 1.0
      %v4762 = vadd.f32 %v4514, 1.0
      %v4763 = vadd.f32 %v4516, 1.0
      %v4764 = vadd.f32 %v4518, 1.0
      %v4765 = vadd.f32 %v4520, 1.0
      %v4766 = vadd.f32 %v4522, 1.0
      %v4767 = vadd.f32 %v4524, 1.0
      %v4768 = vadd.f32 %v4526, 1.0
      %v4769 = vadd.f32 %v4528, 1.0
      %v4770 = vadd.f32 %v4530, 1.0
      %v4771 = vadd.f32 %v4532, 1.0
      %v4772 = vadd.f32 %v4534, 1.0
      %v4773 = vadd.f32 %v4536, 1.0
      %v4774 = vadd.f32 %v4538, 1.0
      %v4775 = vadd.f32 %v4540, 1.0
      %v4776 = vadd.f32 %v4542, 1.0
      %v4777 = vadd.f32 %v4544, 1.0
      %v4778 = vadd.f32 %v4546, 1.0
      %v4779 = vadd.f32 %v4548, 1.0
      %v4780 = vadd.f32 %v4550, 1.0
      %v4781 = vadd.f32 %v4552, 1.0
      %v4782 = vadd.f32 %v4554, 1.0
      %v4783 = vadd.f32 %v4556, 1.0
      %v4784 = vadd.f32 %v4558, 1.0
      %v4785 = vadd.f32 %v4560, 1.0
      %v4786 = vadd.f32 %v4562, 1.0
      %v4787 = vrcp.pop %v4563
      %v4788 = vmul.f32 1.0, %v4787
      %v4789 = vrcp.pop %v4564
      %v4790 = vmul.f32 1.0, %v4789
      %v4791 = vrcp.pop %v4565
      %v4792 = vmul.f32 1.0, %v4791
      %v4793 = vrcp.pop %v4566
      %v4794 = vmul.f32 1.0, %v4793
      %v4795 = vrcp.pop %v4567
      %v4796 = vmul.f32 1.0, %v4795
      %v4797 = vrcp.pop %v4568
      %v4798 = vmul.f32 1.0, %v4797
      %v4799 = vrcp.pop %v4569
      %v4800 = vmul.f32 1.0, %v4799
      %v4801 = vrcp.pop %v4570
      %v4802 = vmul.f32 1.0, %v4801
      %v4803 = vrcp.pop %v4571
      %v4804 = vmul.f32 1.0, %v4803
      %v4805 = vrcp.pop %v4572
      %v4806 = vmul.f32 1.0, %v4805
      %v4807 = vrcp.pop %v4573
      %v4808 = vmul.f32 1.0, %v4807
      %v4809 = vrcp.pop %v4574
      %v4810 = vmul.f32 1.0, %v4809
      %v4811 = vrcp.pop %v4575
      %v4812 = vmul.f32 1.0, %v4811
      %v4813 = vrcp.pop %v4576
      %v4814 = vmul.f32 1.0, %v4813
      %v4815 = vrcp.pop %v4577
      %v4816 = vmul.f32 1.0, %v4815
      %v4817 = vrcp.pop %v4578
      %v4818 = vmul.f32 1.0, %v4817
      %v4819 = vrcp.pop %v4579
      %v4820 = vmul.f32 1.0, %v4819
      %v4821 = vrcp.pop %v4580
      %v4822 = vmul.f32 1.0, %v4821
      %v4823 = vrcp.pop %v4581
      %v4824 = vmul.f32 1.0, %v4823
      %v4825 = vrcp.pop %v4582
      %v4826 = vmul.f32 1.0, %v4825
      %v4827 = vrcp.pop %v4583
      %v4828 = vmul.f32 1.0, %v4827
      %v4829 = vrcp.pop %v4584
      %v4830 = vmul.f32 1.0, %v4829
      %v4831 = vrcp.pop %v4585
      %v4832 = vmul.f32 1.0, %v4831
      %v4833 = vrcp.pop %v4586
      %v4834 = vmul.f32 1.0, %v4833
      %v4835 = vrcp.pop %v4587
      %v4836 = vmul.f32 1.0, %v4835
      %v4837 = vrcp.pop %v4588
      %v4838 = vmul.f32 1.0, %v4837
      %v4839 = vrcp.pop %v4589
      %v4840 = vmul.f32 1.0, %v4839
      %v4841 = vrcp.pop %v4590
      %v4842 = vmul.f32 1.0, %v4841
      %v4843 = vrcp.pop %v4591
      %v4844 = vmul.f32 1.0, %v4843
      %v4845 = vrcp.pop %v4592
      %v4846 = vmul.f32 1.0, %v4845
      %v4847 = vrcp.pop %v4593
      %v4848 = vmul.f32 1.0, %v4847
      %v4849 = vrcp.pop %v4594
      %v4850 = vmul.f32 1.0, %v4849
      %v4851 = vrcp.pop %v4595
      %v4852 = vmul.f32 1.0, %v4851
      %v4853 = vrcp.pop %v4596
      %v4854 = vmul.f32 1.0, %v4853
      %v4855 = vrcp.pop %v4597
      %v4856 = vmul.f32 1.0, %v4855
      %v4857 = vrcp.pop %v4598
      %v4858 = vmul.f32 1.0, %v4857
      %v4859 = vrcp.pop %v4599
      %v4860 = vmul.f32 1.0, %v4859
      %v4861 = vrcp.pop %v4600
      %v4862 = vmul.f32 1.0, %v4861
      %v4863 = vrcp.pop %v4601
      %v4864 = vmul.f32 1.0, %v4863
      %v4865 = vrcp.pop %v4602
      %v4866 = vmul.f32 1.0, %v4865
      %v4867 = vrcp.pop %v4603
      %v4868 = vmul.f32 1.0, %v4867
      %v4869 = vrcp.pop %v4604
      %v4870 = vmul.f32 1.0, %v4869
      %v4871 = vrcp.pop %v4605
      %v4872 = vmul.f32 1.0, %v4871
      %v4873 = vrcp.pop %v4606
      %v4874 = vmul.f32 1.0, %v4873
      %v4875 = vrcp.pop %v4607
      %v4876 = vmul.f32 1.0, %v4875
      %v4877 = vrcp.pop %v4608
      %v4878 = vmul.f32 1.0, %v4877
      %v4879 = vrcp.pop %v4609
      %v4880 = vmul.f32 1.0, %v4879
      %v4881 = vrcp.pop %v4610
      %v4882 = vmul.f32 1.0, %v4881
      %v4883 = vrcp.pop %v4611
      %v4884 = vmul.f32 1.0, %v4883
      %v4885 = vrcp.pop %v4612
      %v4886 = vmul.f32 1.0, %v4885
      %v4887 = vrcp.pop %v4613
      %v4888 = vmul.f32 1.0, %v4887
      %v4889 = vrcp.pop %v4614
      %v4890 = vmul.f32 1.0, %v4889
      %v4891 = vrcp.pop %v4615
      %v4892 = vmul.f32 1.0, %v4891
      %v4893 = vrcp.pop %v4616
      %v4894 = vmul.f32 1.0, %v4893
      %v4895 = vrcp.pop %v4617
      %v4896 = vmul.f32 1.0, %v4895
      %v4897 = vrcp.pop %v4618
      %v4898 = vmul.f32 1.0, %v4897
      %v4899 = vrcp.pop %v4619
      %v4900 = vmul.f32 1.0, %v4899
      %v4901 = vrcp.pop %v4620
      %v4902 = vmul.f32 1.0, %v4901
      %v4903 = vrcp.pop %v4621
      %v4904 = vmul.f32 1.0, %v4903
      %v4905 = vrcp.pop %v4622
      %v4906 = vmul.f32 1.0, %v4905
      %v4907 = vrcp.pop %v4623
      %v4908 = vmul.f32 1.0, %v4907
      %v4909 = vrcp.pop %v4624
      %v4910 = vmul.f32 1.0, %v4909
      %v4911 = vrcp.pop %v4625
      %v4912 = vmul.f32 1.0, %v4911
      %v4913 = vrcp.pop %v4626
      %v4914 = vmul.f32 1.0, %v4913
      %v4915 = vrcp.pop %v4627
      %v4916 = vmul.f32 1.0, %v4915
      %v4917 = vrcp.pop %v4628
      %v4918 = vmul.f32 1.0, %v4917
      %v4919 = vrcp.pop %v4629
      %v4920 = vmul.f32 1.0, %v4919
      %v4921 = vrcp.pop %v4630
      %v4922 = vmul.f32 1.0, %v4921
      %v4923 = vrcp.pop %v4631
      %v4924 = vmul.f32 1.0, %v4923
      %v4925 = vrcp.pop %v4632
      %v4926 = vmul.f32 1.0, %v4925
      %v4927 = vrcp.pop %v4633
      %v4928 = vmul.f32 1.0, %v4927
      %v4929 = vrcp.pop %v4634
      %v4930 = vmul.f32 1.0, %v4929
      %v4931 = vrcp.pop %v4635
      %v4932 = vmul.f32 1.0, %v4931
      %v4933 = vrcp.pop %v4636
      %v4934 = vmul.f32 1.0, %v4933
      %v4935 = vrcp.pop %v4637
      %v4936 = vmul.f32 1.0, %v4935
      %v4937 = vrcp.pop %v4638
      %v4938 = vmul.f32 1.0, %v4937
      %v4939 = vrcp.pop %v4639
      %v4940 = vmul.f32 1.0, %v4939
      %v4941 = vrcp.pop %v4640
      %v4942 = vmul.f32 1.0, %v4941
      %v4943 = vrcp.pop %v4641
      %v4944 = vmul.f32 1.0, %v4943
      %v4945 = vrcp.pop %v4642
      %v4946 = vmul.f32 1.0, %v4945
      %v4947 = vrcp.pop %v4643
      %v4948 = vmul.f32 1.0, %v4947
      %v4949 = vrcp.pop %v4644
      %v4950 = vmul.f32 1.0, %v4949
      %v4951 = vrcp.pop %v4645
      %v4952 = vmul.f32 1.0, %v4951
      %v4953 = vrcp.pop %v4646
      %v4954 = vmul.f32 1.0, %v4953
      %v4955 = vrcp.pop %v4647
      %v4956 = vmul.f32 1.0, %v4955
      %v4957 = vrcp.pop %v4648
      %v4958 = vmul.f32 1.0, %v4957
      %v4959 = vrcp.pop %v4649
      %v4960 = vmul.f32 1.0, %v4959
      %v4961 = vrcp.pop %v4650
      %v4962 = vmul.f32 1.0, %v4961
      %v4963 = vrcp.pop %v4651
      %v4964 = vmul.f32 1.0, %v4963
      %v4965 = vrcp.pop %v4652
      %v4966 = vmul.f32 1.0, %v4965
      %v4967 = vrcp.pop %v4653
      %v4968 = vmul.f32 1.0, %v4967
      %v4969 = vrcp.pop %v4654
      %v4970 = vmul.f32 1.0, %v4969
      %v4971 = vrcp.pop %v4655
      %v4972 = vmul.f32 1.0, %v4971
      %v4973 = vrcp.pop %v4656
      %v4974 = vmul.f32 1.0, %v4973
      %v4975 = vrcp.pop %v4657
      %v4976 = vmul.f32 1.0, %v4975
      %v4977 = vrcp.pop %v4658
      %v4978 = vmul.f32 1.0, %v4977
      %v4979 = vrcp.pop %v4659
      %v4980 = vmul.f32 1.0, %v4979
      %v4981 = vrcp.pop %v4660
      %v4982 = vmul.f32 1.0, %v4981
      %v4983 = vrcp.pop %v4661
      %v4984 = vmul.f32 1.0, %v4983
      %v4985 = vrcp.pop %v4662
      %v4986 = vmul.f32 1.0, %v4985
      %v4987 = vrcp.pop %v4663
      %v4988 = vmul.f32 1.0, %v4987
      %v4989 = vrcp.pop %v4664
      %v4990 = vmul.f32 1.0, %v4989
      %v4991 = vrcp.pop %v4665
      %v4992 = vmul.f32 1.0, %v4991
      %v4993 = vrcp.pop %v4666
      %v4994 = vmul.f32 1.0, %v4993
      %v4995 = vrcp.pop %v4667
      %v4996 = vmul.f32 1.0, %v4995
      %v4997 = vrcp.pop %v4668
      %v4998 = vmul.f32 1.0, %v4997
      %v4999 = vrcp.pop %v4669
      %v5000 = vmul.f32 1.0, %v4999
      %v5001 = vrcp.pop %v4670
      %v5002 = vmul.f32 1.0, %v5001
      %v5003 = vrcp.pop %v4671
      %v5004 = vmul.f32 1.0, %v5003
      %v5005 = vrcp.pop %v4672
      %v5006 = vmul.f32 1.0, %v5005
      %v5007 = vrcp.pop %v4673
      %v5008 = vmul.f32 1.0, %v5007
      %v5009 = vrcp.pop %v4674
      %v5010 = vmul.f32 1.0, %v5009
      %v5011 = vrcp.pop %v4675
      %v5012 = vmul.f32 1.0, %v5011
      %v5013 = vrcp.pop %v4676
      %v5014 = vmul.f32 1.0, %v5013
      %v5015 = vrcp.pop %v4677
      %v5016 = vmul.f32 1.0, %v5015
      %v5017 = vrcp.pop %v4678
      %v5018 = vmul.f32 1.0, %v5017
      %v5019 = vrcp.pop %v4679
      %v5020 = vmul.f32 1.0, %v5019
      %v5021 = vrcp.pop %v4680
      %v5022 = vmul.f32 1.0, %v5021
      %v5023 = vrcp.pop %v4681
      %v5024 = vmul.f32 1.0, %v5023
      %v5025 = vrcp.pop %v4682
      %v5026 = vmul.f32 1.0, %v5025
      %v5027 = vrcp.pop %v4683
      %v5028 = vmul.f32 1.0, %v5027
      %v5029 = vrcp.pop %v4684
      %v5030 = vmul.f32 1.0, %v5029
      %v5031 = vrcp.pop %v4685
      %v5032 = vmul.f32 1.0, %v5031
      %v5033 = vrcp.pop %v4686
      %v5034 = vmul.f32 1.0, %v5033
      %v5035 = vrcp.pop %v4687
      %v5036 = vmul.f32 1.0, %v5035
      %v5037 = vrcp.pop %v4688
      %v5038 = vmul.f32 1.0, %v5037
      %v5039 = vrcp.pop %v4689
      %v5040 = vmul.f32 1.0, %v5039
      %v5041 = vrcp.pop %v4690
      %v5042 = vmul.f32 1.0, %v5041
      %v5043 = vrcp.pop %v4691
      %v5044 = vmul.f32 1.0, %v5043
      %v5045 = vrcp.pop %v4692
      %v5046 = vmul.f32 1.0, %v5045
      %v5047 = vrcp.pop %v4693
      %v5048 = vmul.f32 1.0, %v5047
      %v5049 = vrcp.pop %v4694
      %v5050 = vmul.f32 1.0, %v5049
      %v5051 = vrcp.pop %v4695
      %v5052 = vmul.f32 1.0, %v5051
      %v5053 = vrcp.pop %v4696
      %v5054 = vmul.f32 1.0, %v5053
      %v5055 = vrcp.pop %v4697
      %v5056 = vmul.f32 1.0, %v5055
      %v5057 = vrcp.pop %v4698
      %v5058 = vmul.f32 1.0, %v5057
      %v5059 = vrcp.pop %v4699
      %v5060 = vmul.f32 1.0, %v5059
      %v5061 = vrcp.pop %v4700
      %v5062 = vmul.f32 1.0, %v5061
      %v5063 = vrcp.pop %v4701
      %v5064 = vmul.f32 1.0, %v5063
      %v5065 = vrcp.pop %v4702
      %v5066 = vmul.f32 1.0, %v5065
      %v5067 = vrcp.pop %v4703
      %v5068 = vmul.f32 1.0, %v5067
      %v5069 = vrcp.pop %v4704
      %v5070 = vmul.f32 1.0, %v5069
      %v5071 = vrcp.pop %v4705
      %v5072 = vmul.f32 1.0, %v5071
      %v5073 = vrcp.pop %v4706
      %v5074 = vmul.f32 1.0, %v5073
      %v5075 = vrcp.pop %v4707
      %v5076 = vmul.f32 1.0, %v5075
      %v5077 = vrcp.pop %v4708
      %v5078 = vmul.f32 1.0, %v5077
      %v5079 = vrcp.pop %v4709
      %v5080 = vmul.f32 1.0, %v5079
      %v5081 = vrcp.pop %v4710
      %v5082 = vmul.f32 1.0, %v5081
      %v5083 = vrcp.pop %v4711
      %v5084 = vmul.f32 1.0, %v5083
      %v5085 = vrcp.pop %v4712
      %v5086 = vmul.f32 1.0, %v5085
      %v5087 = vrcp.pop %v4713
      %v5088 = vmul.f32 1.0, %v5087
      %v5089 = vrcp.pop %v4714
      %v5090 = vmul.f32 1.0, %v5089
      %v5091 = vrcp.pop %v4715
      %v5092 = vmul.f32 1.0, %v5091
      %v5093 = vrcp.pop %v4716
      %v5094 = vmul.f32 1.0, %v5093
      %v5095 = vrcp.pop %v4717
      %v5096 = vmul.f32 1.0, %v5095
      %v5097 = vrcp.pop %v4718
      %v5098 = vmul.f32 1.0, %v5097
      %v5099 = vrcp.pop %v4719
      %v5100 = vmul.f32 1.0, %v5099
      %v5101 = vrcp.pop %v4720
      %v5102 = vmul.f32 1.0, %v5101
      %v5103 = vrcp.pop %v4721
      %v5104 = vmul.f32 1.0, %v5103
      %v5105 = vrcp.pop %v4722
      %v5106 = vmul.f32 1.0, %v5105
      %v5107 = vrcp.pop %v4723
      %v5108 = vmul.f32 1.0, %v5107
      %v5109 = vrcp.pop %v4724
      %v5110 = vmul.f32 1.0, %v5109
      %v5111 = vrcp.pop %v4725
      %v5112 = vmul.f32 1.0, %v5111
      %v5113 = vrcp.pop %v4726
      %v5114 = vmul.f32 1.0, %v5113
      %v5115 = vrcp.pop %v4727
      %v5116 = vmul.f32 1.0, %v5115
      %v5117 = vrcp.pop %v4728
      %v5118 = vmul.f32 1.0, %v5117
      %v5119 = vrcp.pop %v4729
      %v5120 = vmul.f32 1.0, %v5119
      %v5121 = vrcp.pop %v4730
      %v5122 = vmul.f32 1.0, %v5121
      %v5123 = vrcp.pop %v4731
      %v5124 = vmul.f32 1.0, %v5123
      %v5125 = vrcp.pop %v4732
      %v5126 = vmul.f32 1.0, %v5125
      %v5127 = vrcp.pop %v4733
      %v5128 = vmul.f32 1.0, %v5127
      %v5129 = vrcp.pop %v4734
      %v5130 = vmul.f32 1.0, %v5129
      %v5131 = vrcp.pop %v4735
      %v5132 = vmul.f32 1.0, %v5131
      %v5133 = vrcp.pop %v4736
      %v5134 = vmul.f32 1.0, %v5133
      %v5135 = vrcp.pop %v4737
      %v5136 = vmul.f32 1.0, %v5135
      %v5137 = vrcp.pop %v4738
      %v5138 = vmul.f32 1.0, %v5137
      %v5139 = vrcp.pop %v4739
      %v5140 = vmul.f32 1.0, %v5139
      %v5141 = vrcp.pop %v4740
      %v5142 = vmul.f32 1.0, %v5141
      %v5143 = vrcp.pop %v4741
      %v5144 = vmul.f32 1.0, %v5143
      %v5145 = vrcp.pop %v4742
      %v5146 = vmul.f32 1.0, %v5145
      %v5147 = vrcp.pop %v4743
      %v5148 = vmul.f32 1.0, %v5147
      %v5149 = vrcp.pop %v4744
      %v5150 = vmul.f32 1.0, %v5149
      %v5151 = vrcp.pop %v4745
      %v5152 = vmul.f32 1.0, %v5151
      %v5153 = vrcp.pop %v4746
      %v5154 = vmul.f32 1.0, %v5153
      %v5155 = vrcp.pop %v4747
      %v5156 = vmul.f32 1.0, %v5155
      %v5157 = vrcp.pop %v4748
      %v5158 = vmul.f32 1.0, %v5157
      %v5159 = vrcp.pop %v4749
      %v5160 = vmul.f32 1.0, %v5159
      %v5161 = vrcp.pop %v4750
      %v5162 = vmul.f32 1.0, %v5161
      %v5163 = vrcp.pop %v4751
      %v5164 = vmul.f32 1.0, %v5163
      %v5165 = vrcp.pop %v4752
      %v5166 = vmul.f32 1.0, %v5165
      %v5167 = vrcp.pop %v4753
      %v5168 = vmul.f32 1.0, %v5167
      %v5169 = vrcp.pop %v4754
      %v5170 = vmul.f32 1.0, %v5169
      %v5171 = vrcp.pop %v4755
      %v5172 = vmul.f32 1.0, %v5171
      %v5173 = vrcp.pop %v4756
      %v5174 = vmul.f32 1.0, %v5173
      %v5175 = vrcp.pop %v4757
      %v5176 = vmul.f32 1.0, %v5175
      %v5177 = vrcp.pop %v4758
      %v5178 = vmul.f32 1.0, %v5177
      %v5179 = vrcp.pop %v4759
      %v5180 = vmul.f32 1.0, %v5179
      %v5181 = vrcp.pop %v4760
      %v5182 = vmul.f32 1.0, %v5181
      %v5183 = vrcp.pop %v4761
      %v5184 = vmul.f32 1.0, %v5183
      %v5185 = vrcp.pop %v4762
      %v5186 = vmul.f32 1.0, %v5185
      %v5187 = vrcp.pop %v4763
      %v5188 = vmul.f32 1.0, %v5187
      %v5189 = vrcp.pop %v4764
      %v5190 = vmul.f32 1.0, %v5189
      %v5191 = vrcp.pop %v4765
      %v5192 = vmul.f32 1.0, %v5191
      %v5193 = vrcp.pop %v4766
      %v5194 = vmul.f32 1.0, %v5193
      %v5195 = vrcp.pop %v4767
      %v5196 = vmul.f32 1.0, %v5195
      %v5197 = vrcp.pop %v4768
      %v5198 = vmul.f32 1.0, %v5197
      %v5199 = vrcp.pop %v4769
      %v5200 = vmul.f32 1.0, %v5199
      %v5201 = vrcp.pop %v4770
      %v5202 = vmul.f32 1.0, %v5201
      %v5203 = vrcp.pop %v4771
      %v5204 = vmul.f32 1.0, %v5203
      %v5205 = vrcp.pop %v4772
      %v5206 = vmul.f32 1.0, %v5205
      %v5207 = vrcp.pop %v4773
      %v5208 = vmul.f32 1.0, %v5207
      %v5209 = vrcp.pop %v4774
      %v5210 = vmul.f32 1.0, %v5209
      %v5211 = vrcp.pop %v4775
      %v5212 = vmul.f32 1.0, %v5211
      %v5213 = vrcp.pop %v4776
      %v5214 = vmul.f32 1.0, %v5213
      %v5215 = vrcp.pop %v4777
      %v5216 = vmul.f32 1.0, %v5215
      %v5217 = vrcp.pop %v4778
      %v5218 = vmul.f32 1.0, %v5217
      %v5219 = vrcp.pop %v4779
      %v5220 = vmul.f32 1.0, %v5219
      %v5221 = vrcp.pop %v4780
      %v5222 = vmul.f32 1.0, %v5221
      %v5223 = vrcp.pop %v4781
      %v5224 = vmul.f32 1.0, %v5223
      %v5225 = vrcp.pop %v4782
      %v5226 = vmul.f32 1.0, %v5225
      %v5227 = vrcp.pop %v4783
      %v5228 = vmul.f32 1.0, %v5227
      %v5229 = vrcp.pop %v4784
      %v5230 = vmul.f32 1.0, %v5229
      %v5231 = vrcp.pop %v4785
      %v5232 = vmul.f32 1.0, %v5231
      %v5233 = vrcp.pop %v4786
      %v5234 = vmul.f32 1.0, %v5233
      %5235 = vst [vmem:[%s380] sm:$0xff] %v2340
      %5236 = vst [vmem:[%s380 + $0x8] sm:$0xff] %v2343
      %5237 = vst [vmem:[%s380 + $0x10] sm:$0xff] %v2348
      %5238 = vst [vmem:[%s380 + $0x18] sm:$0xff] %v2351
      %5239 = vst [vmem:[%s380 + $0x20] sm:$0xff] %v2356
      %5240 = vst [vmem:[%s380 + $0x28] sm:$0xff] %v2359
      %5241 = vst [vmem:[%s380 + $0x30] sm:$0xff] %v2364
      %5242 = vst [vmem:[%s380 + $0x38] sm:$0xff] %v2367
      %5243 = vst [vmem:[%s380 + $0x40] sm:$0xff] %v2372
      %5244 = vst [vmem:[%s380 + $0x48] sm:$0xff] %v2375
      %5245 = vst [vmem:[%s380 + $0x50] sm:$0xff] %v2380
      %5246 = vst [vmem:[%s380 + $0x58] sm:$0xff] %v2383
      %5247 = vst [vmem:[%s380 + $0x60] sm:$0xff] %v2388
      %5248 = vst [vmem:[%s380 + $0x68] sm:$0xff] %v2391
      %5249 = vst [vmem:[%s380 + $0x70] sm:$0xff] %v2396
      %5250 = vst [vmem:[%s380 + $0x78] sm:$0xff] %v2399
      %5251 = vst [vmem:[%s380 + $0x80] sm:$0xff] %v2404
      %5252 = vst [vmem:[%s380 + $0x88] sm:$0xff] %v2407
      %5253 = vst [vmem:[%s380 + $0x90] sm:$0xff] %v2412
      %5254 = vst [vmem:[%s380 + $0x98] sm:$0xff] %v2415
      %5255 = vst [vmem:[%s380 + $0xa0] sm:$0xff] %v2420
      %5256 = vst [vmem:[%s380 + $0xa8] sm:$0xff] %v2423
      %5257 = vst [vmem:[%s380 + $0xb0] sm:$0xff] %v2428
      %5258 = vst [vmem:[%s380 + $0xb8] sm:$0xff] %v2431
      %5259 = vst [vmem:[%s380 + $0xc0] sm:$0xff] %v2436
      %5260 = vst [vmem:[%s380 + $0xc8] sm:$0xff] %v2439
      %5261 = vst [vmem:[%s380 + $0xd0] sm:$0xff] %v2444
      %5262 = vst [vmem:[%s380 + $0xd8] sm:$0xff] %v2447
      %5263 = vst [vmem:[%s380 + $0xe0] sm:$0xff] %v2452
      %5264 = vst [vmem:[%s380 + $0xe8] sm:$0xff] %v2455
      %5265 = vst [vmem:[%s380 + $0xf0] sm:$0xff] %v2460
      %5266 = vst [vmem:[%s380 + $0xf8] sm:$0xff] %v2463
      %5267 = vst [vmem:[%s374] sm:$0xff] %v4788
      %5268 = vst [vmem:[%s374 + $0x8] sm:$0xff] %v4790
      %5269 = vst [vmem:[%s374 + $0x10] sm:$0xff] %v4792
      %5270 = vst [vmem:[%s374 + $0x18] sm:$0xff] %v4794
      %5271 = vst [vmem:[%s374 + $0x20] sm:$0xff] %v4796
      %5272 = vst [vmem:[%s374 + $0x28] sm:$0xff] %v4798
      %5273 = vst [vmem:[%s374 + $0x30] sm:$0xff] %v4800
      %5274 = vst [vmem:[%s374 + $0x38] sm:$0xff] %v4802
      %5275 = vst [vmem:[%s374 + $0x40] sm:$0xff] %v4804
      %5276 = vst [vmem:[%s374 + $0x48] sm:$0xff] %v4806
      %5277 = vst [vmem:[%s374 + $0x50] sm:$0xff] %v4808
      %5278 = vst [vmem:[%s374 + $0x58] sm:$0xff] %v4810
      %5279 = vst [vmem:[%s374 + $0x60] sm:$0xff] %v4812
      %5280 = vst [vmem:[%s374 + $0x68] sm:$0xff] %v4814
      %5281 = vst [vmem:[%s374 + $0x70] sm:$0xff] %v4816
      %5282 = vst [vmem:[%s374 + $0x78] sm:$0xff] %v4818
      %5283 = vst [vmem:[%s374 + $0x80] sm:$0xff] %v4820
      %5284 = vst [vmem:[%s374 + $0x88] sm:$0xff] %v4822
      %5285 = vst [vmem:[%s374 + $0x90] sm:$0xff] %v4824
      %5286 = vst [vmem:[%s374 + $0x98] sm:$0xff] %v4826
      %5287 = vst [vmem:[%s374 + $0xa0] sm:$0xff] %v4828
      %5288 = vst [vmem:[%s374 + $0xa8] sm:$0xff] %v4830
      %5289 = vst [vmem:[%s374 + $0xb0] sm:$0xff] %v4832
      %5290 = vst [vmem:[%s374 + $0xb8] sm:$0xff] %v4834
      %5291 = vst [vmem:[%s374 + $0xc0] sm:$0xff] %v4836
      %5292 = vst [vmem:[%s374 + $0xc8] sm:$0xff] %v4838
      %5293 = vst [vmem:[%s374 + $0xd0] sm:$0xff] %v4840
      %5294 = vst [vmem:[%s374 + $0xd8] sm:$0xff] %v4842
      %5295 = vst [vmem:[%s374 + $0xe0] sm:$0xff] %v4844
      %5296 = vst [vmem:[%s374 + $0xe8] sm:$0xff] %v4846
      %5297 = vst [vmem:[%s374 + $0xf0] sm:$0xff] %v4848
      %5298 = vst [vmem:[%s374 + $0xf8] sm:$0xff] %v4850
      %5299 = vst [vmem:[%s374 + $0x100] sm:$0xff] %v4852
      %5300 = vst [vmem:[%s374 + $0x108] sm:$0xff] %v4854
      %5301 = vst [vmem:[%s374 + $0x110] sm:$0xff] %v4856
      %5302 = vst [vmem:[%s374 + $0x118] sm:$0xff] %v4858
      %5303 = vst [vmem:[%s374 + $0x120] sm:$0xff] %v4860
      %5304 = vst [vmem:[%s374 + $0x128] sm:$0xff] %v4862
      %5305 = vst [vmem:[%s374 + $0x130] sm:$0xff] %v4864
      %5306 = vst [vmem:[%s374 + $0x138] sm:$0xff] %v4866
      %5307 = vst [vmem:[%s374 + $0x140] sm:$0xff] %v4868
      %5308 = vst [vmem:[%s374 + $0x148] sm:$0xff] %v4870
      %5309 = vst [vmem:[%s374 + $0x150] sm:$0xff] %v4872
      %5310 = vst [vmem:[%s374 + $0x158] sm:$0xff] %v4874
      %5311 = vst [vmem:[%s374 + $0x160] sm:$0xff] %v4876
      %5312 = vst [vmem:[%s374 + $0x168] sm:$0xff] %v4878
      %5313 = vst [vmem:[%s374 + $0x170] sm:$0xff] %v4880
      %5314 = vst [vmem:[%s374 + $0x178] sm:$0xff] %v4882
      %5315 = vst [vmem:[%s374 + $0x180] sm:$0xff] %v4884
      %5316 = vst [vmem:[%s374 + $0x188] sm:$0xff] %v4886
      %5317 = vst [vmem:[%s374 + $0x190] sm:$0xff] %v4888
      %5318 = vst [vmem:[%s374 + $0x198] sm:$0xff] %v4890
      %5319 = vst [vmem:[%s374 + $0x1a0] sm:$0xff] %v4892
      %5320 = vst [vmem:[%s374 + $0x1a8] sm:$0xff] %v4894
      %5321 = vst [vmem:[%s374 + $0x1b0] sm:$0xff] %v4896
      %5322 = vst [vmem:[%s374 + $0x1b8] sm:$0xff] %v4898
      %5323 = vst [vmem:[%s374 + $0x1c0] sm:$0xff] %v4900
      %5324 = vst [vmem:[%s374 + $0x1c8] sm:$0xff] %v4902
      %5325 = vst [vmem:[%s374 + $0x1d0] sm:$0xff] %v4904
      %5326 = vst [vmem:[%s374 + $0x1d8] sm:$0xff] %v4906
      %5327 = vst [vmem:[%s374 + $0x1e0] sm:$0xff] %v4908
      %5328 = vst [vmem:[%s374 + $0x1e8] sm:$0xff] %v4910
      %5329 = vst [vmem:[%s374 + $0x1f0] sm:$0xff] %v4912
      %5330 = vst [vmem:[%s374 + $0x1f8] sm:$0xff] %v4914
      %5331 = vst [vmem:[%s374 + $0x200] sm:$0xff] %v4916
      %5332 = vst [vmem:[%s374 + $0x208] sm:$0xff] %v4918
      %5333 = vst [vmem:[%s374 + $0x210] sm:$0xff] %v4920
      %5334 = vst [vmem:[%s374 + $0x218] sm:$0xff] %v4922
      %5335 = vst [vmem:[%s374 + $0x220] sm:$0xff] %v4924
      %5336 = vst [vmem:[%s374 + $0x228] sm:$0xff] %v4926
      %5337 = vst [vmem:[%s374 + $0x230] sm:$0xff] %v4928
      %5338 = vst [vmem:[%s374 + $0x238] sm:$0xff] %v4930
      %5339 = vst [vmem:[%s374 + $0x240] sm:$0xff] %v4932
      %5340 = vst [vmem:[%s374 + $0x248] sm:$0xff] %v4934
      %5341 = vst [vmem:[%s374 + $0x250] sm:$0xff] %v4936
      %5342 = vst [vmem:[%s374 + $0x258] sm:$0xff] %v4938
      %5343 = vst [vmem:[%s374 + $0x260] sm:$0xff] %v4940
      %5344 = vst [vmem:[%s374 + $0x268] sm:$0xff] %v4942
      %5345 = vst [vmem:[%s374 + $0x270] sm:$0xff] %v4944
      %5346 = vst [vmem:[%s374 + $0x278] sm:$0xff] %v4946
      %5347 = vst [vmem:[%s374 + $0x280] sm:$0xff] %v4948
      %5348 = vst [vmem:[%s374 + $0x288] sm:$0xff] %v4950
      %5349 = vst [vmem:[%s374 + $0x290] sm:$0xff] %v4952
      %5350 = vst [vmem:[%s374 + $0x298] sm:$0xff] %v4954
      %5351 = vst [vmem:[%s374 + $0x2a0] sm:$0xff] %v4956
      %5352 = vst [vmem:[%s374 + $0x2a8] sm:$0xff] %v4958
      %5353 = vst [vmem:[%s374 + $0x2b0] sm:$0xff] %v4960
      %5354 = vst [vmem:[%s374 + $0x2b8] sm:$0xff] %v4962
      %5355 = vst [vmem:[%s374 + $0x2c0] sm:$0xff] %v4964
      %5356 = vst [vmem:[%s374 + $0x2c8] sm:$0xff] %v4966
      %5357 = vst [vmem:[%s374 + $0x2d0] sm:$0xff] %v4968
      %5358 = vst [vmem:[%s374 + $0x2d8] sm:$0xff] %v4970
      %5359 = vst [vmem:[%s374 + $0x2e0] sm:$0xff] %v4972
      %5360 = vst [vmem:[%s374 + $0x2e8] sm:$0xff] %v4974
      %5361 = vst [vmem:[%s374 + $0x2f0] sm:$0xff] %v4976
      %5362 = vst [vmem:[%s374 + $0x2f8] sm:$0xff] %v4978
      %5363 = vst [vmem:[%s374 + $0x300] sm:$0xff] %v4980
      %5364 = vst [vmem:[%s374 + $0x308] sm:$0xff] %v4982
      %5365 = vst [vmem:[%s374 + $0x310] sm:$0xff] %v4984
      %5366 = vst [vmem:[%s374 + $0x318] sm:$0xff] %v4986
      %5367 = vst [vmem:[%s374 + $0x320] sm:$0xff] %v4988
      %5368 = vst [vmem:[%s374 + $0x328] sm:$0xff] %v4990
      %5369 = vst [vmem:[%s374 + $0x330] sm:$0xff] %v4992
      %5370 = vst [vmem:[%s374 + $0x338] sm:$0xff] %v4994
      %5371 = vst [vmem:[%s374 + $0x340] sm:$0xff] %v4996
      %5372 = vst [vmem:[%s374 + $0x348] sm:$0xff] %v4998
      %5373 = vst [vmem:[%s374 + $0x350] sm:$0xff] %v5000
      %5374 = vst [vmem:[%s374 + $0x358] sm:$0xff] %v5002
      %5375 = vst [vmem:[%s374 + $0x360] sm:$0xff] %v5004
      %5376 = vst [vmem:[%s374 + $0x368] sm:$0xff] %v5006
      %5377 = vst [vmem:[%s374 + $0x370] sm:$0xff] %v5008
      %5378 = vst [vmem:[%s374 + $0x378] sm:$0xff] %v5010
      %5379 = vst [vmem:[%s374 + $0x380] sm:$0xff] %v5012
      %5380 = vst [vmem:[%s374 + $0x388] sm:$0xff] %v5014
      %5381 = vst [vmem:[%s374 + $0x390] sm:$0xff] %v5016
      %5382 = vst [vmem:[%s374 + $0x398] sm:$0xff] %v5018
      %5383 = vst [vmem:[%s374 + $0x3a0] sm:$0xff] %v5020
      %5384 = vst [vmem:[%s374 + $0x3a8] sm:$0xff] %v5022
      %5385 = vst [vmem:[%s374 + $0x3b0] sm:$0xff] %v5024
      %5386 = vst [vmem:[%s374 + $0x3b8] sm:$0xff] %v5026
      %5387 = vst [vmem:[%s374 + $0x3c0] sm:$0xff] %v5028
      %5388 = vst [vmem:[%s374 + $0x3c8] sm:$0xff] %v5030
      %5389 = vst [vmem:[%s374 + $0x3d0] sm:$0xff] %v5032
      %5390 = vst [vmem:[%s374 + $0x3d8] sm:$0xff] %v5034
      %5391 = vst [vmem:[%s374 + $0x3e0] sm:$0xff] %v5036
      %5392 = vst [vmem:[%s374 + $0x3e8] sm:$0xff] %v5038
      %5393 = vst [vmem:[%s374 + $0x3f0] sm:$0xff] %v5040
      %5394 = vst [vmem:[%s374 + $0x3f8] sm:$0xff] %v5042
      %5395 = vst [vmem:[%s374 + $0x400] sm:$0xff] %v5044
      %5396 = vst [vmem:[%s374 + $0x408] sm:$0xff] %v5046
      %5397 = vst [vmem:[%s374 + $0x410] sm:$0xff] %v5048
      %5398 = vst [vmem:[%s374 + $0x418] sm:$0xff] %v5050
      %5399 = vst [vmem:[%s374 + $0x420] sm:$0xff] %v5052
      %5400 = vst [vmem:[%s374 + $0x428] sm:$0xff] %v5054
      %5401 = vst [vmem:[%s374 + $0x430] sm:$0xff] %v5056
      %5402 = vst [vmem:[%s374 + $0x438] sm:$0xff] %v5058
      %5403 = vst [vmem:[%s374 + $0x440] sm:$0xff] %v5060
      %5404 = vst [vmem:[%s374 + $0x448] sm:$0xff] %v5062
      %5405 = vst [vmem:[%s374 + $0x450] sm:$0xff] %v5064
      %5406 = vst [vmem:[%s374 + $0x458] sm:$0xff] %v5066
      %5407 = vst [vmem:[%s374 + $0x460] sm:$0xff] %v5068
      %5408 = vst [vmem:[%s374 + $0x468] sm:$0xff] %v5070
      %5409 = vst [vmem:[%s374 + $0x470] sm:$0xff] %v5072
      %5410 = vst [vmem:[%s374 + $0x478] sm:$0xff] %v5074
      %5411 = vst [vmem:[%s374 + $0x480] sm:$0xff] %v5076
      %5412 = vst [vmem:[%s374 + $0x488] sm:$0xff] %v5078
      %5413 = vst [vmem:[%s374 + $0x490] sm:$0xff] %v5080
      %5414 = vst [vmem:[%s374 + $0x498] sm:$0xff] %v5082
      %5415 = vst [vmem:[%s374 + $0x4a0] sm:$0xff] %v5084
      %5416 = vst [vmem:[%s374 + $0x4a8] sm:$0xff] %v5086
      %5417 = vst [vmem:[%s374 + $0x4b0] sm:$0xff] %v5088
      %5418 = vst [vmem:[%s374 + $0x4b8] sm:$0xff] %v5090
      %5419 = vst [vmem:[%s374 + $0x4c0] sm:$0xff] %v5092
      %5420 = vst [vmem:[%s374 + $0x4c8] sm:$0xff] %v5094
      %5421 = vst [vmem:[%s374 + $0x4d0] sm:$0xff] %v5096
      %5422 = vst [vmem:[%s374 + $0x4d8] sm:$0xff] %v5098
      %5423 = vst [vmem:[%s374 + $0x4e0] sm:$0xff] %v5100
      %5424 = vst [vmem:[%s374 + $0x4e8] sm:$0xff] %v5102
      %5425 = vst [vmem:[%s374 + $0x4f0] sm:$0xff] %v5104
      %5426 = vst [vmem:[%s374 + $0x4f8] sm:$0xff] %v5106
      %5427 = vst [vmem:[%s374 + $0x500] sm:$0xff] %v5108
      %5428 = vst [vmem:[%s374 + $0x508] sm:$0xff] %v5110
      %5429 = vst [vmem:[%s374 + $0x510] sm:$0xff] %v5112
      %5430 = vst [vmem:[%s374 + $0x518] sm:$0xff] %v5114
      %5431 = vst [vmem:[%s374 + $0x520] sm:$0xff] %v5116
      %5432 = vst [vmem:[%s374 + $0x528] sm:$0xff] %v5118
      %5433 = vst [vmem:[%s374 + $0x530] sm:$0xff] %v5120
      %5434 = vst [vmem:[%s374 + $0x538] sm:$0xff] %v5122
      %5435 = vst [vmem:[%s374 + $0x540] sm:$0xff] %v5124
      %5436 = vst [vmem:[%s374 + $0x548] sm:$0xff] %v5126
      %5437 = vst [vmem:[%s374 + $0x550] sm:$0xff] %v5128
      %5438 = vst [vmem:[%s374 + $0x558] sm:$0xff] %v5130
      %5439 = vst [vmem:[%s374 + $0x560] sm:$0xff] %v5132
      %5440 = vst [vmem:[%s374 + $0x568] sm:$0xff] %v5134
      %5441 = vst [vmem:[%s374 + $0x570] sm:$0xff] %v5136
      %5442 = vst [vmem:[%s374 + $0x578] sm:$0xff] %v5138
      %5443 = vst [vmem:[%s374 + $0x580] sm:$0xff] %v5140
      %5444 = vst [vmem:[%s374 + $0x588] sm:$0xff] %v5142
      %5445 = vst [vmem:[%s374 + $0x590] sm:$0xff] %v5144
      %5446 = vst [vmem:[%s374 + $0x598] sm:$0xff] %v5146
      %5447 = vst [vmem:[%s374 + $0x5a0] sm:$0xff] %v5148
      %5448 = vst [vmem:[%s374 + $0x5a8] sm:$0xff] %v5150
      %5449 = vst [vmem:[%s374 + $0x5b0] sm:$0xff] %v5152
      %5450 = vst [vmem:[%s374 + $0x5b8] sm:$0xff] %v5154
      %5451 = vst [vmem:[%s374 + $0x5c0] sm:$0xff] %v5156
      %5452 = vst [vmem:[%s374 + $0x5c8] sm:$0xff] %v5158
      %5453 = vst [vmem:[%s374 + $0x5d0] sm:$0xff] %v5160
      %5454 = vst [vmem:[%s374 + $0x5d8] sm:$0xff] %v5162
      %5455 = vst [vmem:[%s374 + $0x5e0] sm:$0xff] %v5164
      %5456 = vst [vmem:[%s374 + $0x5e8] sm:$0xff] %v5166
      %5457 = vst [vmem:[%s374 + $0x5f0] sm:$0xff] %v5168
      %5458 = vst [vmem:[%s374 + $0x5f8] sm:$0xff] %v5170
      %5459 = vst [vmem:[%s374 + $0x600] sm:$0xff] %v5172
      %5460 = vst [vmem:[%s374 + $0x608] sm:$0xff] %v5174
      %5461 = vst [vmem:[%s374 + $0x610] sm:$0xff] %v5176
      %5462 = vst [vmem:[%s374 + $0x618] sm:$0xff] %v5178
      %5463 = vst [vmem:[%s374 + $0x620] sm:$0xff] %v5180
      %5464 = vst [vmem:[%s374 + $0x628] sm:$0xff] %v5182
      %5465 = vst [vmem:[%s374 + $0x630] sm:$0xff] %v5184
      %5466 = vst [vmem:[%s374 + $0x638] sm:$0xff] %v5186
      %5467 = vst [vmem:[%s374 + $0x640] sm:$0xff] %v5188
      %5468 = vst [vmem:[%s374 + $0x648] sm:$0xff] %v5190
      %5469 = vst [vmem:[%s374 + $0x650] sm:$0xff] %v5192
      %5470 = vst [vmem:[%s374 + $0x658] sm:$0xff] %v5194
      %5471 = vst [vmem:[%s374 + $0x660] sm:$0xff] %v5196
      %5472 = vst [vmem:[%s374 + $0x668] sm:$0xff] %v5198
      %5473 = vst [vmem:[%s374 + $0x670] sm:$0xff] %v5200
      %5474 = vst [vmem:[%s374 + $0x678] sm:$0xff] %v5202
      %5475 = vst [vmem:[%s374 + $0x680] sm:$0xff] %v5204
      %5476 = vst [vmem:[%s374 + $0x688] sm:$0xff] %v5206
      %5477 = vst [vmem:[%s374 + $0x690] sm:$0xff] %v5208
      %5478 = vst [vmem:[%s374 + $0x698] sm:$0xff] %v5210
      %5479 = vst [vmem:[%s374 + $0x6a0] sm:$0xff] %v5212
      %5480 = vst [vmem:[%s374 + $0x6a8] sm:$0xff] %v5214
      %5481 = vst [vmem:[%s374 + $0x6b0] sm:$0xff] %v5216
      %5482 = vst [vmem:[%s374 + $0x6b8] sm:$0xff] %v5218
      %5483 = vst [vmem:[%s374 + $0x6c0] sm:$0xff] %v5220
      %5484 = vst [vmem:[%s374 + $0x6c8] sm:$0xff] %v5222
      %5485 = vst [vmem:[%s374 + $0x6d0] sm:$0xff] %v5224
      %5486 = vst [vmem:[%s374 + $0x6d8] sm:$0xff] %v5226
      %5487 = vst [vmem:[%s374 + $0x6e0] sm:$0xff] %v5228
      %5488 = vst [vmem:[%s374 + $0x6e8] sm:$0xff] %v5230
      %5489 = vst [vmem:[%s374 + $0x6f0] sm:$0xff] %v5232
      %5490 = vst [vmem:[%s374 + $0x6f8] sm:$0xff] %v5234
      %s5491 = smul.u32 32, %s22
      %p5492 = scmp.lt.s32.totalorder %s5491, 127
      %s5493 = scalar_select %p5492, %s5491, 127
      %s5494 = smul.addr %s5493, 7
      %s5495 = smul.addr %s5494, 8
      %s5496 = scalar_lea.vmem %s9, %s5495
      %s5497 = smul.u32 32, %s22
      %p5498 = scmp.lt.s32.totalorder %s5497, 127
      %s5499 = scalar_select %p5498, %s5497, 127
      %s5500 = smul.addr %s5499, 8
      %s5501 = scalar_lea.vmem %s10, %s5500
      // Predicated region
      $region57: #{_lambda_.1} parent=55 // pred_check
        %p5502 = pneg %p234
      $region58: #{_lambda_.1} parent=55 // pred_check_branch
        %5504 = sbr.rel (%p5502) target = $region60
      $region59: #{_lambda_.1} parent=55 // pred_region
        %s5505 = smul.u32 32, %s22
      $region60: #{_lambda_.1} parent=55 // pred_fallthru
        _
      // Predicated region
      $region61: #{_lambda_.1} parent=55 // pred_check
        %p5506 = pneg %p260
      $region62: #{_lambda_.1} parent=55 // pred_check_branch
        %5508 = sbr.rel (%p5506) target = $region64
      $region63: #{_lambda_.1} parent=55 // pred_region
        %s5509 = smul.u32 32, %s22
      $region64: #{_lambda_.1} parent=55 // pred_fallthru
        _
    $region56: #{_lambda_.1} parent=5 // pred_fallthru
      _
    %p5510 = scmp.le.s32.totalorder 2, %s17
    // Predicated region
    $region65: #{_lambda_.1} parent=5 // pred_check
      %p5511 = pneg %p5510
    $region66: #{_lambda_.1} parent=5 // pred_check_branch
      %5513 = sbr.rel (%p5511) target = $region68
    $region67: #{_lambda_.1} parent=5 // pred_region
      %s5514 = ssub.s32 %s17, 2
      // Predicated region
      $region69: #{_lambda_.1} parent=67 // pred_check
        %p5515 = pneg %p240
      $region70: #{_lambda_.1} parent=67 // pred_check_branch
        %5517 = sbr.rel (%p5515) target = $region72
      $region71: #{_lambda_.1} parent=67 // pred_region
        %s5518 = smul.u32 32, %s23
        %p5519 = scmp.lt.s32.totalorder %s5518, 127
        %s5520 = scalar_select %p5519, %s5518, 127
        %s5521 = smul.addr %s5520, 7
        %s5522 = smul.addr %s5521, 8
        %s5523 = scalar_lea.vmem %s9, %s5522
      $region72: #{_lambda_.1} parent=67 // pred_fallthru
        _
      // Predicated region
      $region73: #{_lambda_.1} parent=67 // pred_check
        %p5524 = pneg %p266
      $region74: #{_lambda_.1} parent=67 // pred_check_branch
        %5526 = sbr.rel (%p5524) target = $region76
      $region75: #{_lambda_.1} parent=67 // pred_region
        %s5527 = smul.u32 32, %s23
        %p5528 = scmp.lt.s32.totalorder %s5527, 127
        %s5529 = scalar_select %p5528, %s5527, 127
        %s5530 = smul.addr %s5529, 8
        %s5531 = scalar_lea.vmem %s10, %s5530
      $region76: #{_lambda_.1} parent=67 // pred_fallthru
        _
    $region68: #{_lambda_.1} parent=5 // pred_fallthru
      _
  $region6: #{_lambda_.1} parent=0 // loop_footer
    %s21 = sadd.s32 1, %s17
  $region7: #{_lambda_.1} parent=0 // loop_footer_branch
    %16 = sbr.rel target = $region3
  $region8: #{_lambda_.1} parent=0 // loop_exit
    _

</llo_original>
